<compile_context>
chip_gen: v5e
topology: v5e:2x2
jax: 0.10.0
libtpu: 0.0.40
codegen_flags: <defaults>
</compile_context>

<pallas_src>
import jax
import jax.numpy as jnp
from jax.experimental import pallas as pl
from jax.experimental.pallas import tpu as pltpu

EPS = 1e-5


def _inorm_relu_points(y, b_tile, n_pts):
    """Fused InstanceNorm1d (affine=False, biased var, eps=1e-5) + ReLU.

    y: (b_tile*n_pts, C) f32 matmul output.  Statistics are a single f32 sweep
    (sum + sum-of-squares); the normalize+ReLU result is returned in bf16 so
    the next matmul consumes it directly and the resident activation halves.
    """
    c = y.shape[-1]
    y3 = y.reshape(b_tile, n_pts, c)
    inv_n = 1.0 / n_pts
    s1 = jnp.sum(y3, axis=1, keepdims=True)
    s2 = jnp.sum(y3 * y3, axis=1, keepdims=True)
    m = s1 * inv_n
    v = jnp.maximum(s2 * inv_n - m * m, 0.0)       # biased variance, >= 0
    scale = jax.lax.rsqrt(v + EPS)                 # (b_tile, 1, c) f32
    shift = -m * scale
    out = jnp.maximum(y3 * scale + shift, 0.0).astype(jnp.bfloat16)
    return out.reshape(b_tile * n_pts, c)


def pointnet_points_kernel(x_ref, w1_ref, w2_ref, w3_ref, w4_ref, w5_ref,
                           w6_ref, feat_ref):
    b_tile, _, n_pts = x_ref.shape                 # x is NCL: (b_tile, 3, N)

    # Swap the tiny 3-channel axis onto the lanes in-kernel (cheap XLU op on a
    # 3-channel tensor) instead of a wrapper HBM transpose + lane-sparse block.
    xt = jnp.transpose(x_ref[...], (0, 2, 1))      # (b_tile, N, 3) f32
    h = xt.reshape(b_tile * n_pts, 3).astype(jnp.bfloat16)

    # conv1..conv6 (kernel_size=1, no bias) + InstanceNorm1d + ReLU.
    # bf16 operands, f32 MXU accumulation; activations stay bf16 between layers.
    for w_ref in (w1_ref, w2_ref, w3_ref, w4_ref, w5_ref, w6_ref):
        y = jnp.dot(h, w_ref[...], preferred_element_type=jnp.float32)
        h = _inorm_relu_points(y, b_tile, n_pts)

    # adaptive_max_pool1d(x, 1).squeeze(): global max over the point axis.
    feat = jnp.max(h.reshape(b_tile, n_pts, 512), axis=1)
    feat_ref[...] = feat.astype(feat_ref.dtype)


def pointnet_fc_kernel(feat_ref, l1_ref, l2_ref, b2_ref, out_ref):
    # linear1 (no bias): (bt, 512) @ (512, 1024), f32 accumulation.
    z = jnp.dot(feat_ref[...].astype(jnp.bfloat16), l1_ref[...],
                preferred_element_type=jnp.float32)

    # bn7 = InstanceNorm1d(1024) on a 2-D (B, 1024) tensor: PyTorch treats 2-D
    # input as unbatched (C, L) -> each row normalized over its 1024 features.
    inv_f = 1.0 / z.shape[-1]
    s1 = jnp.sum(z, axis=1, keepdims=True)
    s2 = jnp.sum(z * z, axis=1, keepdims=True)
    m = s1 * inv_f
    v = jnp.maximum(s2 * inv_f - m * m, 0.0)
    z = jnp.maximum((z - m) * jax.lax.rsqrt(v + EPS), 0.0)

    # TODO(synk): nn.Dropout() is identity in eval mode; training-mode
    #             stochastic masking is not implemented here.

    # linear2 (with bias).
    o = jnp.dot(z.astype(jnp.bfloat16), l2_ref[...],
                preferred_element_type=jnp.float32) + b2_ref[...].astype(jnp.float32)
    out_ref[...] = o.astype(out_ref.dtype)


def _vmem_capacity_bytes():
    try:
        return int(pltpu.get_tpu_info().vmem_capacity_bytes)
    except Exception:
        return 64 << 20        # conservative (v7x-sized); never over-reserves


def _peak_bytes_per_row(n_pts):
    # Peak live set per batch row (bf16 activations): pre-norm y f32 (N*512*4)
    # + post-norm h bf16 (N*512*2) + previous h bf16 (N*256*2)
    # + double-buffered x block (sublane-padded 3->8, f32) + feat out tiles.
    return n_pts * (512 * 4 + 512 * 2 + 256 * 2 + 8 * 4 * 2) + 512 * 4 * 2


def _pick_b_tile(batch, n_pts, vmem_cap):
    per_row = _peak_bytes_per_row(n_pts)
    budget = int(0.55 * vmem_cap)
    # Small batches: one grid step with the whole batch (block == full dim).
    if batch <= 8 or (batch <= 32 and batch * per_row <= budget):
        return batch
    bt = 8
    for cand in (32, 16, 8):   # multiples of 8: (8,128) rule on the feat output
        if cand * per_row <= budget:
            bt = cand
            break
    # Prefer an even number of grid steps so the ("parallel",) axis splits
    # evenly across v7x's two TensorCores (no-op on v5e/v6e).
    steps = -(-batch // bt)
    if steps > 1 and steps % 2 == 1 and bt > 8:
        bt //= 2
    return bt


def pointnet_m_forward(x_ncl, params, b_tile=None):
    """x_ncl: (B, 3, N) float32, PyTorch NCL layout.  Returns (B, out_chan) f32."""
    w1, w2, w3, w4, w5, w6, l1, l2, b2 = params
    B, c_in, N = x_ncl.shape
    assert c_in == 3
    out_chan = l2.shape[1]
    conv_ws = (w1, w2, w3, w4, w5, w6)

    vmem_cap = _vmem_capacity_bytes()
    cap_limit = min(vmem_cap - (8 << 20), 100 << 20)   # 56 MiB v7x, 100 MiB v5e/v6e

    if b_tile is None:
        b_tile = _pick_b_tile(B, N, vmem_cap)
    n_steps = pl.cdiv(B, b_tile)
    B_pad = n_steps * b_tile

    x = x_ncl
    if B_pad != B:
        # Zero-padded rows stay finite through the norms (eps) and are sliced off.
        x = jnp.pad(x, ((0, B_pad - B), (0, 0), (0, 0)))

    def const_spec(shape, buffered=False):
        idx = lambda b: (0,) * len(shape)
        if buffered:
            return pl.BlockSpec(shape, idx, pipeline_mode=pl.Buffered(1))
        return pl.BlockSpec(shape, idx)

    # ---- stage 1: per-point conv/norm stack + global max pool -> (B_pad, 512)
    conv_weight_bytes = sum(int(w.size) * w.dtype.itemsize for w in conv_ws)
    pts_budget = 2 * conv_weight_bytes + b_tile * _peak_bytes_per_row(N)
    pts_vmem = int(min(cap_limit, max(32 << 20, int(1.4 * pts_budget))))

    feat = pl.pallas_call(
        pointnet_points_kernel,
        out_shape=jax.ShapeDtypeStruct((B_pad, 512), jnp.float32),
        grid_spec=pltpu.PrefetchScalarGridSpec(
            num_scalar_prefetch=0,
            grid=(n_steps,),
            in_specs=[pl.BlockSpec((b_tile, 3, N), lambda b: (b, 0, 0))]
                     + [const_spec(w.shape) for w in conv_ws],
            out_specs=pl.BlockSpec((b_tile, 512), lambda b: (b, 0)),
        ),
        compiler_params=pltpu.CompilerParams(
            dimension_semantics=("parallel",),
            vmem_limit_bytes=pts_vmem,
        ),
    )(x, *conv_ws)

    # ---- stage 2: FC tail once over the whole batch (MXU M = B, not b_tile)
    fc_tile = B_pad if B_pad <= 1024 else 1024
    n_fc = pl.cdiv(B_pad, fc_tile)
    B_fc = n_fc * fc_tile
    if B_fc != B_pad:
        feat = jnp.pad(feat, ((0, B_fc - B_pad), (0, 0)))

    fc_weight_bytes = int(l1.size) * 2 + int(l2.size) * 2 + int(b2.size) * 4
    fc_act = fc_tile * (2 * 512 * 4 + 1024 * 4 + 1024 * 2 + 2 * out_chan * 4)
    fc_vmem = int(min(cap_limit, max(32 << 20, int(1.5 * (fc_weight_bytes + fc_act)))))

    out = pl.pallas_call(
        pointnet_fc_kernel,
        out_shape=jax.ShapeDtypeStruct((B_fc, out_chan), jnp.float32),
        grid_spec=pltpu.PrefetchScalarGridSpec(
            num_scalar_prefetch=0,
            grid=(n_fc,),
            in_specs=[pl.BlockSpec((fc_tile, 512), lambda i: (i, 0)),
                      const_spec(l1.shape, buffered=True),
                      const_spec(l2.shape, buffered=True),
                      const_spec(b2.shape, buffered=True)],
            out_specs=pl.BlockSpec((fc_tile, out_chan), lambda i: (i, 0)),
        ),
        compiler_params=pltpu.CompilerParams(
            dimension_semantics=("parallel",),
            vmem_limit_bytes=fc_vmem,
        ),
    )(feat, l1, l2, b2)

    return out[:B]


def init_params(key, out_chan):
    """Deterministic synthetic parameters (shapes from PointNet_M.__init__).

    Conv1d weights (out_c, in_c, 1) are stored transposed as (in_c, out_c) in
    bf16; Linear weights (out, in) are stored transposed as (in, out) in bf16.
    The linear2 bias stays f32 (added to the f32 accumulator).
    """
    ks = jax.random.split(key, 9)

    def w(k, shape, fan_in):
        return (jax.random.normal(k, shape, jnp.float32)
                / jnp.sqrt(fan_in)).astype(jnp.bfloat16)

    w1 = w(ks[0], (3, 64), 3)
    w2 = w(ks[1], (64, 64), 64)
    w3 = w(ks[2], (64, 64), 64)
    w4 = w(ks[3], (64, 128), 64)
    w5 = w(ks[4], (128, 256), 128)
    w6 = w(ks[5], (256, 512), 256)
    l1 = w(ks[6], (512, 1024), 512)
    l2 = w(ks[7], (1024, out_chan), 1024)
    b2 = (0.01 * jax.random.normal(ks[8], (1, out_chan), jnp.float32)).astype(jnp.float32)
    return (w1, w2, w3, w4, w5, w6, l1, l2, b2)


if __name__ == "__main__":
    key = jax.random.PRNGKey(0)
    k_x, k_p = jax.random.split(key)

    B, N = 2, 64                 # small batch / point count for the smoke test
    OUT_CHAN = 256               # module default is 2048; small value for the test

    x = jax.random.normal(k_x, (B, 3, N), jnp.float32)   # PyTorch NCL input
    params = init_params(k_p, OUT_CHAN)

    fwd = jax.jit(lambda xx: pointnet_m_forward(xx, params))
    out = jax.block_until_ready(fwd(x))

    assert out.shape == (B, OUT_CHAN), out.shape
    assert bool(jnp.all(jnp.isfinite(out)))
    print("KERNEL_OK")
</pallas_src>

<mosaic_0001>
module attributes {stable_mosaic.version = 11 : i64} {
  func.func @pointnet_fc_kernel(%arg0: i32, %arg1: memref<2x512xf32, #tpu.memory_space<vmem>>, %arg2: memref<512x1024xbf16, #tpu.memory_space<vmem>>, %arg3: memref<1024x256xbf16, #tpu.memory_space<vmem>>, %arg4: memref<1x256xf32, #tpu.memory_space<vmem>>, %arg5: memref<2x256xf32, #tpu.memory_space<vmem>>) attributes {dimension_semantics = [#tpu.dimension_semantics<parallel>], iteration_bounds = array<i64: 1>, scalar_prefetch = 0 : i64, scratch_operands = 0 : i64, tpu.core_type = #tpu.core_type<tc>, window_params = [{transform_indices = @transform_0, window_bounds = array<i64: 2, 512>}, {pipeline_mode = #tpu.pipeline_mode<synchronous>, transform_indices = @transform_1, window_bounds = array<i64: 512, 1024>}, {pipeline_mode = #tpu.pipeline_mode<synchronous>, transform_indices = @transform_2, window_bounds = array<i64: 1024, 256>}, {pipeline_mode = #tpu.pipeline_mode<synchronous>, transform_indices = @transform_3, window_bounds = array<i64: 1, 256>}, {transform_indices = @transform_4, window_bounds = array<i64: 2, 256>}]} {
    %c0 = arith.constant 0 : index
    %c0_0 = arith.constant 0 : index
    %0 = vector.load %arg1[%c0, %c0_0] : memref<2x512xf32, #tpu.memory_space<vmem>>, vector<2x512xf32>
    %1 = arith.truncf %0 : vector<2x512xf32> to vector<2x512xbf16>
    %c0_1 = arith.constant 0 : index
    %c0_2 = arith.constant 0 : index
    %2 = vector.load %arg2[%c0_1, %c0_2] : memref<512x1024xbf16, #tpu.memory_space<vmem>>, vector<512x1024xbf16>
    %cst = arith.constant dense<0.000000e+00> : vector<2x1024xf32>
    %3 = tpu.matmul %1, %2, %cst {dimension_numbers = #tpu.dot_dimension_numbers<[1], [0], [0], [1], [0, 0, 1, 1], [], []>} : vector<2x512xbf16>, vector<512x1024xbf16>, vector<2x1024xf32> -> vector<2x1024xf32>
    %cst_3 = arith.constant dense<0.000000e+00> : vector<2xf32>
    %4 = vector.multi_reduction <add>, %3, %cst_3 [1] : vector<2x1024xf32> to vector<2xf32>
    %5 = vector.shape_cast %4 : vector<2xf32> to vector<2x1xf32>
    %6 = arith.mulf %3, %3 : vector<2x1024xf32>
    %cst_4 = arith.constant dense<0.000000e+00> : vector<2xf32>
    %7 = vector.multi_reduction <add>, %6, %cst_4 [1] : vector<2x1024xf32> to vector<2xf32>
    %8 = vector.shape_cast %7 : vector<2xf32> to vector<2x1xf32>
    %cst_5 = arith.constant 9.765625E-4 : f32
    %9 = vector.broadcast %cst_5 : f32 to vector<2x1xf32>
    %10 = arith.mulf %5, %9 : vector<2x1xf32>
    %cst_6 = arith.constant 9.765625E-4 : f32
    %11 = vector.broadcast %cst_6 : f32 to vector<2x1xf32>
    %12 = arith.mulf %8, %11 : vector<2x1xf32>
    %13 = arith.mulf %10, %10 : vector<2x1xf32>
    %14 = arith.subf %12, %13 : vector<2x1xf32>
    %cst_7 = arith.constant 0.000000e+00 : f32
    %15 = vector.broadcast %cst_7 : f32 to vector<2x1xf32>
    %16 = arith.maximumf %14, %15 : vector<2x1xf32>
    %17 = vector.broadcast %10 : vector<2x1xf32> to vector<2x1024xf32>
    %18 = arith.subf %3, %17 : vector<2x1024xf32>
    %cst_8 = arith.constant 9.99999974E-6 : f32
    %19 = vector.broadcast %cst_8 : f32 to vector<2x1xf32>
    %20 = arith.addf %16, %19 : vector<2x1xf32>
    %21 = math.rsqrt %20 : vector<2x1xf32>
    %22 = vector.broadcast %21 : vector<2x1xf32> to vector<2x1024xf32>
    %23 = arith.mulf %18, %22 : vector<2x1024xf32>
    %cst_9 = arith.constant 0.000000e+00 : f32
    %24 = vector.broadcast %cst_9 : f32 to vector<2x1024xf32>
    %25 = arith.maximumf %23, %24 : vector<2x1024xf32>
    %26 = arith.truncf %25 : vector<2x1024xf32> to vector<2x1024xbf16>
    %c0_10 = arith.constant 0 : index
    %c0_11 = arith.constant 0 : index
    %27 = vector.load %arg3[%c0_10, %c0_11] : memref<1024x256xbf16, #tpu.memory_space<vmem>>, vector<1024x256xbf16>
    %cst_12 = arith.constant dense<0.000000e+00> : vector<2x256xf32>
    %28 = tpu.matmul %26, %27, %cst_12 {dimension_numbers = #tpu.dot_dimension_numbers<[1], [0], [0], [1], [0, 0, 1, 1], [], []>} : vector<2x1024xbf16>, vector<1024x256xbf16>, vector<2x256xf32> -> vector<2x256xf32>
    %c0_13 = arith.constant 0 : index
    %c0_14 = arith.constant 0 : index
    %29 = vector.load %arg4[%c0_13, %c0_14] : memref<1x256xf32, #tpu.memory_space<vmem>>, vector<1x256xf32>
    %30 = vector.broadcast %29 : vector<1x256xf32> to vector<2x256xf32>
    %31 = arith.addf %28, %30 : vector<2x256xf32>
    %c0_15 = arith.constant 0 : index
    %c0_16 = arith.constant 0 : index
    %32 = vector.load %arg5[%c0_15, %c0_16] : memref<2x256xf32, #tpu.memory_space<vmem>>, vector<2x256xf32>
    tpu.vector_store %arg5[%c0_15, %c0_16], %31 {strides = array<i32>} : memref<2x256xf32, #tpu.memory_space<vmem>>, vector<2x256xf32>,
    return
  }
  func.func @transform_0(%arg0: i32) -> (i32, i32) {
    %c0_i32 = arith.constant 0 : i32
    %c0_i32_0 = arith.constant 0 : i32
    return %arg0, %c0_i32 : i32, i32
  }
  func.func @transform_1(%arg0: i32) -> (i32, i32) {
    %c0_i32 = arith.constant 0 : i32
    %c0_i32_0 = arith.constant 0 : i32
    %c0_i32_1 = arith.constant 0 : i32
    return %c0_i32, %c0_i32_0 : i32, i32
  }
  func.func @transform_2(%arg0: i32) -> (i32, i32) {
    %c0_i32 = arith.constant 0 : i32
    %c0_i32_0 = arith.constant 0 : i32
    %c0_i32_1 = arith.constant 0 : i32
    return %c0_i32, %c0_i32_0 : i32, i32
  }
  func.func @transform_3(%arg0: i32) -> (i32, i32) {
    %c0_i32 = arith.constant 0 : i32
    %c0_i32_0 = arith.constant 0 : i32
    %c0_i32_1 = arith.constant 0 : i32
    return %c0_i32, %c0_i32_0 : i32, i32
  }
  func.func @transform_4(%arg0: i32) -> (i32, i32) {
    %c0_i32 = arith.constant 0 : i32
    %c0_i32_0 = arith.constant 0 : i32
    return %arg0, %c0_i32 : i32, i32
  }
}

module attributes {stable_mosaic.version = 11 : i64} {
  func.func @pointnet_points_kernel(%arg0: i32, %arg1: memref<2x3x64xf32, #tpu.memory_space<vmem>>, %arg2: memref<3x64xbf16, #tpu.memory_space<vmem>>, %arg3: memref<64x64xbf16, #tpu.memory_space<vmem>>, %arg4: memref<64x64xbf16, #tpu.memory_space<vmem>>, %arg5: memref<64x128xbf16, #tpu.memory_space<vmem>>, %arg6: memref<128x256xbf16, #tpu.memory_space<vmem>>, %arg7: memref<256x512xbf16, #tpu.memory_space<vmem>>, %arg8: memref<2x512xf32, #tpu.memory_space<vmem>>) attributes {dimension_semantics = [#tpu.dimension_semantics<parallel>], iteration_bounds = array<i64: 1>, scalar_prefetch = 0 : i64, scratch_operands = 0 : i64, tpu.core_type = #tpu.core_type<tc>, window_params = [{transform_indices = @transform_0, window_bounds = array<i64: 2, 3, 64>}, {pipeline_mode = #tpu.pipeline_mode<synchronous>, transform_indices = @transform_1, window_bounds = array<i64: 3, 64>}, {pipeline_mode = #tpu.pipeline_mode<synchronous>, transform_indices = @transform_2, window_bounds = array<i64: 64, 64>}, {pipeline_mode = #tpu.pipeline_mode<synchronous>, transform_indices = @transform_3, window_bounds = array<i64: 64, 64>}, {pipeline_mode = #tpu.pipeline_mode<synchronous>, transform_indices = @transform_4, window_bounds = array<i64: 64, 128>}, {pipeline_mode = #tpu.pipeline_mode<synchronous>, transform_indices = @transform_5, window_bounds = array<i64: 128, 256>}, {pipeline_mode = #tpu.pipeline_mode<synchronous>, transform_indices = @transform_6, window_bounds = array<i64: 256, 512>}, {transform_indices = @transform_7, window_bounds = array<i64: 2, 512>}]} {
    %c0 = arith.constant 0 : index
    %c0_0 = arith.constant 0 : index
    %c0_1 = arith.constant 0 : index
    %0 = vector.load %arg1[%c0, %c0_0, %c0_1] : memref<2x3x64xf32, #tpu.memory_space<vmem>>, vector<2x3x64xf32>
    %1 = tpu.transpose %0, [0, 2, 1] : vector<2x3x64xf32> -> vector<2x64x3xf32>
    %2 = vector.shape_cast %1 : vector<2x64x3xf32> to vector<128x3xf32>
    %3 = arith.truncf %2 : vector<128x3xf32> to vector<128x3xbf16>
    %c0_2 = arith.constant 0 : index
    %c0_3 = arith.constant 0 : index
    %4 = vector.load %arg2[%c0_2, %c0_3] : memref<3x64xbf16, #tpu.memory_space<vmem>>, vector<3x64xbf16>
    %cst = arith.constant dense<0.000000e+00> : vector<128x64xf32>
    %5 = tpu.matmul %3, %4, %cst {dimension_numbers = #tpu.dot_dimension_numbers<[1], [0], [0], [1], [0, 0, 1, 1], [], []>} : vector<128x3xbf16>, vector<3x64xbf16>, vector<128x64xf32> -> vector<128x64xf32>
    %6 = vector.shape_cast %5 : vector<128x64xf32> to vector<2x64x64xf32>
    %cst_4 = arith.constant dense<0.000000e+00> : vector<2x64xf32>
    %7 = vector.multi_reduction <add>, %6, %cst_4 [1] : vector<2x64x64xf32> to vector<2x64xf32>
    %8 = vector.shape_cast %7 : vector<2x64xf32> to vector<2x1x64xf32>
    %9 = arith.mulf %6, %6 : vector<2x64x64xf32>
    %cst_5 = arith.constant dense<0.000000e+00> : vector<2x64xf32>
    %10 = vector.multi_reduction <add>, %9, %cst_5 [1] : vector<2x64x64xf32> to vector<2x64xf32>
    %11 = vector.shape_cast %10 : vector<2x64xf32> to vector<2x1x64xf32>
    %cst_6 = arith.constant 1.562500e-02 : f32
    %12 = vector.broadcast %cst_6 : f32 to vector<2x1x64xf32>
    %13 = arith.mulf %8, %12 : vector<2x1x64xf32>
    %cst_7 = arith.constant 1.562500e-02 : f32
    %14 = vector.broadcast %cst_7 : f32 to vector<2x1x64xf32>
    %15 = arith.mulf %11, %14 : vector<2x1x64xf32>
    %16 = arith.mulf %13, %13 : vector<2x1x64xf32>
    %17 = arith.subf %15, %16 : vector<2x1x64xf32>
    %cst_8 = arith.constant 0.000000e+00 : f32
    %18 = vector.broadcast %cst_8 : f32 to vector<2x1x64xf32>
    %19 = arith.maximumf %17, %18 : vector<2x1x64xf32>
    %cst_9 = arith.constant 9.99999974E-6 : f32
    %20 = vector.broadcast %cst_9 : f32 to vector<2x1x64xf32>
    %21 = arith.addf %19, %20 : vector<2x1x64xf32>
    %22 = math.rsqrt %21 : vector<2x1x64xf32>
    %cst_10 = arith.constant 0.000000e+00 : f32
    %23 = vector.broadcast %cst_10 : f32 to vector<2x1x64xf32>
    %24 = arith.subf %23, %13 : vector<2x1x64xf32>
    %25 = arith.mulf %24, %22 : vector<2x1x64xf32>
    %26 = vector.broadcast %22 : vector<2x1x64xf32> to vector<2x64x64xf32>
    %27 = arith.mulf %6, %26 : vector<2x64x64xf32>
    %28 = vector.broadcast %25 : vector<2x1x64xf32> to vector<2x64x64xf32>
    %29 = arith.addf %27, %28 : vector<2x64x64xf32>
    %cst_11 = arith.constant 0.000000e+00 : f32
    %30 = vector.broadcast %cst_11 : f32 to vector<2x64x64xf32>
    %31 = arith.maximumf %29, %30 : vector<2x64x64xf32>
    %32 = arith.truncf %31 : vector<2x64x64xf32> to vector<2x64x64xbf16>
    %33 = vector.shape_cast %32 : vector<2x64x64xbf16> to vector<128x64xbf16>
    %c0_12 = arith.constant 0 : index
    %c0_13 = arith.constant 0 : index
    %34 = vector.load %arg3[%c0_12, %c0_13] : memref<64x64xbf16, #tpu.memory_space<vmem>>, vector<64x64xbf16>
    %cst_14 = arith.constant dense<0.000000e+00> : vector<128x64xf32>
    %35 = tpu.matmul %33, %34, %cst_14 {dimension_numbers = #tpu.dot_dimension_numbers<[1], [0], [0], [1], [0, 0, 1, 1], [], []>} : vector<128x64xbf16>, vector<64x64xbf16>, vector<128x64xf32> -> vector<128x64xf32>
    %36 = vector.shape_cast %35 : vector<128x64xf32> to vector<2x64x64xf32>
    %cst_15 = arith.constant dense<0.000000e+00> : vector<2x64xf32>
    %37 = vector.multi_reduction <add>, %36, %cst_15 [1] : vector<2x64x64xf32> to vector<2x64xf32>
    %38 = vector.shape_cast %37 : vector<2x64xf32> to vector<2x1x64xf32>
    %39 = arith.mulf %36, %36 : vector<2x64x64xf32>
    %cst_16 = arith.constant dense<0.000000e+00> : vector<2x64xf32>
    %40 = vector.multi_reduction <add>, %39, %cst_16 [1] : vector<2x64x64xf32> to vector<2x64xf32>
    %41 = vector.shape_cast %40 : vector<2x64xf32> to vector<2x1x64xf32>
    %cst_17 = arith.constant 1.562500e-02 : f32
    %42 = vector.broadcast %cst_17 : f32 to vector<2x1x64xf32>
    %43 = arith.mulf %38, %42 : vector<2x1x64xf32>
    %cst_18 = arith.constant 1.562500e-02 : f32
    %44 = vector.broadcast %cst_18 : f32 to vector<2x1x64xf32>
    %45 = arith.mulf %41, %44 : vector<2x1x64xf32>
    %46 = arith.mulf %43, %43 : vector<2x1x64xf32>
    %47 = arith.subf %45, %46 : vector<2x1x64xf32>
    %cst_19 = arith.constant 0.000000e+00 : f32
    %48 = vector.broadcast %cst_19 : f32 to vector<2x1x64xf32>
    %49 = arith.maximumf %47, %48 : vector<2x1x64xf32>
    %cst_20 = arith.constant 9.99999974E-6 : f32
    %50 = vector.broadcast %cst_20 : f32 to vector<2x1x64xf32>
    %51 = arith.addf %49, %50 : vector<2x1x64xf32>
    %52 = math.rsqrt %51 : vector<2x1x64xf32>
    %cst_21 = arith.constant 0.000000e+00 : f32
    %53 = vector.broadcast %cst_21 : f32 to vector<2x1x64xf32>
    %54 = arith.subf %53, %43 : vector<2x1x64xf32>
    %55 = arith.mulf %54, %52 : vector<2x1x64xf32>
    %56 = vector.broadcast %52 : vector<2x1x64xf32> to vector<2x64x64xf32>
    %57 = arith.mulf %36, %56 : vector<2x64x64xf32>
    %58 = vector.broadcast %55 : vector<2x1x64xf32> to vector<2x64x64xf32>
    %59 = arith.addf %57, %58 : vector<2x64x64xf32>
    %cst_22 = arith.constant 0.000000e+00 : f32
    %60 = vector.broadcast %cst_22 : f32 to vector<2x64x64xf32>
    %61 = arith.maximumf %59, %60 : vector<2x64x64xf32>
    %62 = arith.truncf %61 : vector<2x64x64xf32> to vector<2x64x64xbf16>
    %63 = vector.shape_cast %62 : vector<2x64x64xbf16> to vector<128x64xbf16>
    %c0_23 = arith.constant 0 : index
    %c0_24 = arith.constant 0 : index
    %64 = vector.load %arg4[%c0_23, %c0_24] : memref<64x64xbf16, #tpu.memory_space<vmem>>, vector<64x64xbf16>
    %cst_25 = arith.constant dense<0.000000e+00> : vector<128x64xf32>
    %65 = tpu.matmul %63, %64, %cst_25 {dimension_numbers = #tpu.dot_dimension_numbers<[1], [0], [0], [1], [0, 0, 1, 1], [], []>} : vector<128x64xbf16>, vector<64x64xbf16>, vector<128x64xf32> -> vector<128x64xf32>
    %66 = vector.shape_cast %65 : vector<128x64xf32> to vector<2x64x64xf32>
    %cst_26 = arith.constant dense<0.000000e+00> : vector<2x64xf32>
    %67 = vector.multi_reduction <add>, %66, %cst_26 [1] : vector<2x64x64xf32> to vector<2x64xf32>
    %68 = vector.shape_cast %67 : vector<2x64xf32> to vector<2x1x64xf32>
    %69 = arith.mulf %66, %66 : vector<2x64x64xf32>
    %cst_27 = arith.constant dense<0.000000e+00> : vector<2x64xf32>
    %70 = vector.multi_reduction <add>, %69, %cst_27 [1] : vector<2x64x64xf32> to vector<2x64xf32>
    %71 = vector.shape_cast %70 : vector<2x64xf32> to vector<2x1x64xf32>
    %cst_28 = arith.constant 1.562500e-02 : f32
    %72 = vector.broadcast %cst_28 : f32 to vector<2x1x64xf32>
    %73 = arith.mulf %68, %72 : vector<2x1x64xf32>
    %cst_29 = arith.constant 1.562500e-02 : f32
    %74 = vector.broadcast %cst_29 : f32 to vector<2x1x64xf32>
    %75 = arith.mulf %71, %74 : vector<2x1x64xf32>
    %76 = arith.mulf %73, %73 : vector<2x1x64xf32>
    %77 = arith.subf %75, %76 : vector<2x1x64xf32>
    %cst_30 = arith.constant 0.000000e+00 : f32
    %78 = vector.broadcast %cst_30 : f32 to vector<2x1x64xf32>
    %79 = arith.maximumf %77, %78 : vector<2x1x64xf32>
    %cst_31 = arith.constant 9.99999974E-6 : f32
    %80 = vector.broadcast %cst_31 : f32 to vector<2x1x64xf32>
    %81 = arith.addf %79, %80 : vector<2x1x64xf32>
    %82 = math.rsqrt %81 : vector<2x1x64xf32>
    %cst_32 = arith.constant 0.000000e+00 : f32
    %83 = vector.broadcast %cst_32 : f32 to vector<2x1x64xf32>
    %84 = arith.subf %83, %73 : vector<2x1x64xf32>
    %85 = arith.mulf %84, %82 : vector<2x1x64xf32>
    %86 = vector.broadcast %82 : vector<2x1x64xf32> to vector<2x64x64xf32>
    %87 = arith.mulf %66, %86 : vector<2x64x64xf32>
    %88 = vector.broadcast %85 : vector<2x1x64xf32> to vector<2x64x64xf32>
    %89 = arith.addf %87, %88 : vector<2x64x64xf32>
    %cst_33 = arith.constant 0.000000e+00 : f32
    %90 = vector.broadcast %cst_33 : f32 to vector<2x64x64xf32>
    %91 = arith.maximumf %89, %90 : vector<2x64x64xf32>
    %92 = arith.truncf %91 : vector<2x64x64xf32> to vector<2x64x64xbf16>
    %93 = vector.shape_cast %92 : vector<2x64x64xbf16> to vector<128x64xbf16>
    %c0_34 = arith.constant 0 : index
    %c0_35 = arith.constant 0 : index
    %94 = vector.load %arg5[%c0_34, %c0_35] : memref<64x128xbf16, #tpu.memory_space<vmem>>, vector<64x128xbf16>
    %cst_36 = arith.constant dense<0.000000e+00> : vector<128x128xf32>
    %95 = tpu.matmul %93, %94, %cst_36 {dimension_numbers = #tpu.dot_dimension_numbers<[1], [0], [0], [1], [0, 0, 1, 1], [], []>} : vector<128x64xbf16>, vector<64x128xbf16>, vector<128x128xf32> -> vector<128x128xf32>
    %96 = vector.shape_cast %95 : vector<128x128xf32> to vector<2x64x128xf32>
    %cst_37 = arith.constant dense<0.000000e+00> : vector<2x128xf32>
    %97 = vector.multi_reduction <add>, %96, %cst_37 [1] : vector<2x64x128xf32> to vector<2x128xf32>
    %98 = vector.shape_cast %97 : vector<2x128xf32> to vector<2x1x128xf32>
    %99 = arith.mulf %96, %96 : vector<2x64x128xf32>
    %cst_38 = arith.constant dense<0.000000e+00> : vector<2x128xf32>
    %100 = vector.multi_reduction <add>, %99, %cst_38 [1] : vector<2x64x128xf32> to vector<2x128xf32>
    %101 = vector.shape_cast %100 : vector<2x128xf32> to vector<2x1x128xf32>
    %cst_39 = arith.constant 1.562500e-02 : f32
    %102 = vector.broadcast %cst_39 : f32 to vector<2x1x128xf32>
    %103 = arith.mulf %98, %102 : vector<2x1x128xf32>
    %cst_40 = arith.constant 1.562500e-02 : f32
    %104 = vector.broadcast %cst_40 : f32 to vector<2x1x128xf32>
    %105 = arith.mulf %101, %104 : vector<2x1x128xf32>
    %106 = arith.mulf %103, %103 : vector<2x1x128xf32>
    %107 = arith.subf %105, %106 : vector<2x1x128xf32>
    %cst_41 = arith.constant 0.000000e+00 : f32
    %108 = vector.broadcast %cst_41 : f32 to vector<2x1x128xf32>
    %109 = arith.maximumf %107, %108 : vector<2x1x128xf32>
    %cst_42 = arith.constant 9.99999974E-6 : f32
    %110 = vector.broadcast %cst_42 : f32 to vector<2x1x128xf32>
    %111 = arith.addf %109, %110 : vector<2x1x128xf32>
    %112 = math.rsqrt %111 : vector<2x1x128xf32>
    %cst_43 = arith.constant 0.000000e+00 : f32
    %113 = vector.broadcast %cst_43 : f32 to vector<2x1x128xf32>
    %114 = arith.subf %113, %103 : vector<2x1x128xf32>
    %115 = arith.mulf %114, %112 : vector<2x1x128xf32>
    %116 = vector.broadcast %112 : vector<2x1x128xf32> to vector<2x64x128xf32>
    %117 = arith.mulf %96, %116 : vector<2x64x128xf32>
    %118 = vector.broadcast %115 : vector<2x1x128xf32> to vector<2x64x128xf32>
    %119 = arith.addf %117, %118 : vector<2x64x128xf32>
    %cst_44 = arith.constant 0.000000e+00 : f32
    %120 = vector.broadcast %cst_44 : f32 to vector<2x64x128xf32>
    %121 = arith.maximumf %119, %120 : vector<2x64x128xf32>
    %122 = arith.truncf %121 : vector<2x64x128xf32> to vector<2x64x128xbf16>
    %123 = vector.shape_cast %122 : vector<2x64x128xbf16> to vector<128x128xbf16>
    %c0_45 = arith.constant 0 : index
    %c0_46 = arith.constant 0 : index
    %124 = vector.load %arg6[%c0_45, %c0_46] : memref<128x256xbf16, #tpu.memory_space<vmem>>, vector<128x256xbf16>
    %cst_47 = arith.constant dense<0.000000e+00> : vector<128x256xf32>
    %125 = tpu.matmul %123, %124, %cst_47 {dimension_numbers = #tpu.dot_dimension_numbers<[1], [0], [0], [1], [0, 0, 1, 1], [], []>} : vector<128x128xbf16>, vector<128x256xbf16>, vector<128x256xf32> -> vector<128x256xf32>
    %126 = vector.shape_cast %125 : vector<128x256xf32> to vector<2x64x256xf32>
    %cst_48 = arith.constant dense<0.000000e+00> : vector<2x256xf32>
    %127 = vector.multi_reduction <add>, %126, %cst_48 [1] : vector<2x64x256xf32> to vector<2x256xf32>
    %128 = vector.shape_cast %127 : vector<2x256xf32> to vector<2x1x256xf32>
    %129 = arith.mulf %126, %126 : vector<2x64x256xf32>
    %cst_49 = arith.constant dense<0.000000e+00> : vector<2x256xf32>
    %130 = vector.multi_reduction <add>, %129, %cst_49 [1] : vector<2x64x256xf32> to vector<2x256xf32>
    %131 = vector.shape_cast %130 : vector<2x256xf32> to vector<2x1x256xf32>
    %cst_50 = arith.constant 1.562500e-02 : f32
    %132 = vector.broadcast %cst_50 : f32 to vector<2x1x256xf32>
    %133 = arith.mulf %128, %132 : vector<2x1x256xf32>
    %cst_51 = arith.constant 1.562500e-02 : f32
    %134 = vector.broadcast %cst_51 : f32 to vector<2x1x256xf32>
    %135 = arith.mulf %131, %134 : vector<2x1x256xf32>
    %136 = arith.mulf %133, %133 : vector<2x1x256xf32>
    %137 = arith.subf %135, %136 : vector<2x1x256xf32>
    %cst_52 = arith.constant 0.000000e+00 : f32
    %138 = vector.broadcast %cst_52 : f32 to vector<2x1x256xf32>
    %139 = arith.maximumf %137, %138 : vector<2x1x256xf32>
    %cst_53 = arith.constant 9.99999974E-6 : f32
    %140 = vector.broadcast %cst_53 : f32 to vector<2x1x256xf32>
    %141 = arith.addf %139, %140 : vector<2x1x256xf32>
    %142 = math.rsqrt %141 : vector<2x1x256xf32>
    %cst_54 = arith.constant 0.000000e+00 : f32
    %143 = vector.broadcast %cst_54 : f32 to vector<2x1x256xf32>
    %144 = arith.subf %143, %133 : vector<2x1x256xf32>
    %145 = arith.mulf %144, %142 : vector<2x1x256xf32>
    %146 = vector.broadcast %142 : vector<2x1x256xf32> to vector<2x64x256xf32>
    %147 = arith.mulf %126, %146 : vector<2x64x256xf32>
    %148 = vector.broadcast %145 : vector<2x1x256xf32> to vector<2x64x256xf32>
    %149 = arith.addf %147, %148 : vector<2x64x256xf32>
    %cst_55 = arith.constant 0.000000e+00 : f32
    %150 = vector.broadcast %cst_55 : f32 to vector<2x64x256xf32>
    %151 = arith.maximumf %149, %150 : vector<2x64x256xf32>
    %152 = arith.truncf %151 : vector<2x64x256xf32> to vector<2x64x256xbf16>
    %153 = vector.shape_cast %152 : vector<2x64x256xbf16> to vector<128x256xbf16>
    %c0_56 = arith.constant 0 : index
    %c0_57 = arith.constant 0 : index
    %154 = vector.load %arg7[%c0_56, %c0_57] : memref<256x512xbf16, #tpu.memory_space<vmem>>, vector<256x512xbf16>
    %cst_58 = arith.constant dense<0.000000e+00> : vector<128x512xf32>
    %155 = tpu.matmul %153, %154, %cst_58 {dimension_numbers = #tpu.dot_dimension_numbers<[1], [0], [0], [1], [0, 0, 1, 1], [], []>} : vector<128x256xbf16>, vector<256x512xbf16>, vector<128x512xf32> -> vector<128x512xf32>
    %156 = vector.shape_cast %155 : vector<128x512xf32> to vector<2x64x512xf32>
    %cst_59 = arith.constant dense<0.000000e+00> : vector<2x512xf32>
    %157 = vector.multi_reduction <add>, %156, %cst_59 [1] : vector<2x64x512xf32> to vector<2x512xf32>
    %158 = vector.shape_cast %157 : vector<2x512xf32> to vector<2x1x512xf32>
    %159 = arith.mulf %156, %156 : vector<2x64x512xf32>
    %cst_60 = arith.constant dense<0.000000e+00> : vector<2x512xf32>
    %160 = vector.multi_reduction <add>, %159, %cst_60 [1] : vector<2x64x512xf32> to vector<2x512xf32>
    %161 = vector.shape_cast %160 : vector<2x512xf32> to vector<2x1x512xf32>
    %cst_61 = arith.constant 1.562500e-02 : f32
    %162 = vector.broadcast %cst_61 : f32 to vector<2x1x512xf32>
    %163 = arith.mulf %158, %162 : vector<2x1x512xf32>
    %cst_62 = arith.constant 1.562500e-02 : f32
    %164 = vector.broadcast %cst_62 : f32 to vector<2x1x512xf32>
    %165 = arith.mulf %161, %164 : vector<2x1x512xf32>
    %166 = arith.mulf %163, %163 : vector<2x1x512xf32>
    %167 = arith.subf %165, %166 : vector<2x1x512xf32>
    %cst_63 = arith.constant 0.000000e+00 : f32
    %168 = vector.broadcast %cst_63 : f32 to vector<2x1x512xf32>
    %169 = arith.maximumf %167, %168 : vector<2x1x512xf32>
    %cst_64 = arith.constant 9.99999974E-6 : f32
    %170 = vector.broadcast %cst_64 : f32 to vector<2x1x512xf32>
    %171 = arith.addf %169, %170 : vector<2x1x512xf32>
    %172 = math.rsqrt %171 : vector<2x1x512xf32>
    %cst_65 = arith.constant 0.000000e+00 : f32
    %173 = vector.broadcast %cst_65 : f32 to vector<2x1x512xf32>
    %174 = arith.subf %173, %163 : vector<2x1x512xf32>
    %175 = arith.mulf %174, %172 : vector<2x1x512xf32>
    %176 = vector.broadcast %172 : vector<2x1x512xf32> to vector<2x64x512xf32>
    %177 = arith.mulf %156, %176 : vector<2x64x512xf32>
    %178 = vector.broadcast %175 : vector<2x1x512xf32> to vector<2x64x512xf32>
    %179 = arith.addf %177, %178 : vector<2x64x512xf32>
    %cst_66 = arith.constant 0.000000e+00 : f32
    %180 = vector.broadcast %cst_66 : f32 to vector<2x64x512xf32>
    %181 = arith.maximumf %179, %180 : vector<2x64x512xf32>
    %182 = arith.truncf %181 : vector<2x64x512xf32> to vector<2x64x512xbf16>
    %183 = vector.shape_cast %182 : vector<2x64x512xbf16> to vector<128x512xbf16>
    %184 = vector.shape_cast %183 : vector<128x512xbf16> to vector<2x64x512xbf16>
    %cst_67 = arith.constant dense<0xFF80> : vector<2x512xbf16>
    %185 = vector.multi_reduction <maximumf>, %184, %cst_67 [1] : vector<2x64x512xbf16> to vector<2x512xbf16>
    %186 = arith.extf %185 : vector<2x512xbf16> to vector<2x512xf32>
    %c0_68 = arith.constant 0 : index
    %c0_69 = arith.constant 0 : index
    %187 = vector.load %arg8[%c0_68, %c0_69] : memref<2x512xf32, #tpu.memory_space<vmem>>, vector<2x512xf32>
    tpu.vector_store %arg8[%c0_68, %c0_69], %186 {strides = array<i32>} : memref<2x512xf32, #tpu.memory_space<vmem>>, vector<2x512xf32>,
    return
  }
  func.func @transform_0(%arg0: i32) -> (i32, i32, i32) {
    %c0_i32 = arith.constant 0 : i32
    %c0_i32_0 = arith.constant 0 : i32
    %c0_i32_1 = arith.constant 0 : i32
    return %arg0, %c0_i32, %c0_i32_0 : i32, i32, i32
  }
  func.func @transform_1(%arg0: i32) -> (i32, i32) {
    %c0_i32 = arith.constant 0 : i32
    %c0_i32_0 = arith.constant 0 : i32
    %c0_i32_1 = arith.constant 0 : i32
    return %c0_i32, %c0_i32_0 : i32, i32
  }
  func.func @transform_2(%arg0: i32) -> (i32, i32) {
    %c0_i32 = arith.constant 0 : i32
    %c0_i32_0 = arith.constant 0 : i32
    %c0_i32_1 = arith.constant 0 : i32
    return %c0_i32, %c0_i32_0 : i32, i32
  }
  func.func @transform_3(%arg0: i32) -> (i32, i32) {
    %c0_i32 = arith.constant 0 : i32
    %c0_i32_0 = arith.constant 0 : i32
    %c0_i32_1 = arith.constant 0 : i32
    return %c0_i32, %c0_i32_0 : i32, i32
  }
  func.func @transform_4(%arg0: i32) -> (i32, i32) {
    %c0_i32 = arith.constant 0 : i32
    %c0_i32_0 = arith.constant 0 : i32
    %c0_i32_1 = arith.constant 0 : i32
    return %c0_i32, %c0_i32_0 : i32, i32
  }
  func.func @transform_5(%arg0: i32) -> (i32, i32) {
    %c0_i32 = arith.constant 0 : i32
    %c0_i32_0 = arith.constant 0 : i32
    %c0_i32_1 = arith.constant 0 : i32
    return %c0_i32, %c0_i32_0 : i32, i32
  }
  func.func @transform_6(%arg0: i32) -> (i32, i32) {
    %c0_i32 = arith.constant 0 : i32
    %c0_i32_0 = arith.constant 0 : i32
    %c0_i32_1 = arith.constant 0 : i32
    return %c0_i32, %c0_i32_0 : i32, i32
  }
  func.func @transform_7(%arg0: i32) -> (i32, i32) {
    %c0_i32 = arith.constant 0 : i32
    %c0_i32_0 = arith.constant 0 : i32
    return %arg0, %c0_i32 : i32, i32
  }
}

</mosaic_0001>

<llo_original>
// kernel: _lambda_.2
$region0: #{_lambda_.2}
  #allocation0 [shape = 'u32[]', space=smem, size = 0x4, offset = 0x4, fixed_abs, tag = 'smem constant byte address 0x4 - core index']
  #allocation1 [shape = 'u32[72,128]{1,0:T(1,128)}', space=vmem, size = 0x9000, scoped, tag = 'internal scratch']
  %s0 = inlined_call_operand.vmem [shape: f32[2,3,64], index: 0, kind: input, shape index: {}]
  %s1 = inlined_call_operand.vmem [shape: bf16[3,64], index: 1, kind: input, shape index: {}]
  %s2 = inlined_call_operand.hbm [shape: bf16[64,64], index: 2, kind: input, shape index: {}]
  %s3 = inlined_call_operand.hbm [shape: bf16[64,64], index: 3, kind: input, shape index: {}]
  %s4 = inlined_call_operand.hbm [shape: bf16[64,128], index: 4, kind: input, shape index: {}]
  %s5 = inlined_call_operand.hbm [shape: bf16[128,256], index: 5, kind: input, shape index: {}]
  %s6 = inlined_call_operand.hbm [shape: bf16[256,512], index: 6, kind: input, shape index: {}]
  %s7 = inlined_call_operand.vmem [shape: f32[2,512], index: 7, kind: output, shape index: {}]
  %s8 = sld [smem:[#allocation0]]
  $region58: #{_lambda_.2} parent=0
    _
  %s10 = ssub.s32 1, %s8
  %s11 = scalar_select 0, %s10, %s8
  $region1: #{_lambda_.2} parent=0
    #allocation2 [shape = 'u8[16384]{0}', space=vmem, size = 0x4000, scoped, tag = 'input window, operand 2, single buffered']
    #allocation3 [shape = 's32[1]{0}', space=sflag, size = 0x4, scoped, tag = 'scoped memory for _lambda_.2']
    #allocation4 [shape = 'u8[16384]{0}', space=vmem, size = 0x4000, scoped, tag = 'input window, operand 3, single buffered']
    #allocation5 [shape = 's32[1]{0}', space=sflag, size = 0x4, scoped, tag = 'scoped memory for _lambda_.2']
    #allocation6 [shape = 'u8[16384]{0}', space=vmem, size = 0x4000, scoped, tag = 'input window, operand 4, single buffered']
    #allocation7 [shape = 'u8[65536]{0}', space=vmem, size = 0x10000, scoped, tag = 'input window, operand 5, single buffered']
    #allocation8 [shape = 's32[1]{0}', space=sflag, size = 0x4, scoped, tag = 'scoped memory for _lambda_.2']
    #allocation9 [shape = 'u8[262144]{0}', space=vmem, size = 0x40000, scoped, tag = 'input window, operand 6, single buffered']
    %12 = vsyncpa [#allocation3], 0
    %13 = vsyncpa [#allocation5], 0
    %14 = vsyncpa [#allocation8], 0
    // Predicated region
    $region2: #{_lambda_.2} parent=1 // pred_check
      _
    $region3: #{_lambda_.2} parent=1 // pred_check_branch
      %16 = sbr.rel (0) target = $region5
    $region4: #{_lambda_.2} parent=1 // pred_region
      _
    $region5: #{_lambda_.2} parent=1 // pred_fallthru
      _
    // Predicated region
    $region6: #{_lambda_.2} parent=1 // pred_check
      _
    $region7: #{_lambda_.2} parent=1 // pred_check_branch
      %18 = sbr.rel (0) target = $region9
    $region8: #{_lambda_.2} parent=1 // pred_region
      _
    $region9: #{_lambda_.2} parent=1 // pred_fallthru
      _
    // Predicated region
    $region10: #{_lambda_.2} parent=1 // pred_check
      _
    $region11: #{_lambda_.2} parent=1 // pred_check_branch
      %20 = sbr.rel (0) target = $region13
    $region12: #{_lambda_.2} parent=1 // pred_region
      %22 = vsyncadd [#allocation3], 0
      %s23 = sshll.u32 %s2, 4
      %s24 = int_to_ptr.hbm [resolvable:$true] %s23
      %s25 = sshll.u32 [#allocation2], 4
      %s26 = int_to_ptr.vmem [resolvable:$true] %s25
      %31 = dma.hbm_to_vmem [thread:$0]  %s24, 512, %s26, [#allocation3], 64, 64, 4
    $region13: #{_lambda_.2} parent=1 // pred_fallthru
      _
    // Predicated region
    $region14: #{_lambda_.2} parent=1 // pred_check
      _
    $region15: #{_lambda_.2} parent=1 // pred_check_branch
      %33 = sbr.rel (0) target = $region17
    $region16: #{_lambda_.2} parent=1 // pred_region
      %35 = vsyncadd [#allocation5], 0
      %s36 = sshll.u32 %s3, 4
      %s37 = int_to_ptr.hbm [resolvable:$true] %s36
      %s38 = sshll.u32 [#allocation4], 4
      %s39 = int_to_ptr.vmem [resolvable:$true] %s38
      %44 = dma.hbm_to_vmem [thread:$0]  %s37, 512, %s39, [#allocation5], 64, 64, 4
    $region17: #{_lambda_.2} parent=1 // pred_fallthru
      _
    // Predicated region
    $region18: #{_lambda_.2} parent=1 // pred_check
      _
    $region19: #{_lambda_.2} parent=1 // pred_check_branch
      %46 = sbr.rel (0) target = $region21
    $region20: #{_lambda_.2} parent=1 // pred_region
      %48 = vsyncadd [#allocation5], 0
      %s49 = sshll.u32 %s4, 4
      %s50 = int_to_ptr.hbm [resolvable:$true] %s49
      %s51 = sshll.u32 [#allocation6], 4
      %s52 = int_to_ptr.vmem [resolvable:$true] %s51
      %57 = dma.hbm_to_vmem [thread:$0]  %s50, 512, %s52, [#allocation5], 64, 64, 4
    $region21: #{_lambda_.2} parent=1 // pred_fallthru
      _
    // Predicated region
    $region22: #{_lambda_.2} parent=1 // pred_check
      _
    $region23: #{_lambda_.2} parent=1 // pred_check_branch
      %59 = sbr.rel (0) target = $region25
    $region24: #{_lambda_.2} parent=1 // pred_region
      %61 = vsyncadd [#allocation8], 0
      %s62 = sshll.u32 %s5, 4
      %s63 = int_to_ptr.hbm [resolvable:$true] %s62
      %s64 = sshll.u32 [#allocation7], 4
      %s65 = int_to_ptr.vmem [resolvable:$true] %s64
      %70 = dma.hbm_to_vmem [thread:$0]  %s63, 2048, %s65, [#allocation8], 128, 128, 8
    $region25: #{_lambda_.2} parent=1 // pred_fallthru
      _
    // Predicated region
    $region26: #{_lambda_.2} parent=1 // pred_check
      _
    $region27: #{_lambda_.2} parent=1 // pred_check_branch
      %72 = sbr.rel (0) target = $region29
    $region28: #{_lambda_.2} parent=1 // pred_region
      %74 = vsyncadd [#allocation8], 0
      %s75 = sshll.u32 %s6, 4
      %s76 = int_to_ptr.hbm [resolvable:$true] %s75
      %s77 = sshll.u32 [#allocation9], 4
      %s78 = int_to_ptr.vmem [resolvable:$true] %s77
      %83 = dma.hbm_to_vmem [thread:$0]  %s76, 8192, %s78, [#allocation8], 256, 256, 16
    $region29: #{_lambda_.2} parent=1 // pred_fallthru
      _
    // Predicated region
    $region30: #{_lambda_.2} parent=1 // pred_check
      _
    $region31: #{_lambda_.2} parent=1 // pred_check_branch
      %85 = sbr.rel (0) target = $region33
    $region32: #{_lambda_.2} parent=1 // pred_region
      %87 = dma.done [#allocation3], 512
    $region33: #{_lambda_.2} parent=1 // pred_fallthru
      _
    // Predicated region
    $region34: #{_lambda_.2} parent=1 // pred_check
      _
    $region35: #{_lambda_.2} parent=1 // pred_check_branch
      %89 = sbr.rel (0) target = $region37
    $region36: #{_lambda_.2} parent=1 // pred_region
      %91 = dma.done [#allocation5], 512
    $region37: #{_lambda_.2} parent=1 // pred_fallthru
      _
    // Predicated region
    $region38: #{_lambda_.2} parent=1 // pred_check
      _
    $region39: #{_lambda_.2} parent=1 // pred_check_branch
      %93 = sbr.rel (0) target = $region41
    $region40: #{_lambda_.2} parent=1 // pred_region
      %95 = dma.done [#allocation5], 512
    $region41: #{_lambda_.2} parent=1 // pred_fallthru
      _
    // Predicated region
    $region42: #{_lambda_.2} parent=1 // pred_check
      _
    $region43: #{_lambda_.2} parent=1 // pred_check_branch
      %97 = sbr.rel (0) target = $region45
    $region44: #{_lambda_.2} parent=1 // pred_region
      %99 = dma.done [#allocation8], 2048
    $region45: #{_lambda_.2} parent=1 // pred_fallthru
      _
    // Predicated region
    $region46: #{_lambda_.2} parent=1 // pred_check
      _
    $region47: #{_lambda_.2} parent=1 // pred_check_branch
      %101 = sbr.rel (0) target = $region49
    $region48: #{_lambda_.2} parent=1 // pred_region
      %103 = dma.done [#allocation8], 8192
    $region49: #{_lambda_.2} parent=1 // pred_fallthru
      _
    %v105 = vld [vmem:[%s0] sm:$0x7]
    %v106 = vld [vmem:[%s0 + $0x4] sm:$0x7]
    %107 = vxpose.xlu0.b32.start [1/16] %v105, 128
    %108 = vxpose.xlu0.b32.cont [2/16] 0.0, 128
    %109 = vxpose.xlu0.b32.cont [3/16] 0.0, 128
    %110 = vxpose.xlu0.b32.cont [4/16] 0.0, 128
    %111 = vxpose.xlu0.b32.cont [5/16] 0.0, 128
    %112 = vxpose.xlu0.b32.cont [6/16] 0.0, 128
    %113 = vxpose.xlu0.b32.cont [7/16] 0.0, 128
    %114 = vxpose.xlu0.b32.cont [8/16] 0.0, 128
    %115 = vxpose.xlu0.b32.cont [9/16] 0.0, 128
    %116 = vxpose.xlu0.b32.cont [10/16] 0.0, 128
    %117 = vxpose.xlu0.b32.cont [11/16] 0.0, 128
    %118 = vxpose.xlu0.b32.cont [12/16] 0.0, 128
    %119 = vxpose.xlu0.b32.cont [13/16] 0.0, 128
    %120 = vxpose.xlu0.b32.cont [14/16] 0.0, 128
    %121 = vxpose.xlu0.b32.cont [15/16] 0.0, 128
    %122 = vxpose.xlu0.b32.end [16/16] 0.0, 128
    %v123 = vpop.trf.xlu0
    %v124 = vpop.trf.xlu0
    %v125 = vpop.trf.xlu0
    %v126 = vpop.trf.xlu0
    %v127 = vpop.trf.xlu0
    %v128 = vpop.trf.xlu0
    %v129 = vpop.trf.xlu0
    %v130 = vpop.trf.xlu0
    %v131 = vpop.trf.xlu0
    %v132 = vpop.trf.xlu0
    %v133 = vpop.trf.xlu0
    %v134 = vpop.trf.xlu0
    %v135 = vpop.trf.xlu0
    %v136 = vpop.trf.xlu0
    %v137 = vpop.trf.xlu0
    %v138 = vpop.trf.xlu0
    %139 = vxpose.xlu0.b32.start [1/16] %v106, 128
    %140 = vxpose.xlu0.b32.cont [2/16] 0.0, 128
    %141 = vxpose.xlu0.b32.cont [3/16] 0.0, 128
    %142 = vxpose.xlu0.b32.cont [4/16] 0.0, 128
    %143 = vxpose.xlu0.b32.cont [5/16] 0.0, 128
    %144 = vxpose.xlu0.b32.cont [6/16] 0.0, 128
    %145 = vxpose.xlu0.b32.cont [7/16] 0.0, 128
    %146 = vxpose.xlu0.b32.cont [8/16] 0.0, 128
    %147 = vxpose.xlu0.b32.cont [9/16] 0.0, 128
    %148 = vxpose.xlu0.b32.cont [10/16] 0.0, 128
    %149 = vxpose.xlu0.b32.cont [11/16] 0.0, 128
    %150 = vxpose.xlu0.b32.cont [12/16] 0.0, 128
    %151 = vxpose.xlu0.b32.cont [13/16] 0.0, 128
    %152 = vxpose.xlu0.b32.cont [14/16] 0.0, 128
    %153 = vxpose.xlu0.b32.cont [15/16] 0.0, 128
    %154 = vxpose.xlu0.b32.end [16/16] 0.0, 128
    %v155 = vpop.trf.xlu0
    %v156 = vpop.trf.xlu0
    %v157 = vpop.trf.xlu0
    %v158 = vpop.trf.xlu0
    %v159 = vpop.trf.xlu0
    %v160 = vpop.trf.xlu0
    %v161 = vpop.trf.xlu0
    %v162 = vpop.trf.xlu0
    %v163 = vpop.trf.xlu0
    %v164 = vpop.trf.xlu0
    %v165 = vpop.trf.xlu0
    %v166 = vpop.trf.xlu0
    %v167 = vpop.trf.xlu0
    %v168 = vpop.trf.xlu0
    %v169 = vpop.trf.xlu0
    %v170 = vpop.trf.xlu0
    %v171 = vpack.c.bf16 %v124, %v123
    %v172 = vpack.c.bf16 %v126, %v125
    %v173 = vpack.c.bf16 %v128, %v127
    %v174 = vpack.c.bf16 %v130, %v129
    %v175 = vpack.c.bf16 %v156, %v155
    %v176 = vpack.c.bf16 %v158, %v157
    %v177 = vpack.c.bf16 %v160, %v159
    %v178 = vpack.c.bf16 %v162, %v161
    %v179 = vld [vmem:[%s1] sm:$0x3]
    %vm180 = vcmask 23552
    %v182 = vsel %vm180, %v171, 0
    %v185 = vsel %vm180, %v172, 0
    %v188 = vsel %vm180, %v173, 0
    %v191 = vsel %vm180, %v174, 0
    %v194 = vsel %vm180, %v175, 0
    %v197 = vsel %vm180, %v176, 0
    %v200 = vsel %vm180, %v177, 0
    %v203 = vsel %vm180, %v178, 0
    %vm205 = vcmask 1040384
    %vm206 = vcmask 1041408
    %v207 = vsel %vm205, 4294967295, 65535
    %v208 = vsel %vm206, %v207, 0
    %v210 = vand.u32 %v179, %v208
    %212 = vmatpush.bf16.msra.mxu0 0
    %213 = vmatpush.bf16.msra.mxu0 0
    %214 = vmatpush.bf16.msra.mxu0 0
    %215 = vmatpush.bf16.msra.mxu0 0
    %216 = vmatpush.bf16.msra.mxu0 0
    %217 = vmatpush.bf16.msra.mxu0 0
    %218 = vmatpush.bf16.msra.mxu0 0
    %219 = vmatpush.bf16.msra.mxu0 %v210
    %220 = vmatmul.bf16.gmra.mxu0 %v182
    %v221 = vpop.f32.mrf.mxu0
    %v222 = vadd.f32 0.0, %v221
    %v223 = vpop.f32.mrf.mxu0
    %v224 = vadd.f32 0.0, %v223
    %225 = vmatmul.bf16.gmra.mxu0 %v185
    %v226 = vpop.f32.mrf.mxu0
    %v227 = vadd.f32 0.0, %v226
    %v228 = vpop.f32.mrf.mxu0
    %v229 = vadd.f32 0.0, %v228
    %230 = vmatmul.bf16.gmra.mxu0 %v188
    %v231 = vpop.f32.mrf.mxu0
    %v232 = vadd.f32 0.0, %v231
    %v233 = vpop.f32.mrf.mxu0
    %v234 = vadd.f32 0.0, %v233
    %235 = vmatmul.bf16.gmra.mxu0 %v191
    %v236 = vpop.f32.mrf.mxu0
    %v237 = vadd.f32 0.0, %v236
    %v238 = vpop.f32.mrf.mxu0
    %v239 = vadd.f32 0.0, %v238
    %240 = vmatmul.bf16.gmra.mxu0 %v194
    %v241 = vpop.f32.mrf.mxu0
    %v242 = vadd.f32 0.0, %v241
    %v243 = vpop.f32.mrf.mxu0
    %v244 = vadd.f32 0.0, %v243
    %245 = vmatmul.bf16.gmra.mxu0 %v197
    %v246 = vpop.f32.mrf.mxu0
    %v247 = vadd.f32 0.0, %v246
    %v248 = vpop.f32.mrf.mxu0
    %v249 = vadd.f32 0.0, %v248
    %250 = vmatmul.bf16.gmra.mxu0 %v200
    %v251 = vpop.f32.mrf.mxu0
    %v252 = vadd.f32 0.0, %v251
    %v253 = vpop.f32.mrf.mxu0
    %v254 = vadd.f32 0.0, %v253
    %255 = vmatmul.bf16.gmra.mxu0 %v203
    %v256 = vpop.f32.mrf.mxu0
    %v257 = vadd.f32 0.0, %v256
    %v258 = vpop.f32.mrf.mxu0
    %v259 = vadd.f32 0.0, %v258
    %260 = vdwg.mxu0
    %vm261 = vcmask 523264
    %v262 = vsel %vm261, %v222, 0.0
    %v263 = vsel %vm261, %v224, 0.0
    %v264 = vadd.f32 %v262, %v263
    %v265 = vsel %vm261, %v227, 0.0
    %v266 = vadd.f32 %v264, %v265
    %v267 = vsel %vm261, %v229, 0.0
    %v268 = vadd.f32 %v266, %v267
    %v269 = vsel %vm261, %v232, 0.0
    %v270 = vadd.f32 %v268, %v269
    %v271 = vsel %vm261, %v234, 0.0
    %v272 = vadd.f32 %v270, %v271
    %v273 = vsel %vm261, %v237, 0.0
    %v274 = vadd.f32 %v272, %v273
    %v275 = vsel %vm261, %v239, 0.0
    %v276 = vadd.f32 %v274, %v275
    %v277 = vrot.slane %v276, 4
    %v278 = vadd.f32 %v276, %v277
    %v279 = vrot.slane %v278, 2
    %v280 = vadd.f32 %v278, %v279
    %v281 = vrot.slane %v280, 1
    %v282 = vadd.f32 %v280, %v281
    %v283 = vsel %vm261, %v242, 0.0
    %v284 = vsel %vm261, %v244, 0.0
    %v285 = vadd.f32 %v283, %v284
    %v286 = vsel %vm261, %v247, 0.0
    %v287 = vadd.f32 %v285, %v286
    %v288 = vsel %vm261, %v249, 0.0
    %v289 = vadd.f32 %v287, %v288
    %v290 = vsel %vm261, %v252, 0.0
    %v291 = vadd.f32 %v289, %v290
    %v292 = vsel %vm261, %v254, 0.0
    %v293 = vadd.f32 %v291, %v292
    %v294 = vsel %vm261, %v257, 0.0
    %v295 = vadd.f32 %v293, %v294
    %v296 = vsel %vm261, %v259, 0.0
    %v297 = vadd.f32 %v295, %v296
    %v298 = vrot.slane %v297, 4
    %v299 = vadd.f32 %v297, %v298
    %v300 = vrot.slane %v299, 2
    %v301 = vadd.f32 %v299, %v300
    %v302 = vrot.slane %v301, 1
    %v303 = vadd.f32 %v301, %v302
    %v304 = vmul.f32 %v222, %v222
    %v305 = vmul.f32 %v224, %v224
    %v306 = vmul.f32 %v227, %v227
    %v307 = vmul.f32 %v229, %v229
    %v308 = vmul.f32 %v232, %v232
    %v309 = vmul.f32 %v234, %v234
    %v310 = vmul.f32 %v237, %v237
    %v311 = vmul.f32 %v239, %v239
    %v312 = vmul.f32 %v242, %v242
    %v313 = vmul.f32 %v244, %v244
    %v314 = vmul.f32 %v247, %v247
    %v315 = vmul.f32 %v249, %v249
    %v316 = vmul.f32 %v252, %v252
    %v317 = vmul.f32 %v254, %v254
    %v318 = vmul.f32 %v257, %v257
    %v319 = vmul.f32 %v259, %v259
    %v320 = vsel %vm261, %v304, 0.0
    %v321 = vsel %vm261, %v305, 0.0
    %v322 = vadd.f32 %v320, %v321
    %v323 = vsel %vm261, %v306, 0.0
    %v324 = vadd.f32 %v322, %v323
    %v325 = vsel %vm261, %v307, 0.0
    %v326 = vadd.f32 %v324, %v325
    %v327 = vsel %vm261, %v308, 0.0
    %v328 = vadd.f32 %v326, %v327
    %v329 = vsel %vm261, %v309, 0.0
    %v330 = vadd.f32 %v328, %v329
    %v331 = vsel %vm261, %v310, 0.0
    %v332 = vadd.f32 %v330, %v331
    %v333 = vsel %vm261, %v311, 0.0
    %v334 = vadd.f32 %v332, %v333
    %v335 = vrot.slane %v334, 4
    %v336 = vadd.f32 %v334, %v335
    %v337 = vrot.slane %v336, 2
    %v338 = vadd.f32 %v336, %v337
    %v339 = vrot.slane %v338, 1
    %v340 = vadd.f32 %v338, %v339
    %v341 = vsel %vm261, %v312, 0.0
    %v342 = vsel %vm261, %v313, 0.0
    %v343 = vadd.f32 %v341, %v342
    %v344 = vsel %vm261, %v314, 0.0
    %v345 = vadd.f32 %v343, %v344
    %v346 = vsel %vm261, %v315, 0.0
    %v347 = vadd.f32 %v345, %v346
    %v348 = vsel %vm261, %v316, 0.0
    %v349 = vadd.f32 %v347, %v348
    %v350 = vsel %vm261, %v317, 0.0
    %v351 = vadd.f32 %v349, %v350
    %v352 = vsel %vm261, %v318, 0.0
    %v353 = vadd.f32 %v351, %v352
    %v354 = vsel %vm261, %v319, 0.0
    %v355 = vadd.f32 %v353, %v354
    %v356 = vrot.slane %v355, 4
    %v357 = vadd.f32 %v355, %v356
    %v358 = vrot.slane %v357, 2
    %v359 = vadd.f32 %v357, %v358
    %v360 = vrot.slane %v359, 1
    %v361 = vadd.f32 %v359, %v360
    %v362 = vmul.f32 %v282, 0.015625
    %v363 = vmul.f32 %v303, 0.015625
    %v364 = vmul.f32 %v340, 0.015625
    %v365 = vmul.f32 %v361, 0.015625
    %v366 = vmul.f32 %v362, %v362
    %v367 = vmul.f32 %v363, %v363
    %v368 = vsub.f32 %v364, %v366
    %v369 = vsub.f32 %v365, %v367
    %v370 = vmax.f32 %v368, 0.0
    %v371 = vmax.f32 %v369, 0.0
    %v372 = vadd.f32 %v370, 1e-05
    %v373 = vadd.f32 %v371, 1e-05
    %v374 = vrsqrt.pop %v372
    %v375 = vmul.f32 %v374, %v372
    %v376 = vmul.f32 %v375, %v374
    %v377 = vmul.f32 0.5, %v376
    %v378 = vsub.f32 1.5, %v377
    %v379 = vmul.f32 %v374, %v378
    %vm380 = vweird.f32 %v372
    %vm381 = vweird.f32 %v374
    %vm382 = vmor %vm380, %vm381
    %v383 = vsel %vm382, %v374, %v379
    %v384 = vrsqrt.pop %v373
    %v385 = vmul.f32 %v384, %v373
    %v386 = vmul.f32 %v385, %v384
    %v387 = vmul.f32 0.5, %v386
    %v388 = vsub.f32 1.5, %v387
    %v389 = vmul.f32 %v384, %v388
    %vm390 = vweird.f32 %v373
    %vm391 = vweird.f32 %v384
    %vm392 = vmor %vm390, %vm391
    %v393 = vsel %vm392, %v384, %v389
    %v394 = vsub.f32 0.0, %v362
    %v395 = vsub.f32 0.0, %v363
    %v396 = vmul.f32 %v394, %v383
    %v397 = vmul.f32 %v395, %v393
    %v398 = vmul.f32 %v222, %v383
    %v399 = vmul.f32 %v224, %v383
    %v400 = vmul.f32 %v227, %v383
    %v401 = vmul.f32 %v229, %v383
    %v402 = vmul.f32 %v232, %v383
    %v403 = vmul.f32 %v234, %v383
    %v404 = vmul.f32 %v237, %v383
    %v405 = vmul.f32 %v239, %v383
    %v406 = vmul.f32 %v242, %v393
    %v407 = vmul.f32 %v244, %v393
    %v408 = vmul.f32 %v247, %v393
    %v409 = vmul.f32 %v249, %v393
    %v410 = vmul.f32 %v252, %v393
    %v411 = vmul.f32 %v254, %v393
    %v412 = vmul.f32 %v257, %v393
    %v413 = vmul.f32 %v259, %v393
    %v414 = vadd.f32 %v398, %v396
    %v415 = vadd.f32 %v399, %v396
    %v416 = vadd.f32 %v400, %v396
    %v417 = vadd.f32 %v401, %v396
    %v418 = vadd.f32 %v402, %v396
    %v419 = vadd.f32 %v403, %v396
    %v420 = vadd.f32 %v404, %v396
    %v421 = vadd.f32 %v405, %v396
    %v422 = vadd.f32 %v406, %v397
    %v423 = vadd.f32 %v407, %v397
    %v424 = vadd.f32 %v408, %v397
    %v425 = vadd.f32 %v409, %v397
    %v426 = vadd.f32 %v410, %v397
    %v427 = vadd.f32 %v411, %v397
    %v428 = vadd.f32 %v412, %v397
    %v429 = vadd.f32 %v413, %v397
    %v430 = vmax.f32 %v414, 0.0
    %v431 = vmax.f32 %v415, 0.0
    %v432 = vmax.f32 %v416, 0.0
    %v433 = vmax.f32 %v417, 0.0
    %v434 = vmax.f32 %v418, 0.0
    %v435 = vmax.f32 %v419, 0.0
    %v436 = vmax.f32 %v420, 0.0
    %v437 = vmax.f32 %v421, 0.0
    %v438 = vmax.f32 %v422, 0.0
    %v439 = vmax.f32 %v423, 0.0
    %v440 = vmax.f32 %v424, 0.0
    %v441 = vmax.f32 %v425, 0.0
    %v442 = vmax.f32 %v426, 0.0
    %v443 = vmax.f32 %v427, 0.0
    %v444 = vmax.f32 %v428, 0.0
    %v445 = vmax.f32 %v429, 0.0
    %v446 = vpack.c.bf16 %v430, %v430
    %v447 = vpack.c.bf16 %v431, %v431
    %v448 = vpack.c.bf16 %v432, %v432
    %v449 = vpack.c.bf16 %v433, %v433
    %v450 = vpack.c.bf16 %v434, %v434
    %v451 = vpack.c.bf16 %v435, %v435
    %v452 = vpack.c.bf16 %v436, %v436
    %v453 = vpack.c.bf16 %v437, %v437
    %v454 = vpack.c.bf16 %v438, %v438
    %v455 = vpack.c.bf16 %v439, %v439
    %v456 = vpack.c.bf16 %v440, %v440
    %v457 = vpack.c.bf16 %v441, %v441
    %v458 = vpack.c.bf16 %v442, %v442
    %v459 = vpack.c.bf16 %v443, %v443
    %v460 = vpack.c.bf16 %v444, %v444
    %v461 = vpack.c.bf16 %v445, %v445
    %v462 = vld [vmem:[#allocation2] sm:$0xf]
    %v463 = vld [vmem:[#allocation2 + $0x4] sm:$0xf]
    %v464 = vld [vmem:[#allocation2 + $0x8] sm:$0xf]
    %v465 = vld [vmem:[#allocation2 + $0xc] sm:$0xf]
    %v466 = vld [vmem:[#allocation2 + $0x10] sm:$0xf]
    %v467 = vld [vmem:[#allocation2 + $0x14] sm:$0xf]
    %v468 = vld [vmem:[#allocation2 + $0x18] sm:$0xf]
    %v469 = vld [vmem:[#allocation2 + $0x1c] sm:$0xf]
    %v486 = vunpack.c.l.b16 %v446
    %v487 = vunpack.c.l.b16 %v447
    %v488 = vunpack.c.l.b16 %v448
    %v489 = vunpack.c.l.b16 %v449
    %v490 = vunpack.c.l.b16 %v450
    %v491 = vunpack.c.l.b16 %v451
    %v492 = vunpack.c.l.b16 %v452
    %v493 = vunpack.c.l.b16 %v453
    %v494 = vunpack.c.l.b16 %v454
    %v495 = vunpack.c.l.b16 %v455
    %v496 = vunpack.c.l.b16 %v456
    %v497 = vunpack.c.l.b16 %v457
    %v498 = vunpack.c.l.b16 %v458
    %v499 = vunpack.c.l.b16 %v459
    %v500 = vunpack.c.l.b16 %v460
    %v501 = vunpack.c.l.b16 %v461
    %v502 = vpack.c.b16 %v487, %v486
    %v503 = vpack.c.b16 %v489, %v488
    %v504 = vpack.c.b16 %v491, %v490
    %v505 = vpack.c.b16 %v493, %v492
    %v506 = vpack.c.b16 %v495, %v494
    %v507 = vpack.c.b16 %v497, %v496
    %v508 = vpack.c.b16 %v499, %v498
    %v509 = vpack.c.b16 %v501, %v500
    %v518 = vunpack.c.l.b16 %v462
    %v519 = vunpack.c.l.b16 %v463
    %v520 = vunpack.c.l.b16 %v464
    %v521 = vunpack.c.l.b16 %v465
    %v522 = vunpack.c.l.b16 %v466
    %v523 = vunpack.c.l.b16 %v467
    %v524 = vunpack.c.l.b16 %v468
    %v525 = vunpack.c.l.b16 %v469
    %v526 = vpack.c.b16 %v519, %v518
    %v527 = vpack.c.b16 %v521, %v520
    %v528 = vpack.c.b16 %v523, %v522
    %v529 = vpack.c.b16 %v525, %v524
    %v535 = vsel %vm261, %v502, 0
    %v538 = vsel %vm261, %v503, 0
    %v541 = vsel %vm261, %v504, 0
    %v544 = vsel %vm261, %v505, 0
    %v547 = vsel %vm261, %v506, 0
    %v550 = vsel %vm261, %v507, 0
    %v553 = vsel %vm261, %v508, 0
    %v556 = vsel %vm261, %v509, 0
    %558 = vmatpush.bf16.msra.mxu0 0
    %559 = vmatpush.bf16.msra.mxu0 0
    %560 = vmatpush.bf16.msra.mxu0 0
    %561 = vmatpush.bf16.msra.mxu0 0
    %562 = vmatpush.bf16.msra.mxu0 %v529
    %563 = vmatpush.bf16.msra.mxu0 %v528
    %564 = vmatpush.bf16.msra.mxu0 %v527
    %565 = vmatpush.bf16.msra.mxu0 %v526
    %566 = vmatmul.bf16.gmra.mxu0 %v535
    %v567 = vpop.f32.mrf.mxu0
    %v568 = vadd.f32 0.0, %v567
    %v569 = vpop.f32.mrf.mxu0
    %v570 = vadd.f32 0.0, %v569
    %571 = vmatmul.bf16.gmra.mxu0 %v538
    %v572 = vpop.f32.mrf.mxu0
    %v573 = vadd.f32 0.0, %v572
    %v574 = vpop.f32.mrf.mxu0
    %v575 = vadd.f32 0.0, %v574
    %576 = vmatmul.bf16.gmra.mxu0 %v541
    %v577 = vpop.f32.mrf.mxu0
    %v578 = vadd.f32 0.0, %v577
    %v579 = vpop.f32.mrf.mxu0
    %v580 = vadd.f32 0.0, %v579
    %581 = vmatmul.bf16.gmra.mxu0 %v544
    %v582 = vpop.f32.mrf.mxu0
    %v583 = vadd.f32 0.0, %v582
    %v584 = vpop.f32.mrf.mxu0
    %v585 = vadd.f32 0.0, %v584
    %586 = vmatmul.bf16.gmra.mxu0 %v547
    %v587 = vpop.f32.mrf.mxu0
    %v588 = vadd.f32 0.0, %v587
    %v589 = vpop.f32.mrf.mxu0
    %v590 = vadd.f32 0.0, %v589
    %591 = vmatmul.bf16.gmra.mxu0 %v550
    %v592 = vpop.f32.mrf.mxu0
    %v593 = vadd.f32 0.0, %v592
    %v594 = vpop.f32.mrf.mxu0
    %v595 = vadd.f32 0.0, %v594
    %596 = vmatmul.bf16.gmra.mxu0 %v553
    %v597 = vpop.f32.mrf.mxu0
    %v598 = vadd.f32 0.0, %v597
    %v599 = vpop.f32.mrf.mxu0
    %v600 = vadd.f32 0.0, %v599
    %601 = vmatmul.bf16.gmra.mxu0 %v556
    %v602 = vpop.f32.mrf.mxu0
    %v603 = vadd.f32 0.0, %v602
    %v604 = vpop.f32.mrf.mxu0
    %v605 = vadd.f32 0.0, %v604
    %606 = vdwg.mxu0
    %v607 = vsel %vm261, %v568, 0.0
    %v608 = vsel %vm261, %v570, 0.0
    %v609 = vadd.f32 %v607, %v608
    %v610 = vsel %vm261, %v573, 0.0
    %v611 = vadd.f32 %v609, %v610
    %v612 = vsel %vm261, %v575, 0.0
    %v613 = vadd.f32 %v611, %v612
    %v614 = vsel %vm261, %v578, 0.0
    %v615 = vadd.f32 %v613, %v614
    %v616 = vsel %vm261, %v580, 0.0
    %v617 = vadd.f32 %v615, %v616
    %v618 = vsel %vm261, %v583, 0.0
    %v619 = vadd.f32 %v617, %v618
    %v620 = vsel %vm261, %v585, 0.0
    %v621 = vadd.f32 %v619, %v620
    %v622 = vrot.slane %v621, 4
    %v623 = vadd.f32 %v621, %v622
    %v624 = vrot.slane %v623, 2
    %v625 = vadd.f32 %v623, %v624
    %v626 = vrot.slane %v625, 1
    %v627 = vadd.f32 %v625, %v626
    %v628 = vsel %vm261, %v588, 0.0
    %v629 = vsel %vm261, %v590, 0.0
    %v630 = vadd.f32 %v628, %v629
    %v631 = vsel %vm261, %v593, 0.0
    %v632 = vadd.f32 %v630, %v631
    %v633 = vsel %vm261, %v595, 0.0
    %v634 = vadd.f32 %v632, %v633
    %v635 = vsel %vm261, %v598, 0.0
    %v636 = vadd.f32 %v634, %v635
    %v637 = vsel %vm261, %v600, 0.0
    %v638 = vadd.f32 %v636, %v637
    %v639 = vsel %vm261, %v603, 0.0
    %v640 = vadd.f32 %v638, %v639
    %v641 = vsel %vm261, %v605, 0.0
    %v642 = vadd.f32 %v640, %v641
    %v643 = vrot.slane %v642, 4
    %v644 = vadd.f32 %v642, %v643
    %v645 = vrot.slane %v644, 2
    %v646 = vadd.f32 %v644, %v645
    %v647 = vrot.slane %v646, 1
    %v648 = vadd.f32 %v646, %v647
    %v649 = vmul.f32 %v568, %v568
    %v650 = vmul.f32 %v570, %v570
    %v651 = vmul.f32 %v573, %v573
    %v652 = vmul.f32 %v575, %v575
    %v653 = vmul.f32 %v578, %v578
    %v654 = vmul.f32 %v580, %v580
    %v655 = vmul.f32 %v583, %v583
    %v656 = vmul.f32 %v585, %v585
    %v657 = vmul.f32 %v588, %v588
    %v658 = vmul.f32 %v590, %v590
    %v659 = vmul.f32 %v593, %v593
    %v660 = vmul.f32 %v595, %v595
    %v661 = vmul.f32 %v598, %v598
    %v662 = vmul.f32 %v600, %v600
    %v663 = vmul.f32 %v603, %v603
    %v664 = vmul.f32 %v605, %v605
    %v665 = vsel %vm261, %v649, 0.0
    %v666 = vsel %vm261, %v650, 0.0
    %v667 = vadd.f32 %v665, %v666
    %v668 = vsel %vm261, %v651, 0.0
    %v669 = vadd.f32 %v667, %v668
    %v670 = vsel %vm261, %v652, 0.0
    %v671 = vadd.f32 %v669, %v670
    %v672 = vsel %vm261, %v653, 0.0
    %v673 = vadd.f32 %v671, %v672
    %v674 = vsel %vm261, %v654, 0.0
    %v675 = vadd.f32 %v673, %v674
    %v676 = vsel %vm261, %v655, 0.0
    %v677 = vadd.f32 %v675, %v676
    %v678 = vsel %vm261, %v656, 0.0
    %v679 = vadd.f32 %v677, %v678
    %v680 = vrot.slane %v679, 4
    %v681 = vadd.f32 %v679, %v680
    %v682 = vrot.slane %v681, 2
    %v683 = vadd.f32 %v681, %v682
    %v684 = vrot.slane %v683, 1
    %v685 = vadd.f32 %v683, %v684
    %v686 = vsel %vm261, %v657, 0.0
    %v687 = vsel %vm261, %v658, 0.0
    %v688 = vadd.f32 %v686, %v687
    %v689 = vsel %vm261, %v659, 0.0
    %v690 = vadd.f32 %v688, %v689
    %v691 = vsel %vm261, %v660, 0.0
    %v692 = vadd.f32 %v690, %v691
    %v693 = vsel %vm261, %v661, 0.0
    %v694 = vadd.f32 %v692, %v693
    %v695 = vsel %vm261, %v662, 0.0
    %v696 = vadd.f32 %v694, %v695
    %v697 = vsel %vm261, %v663, 0.0
    %v698 = vadd.f32 %v696, %v697
    %v699 = vsel %vm261, %v664, 0.0
    %v700 = vadd.f32 %v698, %v699
    %v701 = vrot.slane %v700, 4
    %v702 = vadd.f32 %v700, %v701
    %v703 = vrot.slane %v702, 2
    %v704 = vadd.f32 %v702, %v703
    %v705 = vrot.slane %v704, 1
    %v706 = vadd.f32 %v704, %v705
    %v707 = vmul.f32 %v627, 0.015625
    %v708 = vmul.f32 %v648, 0.015625
    %v709 = vmul.f32 %v685, 0.015625
    %v710 = vmul.f32 %v706, 0.015625
    %v711 = vmul.f32 %v707, %v707
    %v712 = vmul.f32 %v708, %v708
    %v713 = vsub.f32 %v709, %v711
    %v714 = vsub.f32 %v710, %v712
    %v715 = vmax.f32 %v713, 0.0
    %v716 = vmax.f32 %v714, 0.0
    %v717 = vadd.f32 %v715, 1e-05
    %v718 = vadd.f32 %v716, 1e-05
    %v719 = vrsqrt.pop %v717
    %v720 = vmul.f32 %v719, %v717
    %v721 = vmul.f32 %v720, %v719
    %v722 = vmul.f32 0.5, %v721
    %v723 = vsub.f32 1.5, %v722
    %v724 = vmul.f32 %v719, %v723
    %vm725 = vweird.f32 %v717
    %vm726 = vweird.f32 %v719
    %vm727 = vmor %vm725, %vm726
    %v728 = vsel %vm727, %v719, %v724
    %v729 = vrsqrt.pop %v718
    %v730 = vmul.f32 %v729, %v718
    %v731 = vmul.f32 %v730, %v729
    %v732 = vmul.f32 0.5, %v731
    %v733 = vsub.f32 1.5, %v732
    %v734 = vmul.f32 %v729, %v733
    %vm735 = vweird.f32 %v718
    %vm736 = vweird.f32 %v729
    %vm737 = vmor %vm735, %vm736
    %v738 = vsel %vm737, %v729, %v734
    %v739 = vsub.f32 0.0, %v707
    %v740 = vsub.f32 0.0, %v708
    %v741 = vmul.f32 %v739, %v728
    %v742 = vmul.f32 %v740, %v738
    %v743 = vmul.f32 %v568, %v728
    %v744 = vmul.f32 %v570, %v728
    %v745 = vmul.f32 %v573, %v728
    %v746 = vmul.f32 %v575, %v728
    %v747 = vmul.f32 %v578, %v728
    %v748 = vmul.f32 %v580, %v728
    %v749 = vmul.f32 %v583, %v728
    %v750 = vmul.f32 %v585, %v728
    %v751 = vmul.f32 %v588, %v738
    %v752 = vmul.f32 %v590, %v738
    %v753 = vmul.f32 %v593, %v738
    %v754 = vmul.f32 %v595, %v738
    %v755 = vmul.f32 %v598, %v738
    %v756 = vmul.f32 %v600, %v738
    %v757 = vmul.f32 %v603, %v738
    %v758 = vmul.f32 %v605, %v738
    %v759 = vadd.f32 %v743, %v741
    %v760 = vadd.f32 %v744, %v741
    %v761 = vadd.f32 %v745, %v741
    %v762 = vadd.f32 %v746, %v741
    %v763 = vadd.f32 %v747, %v741
    %v764 = vadd.f32 %v748, %v741
    %v765 = vadd.f32 %v749, %v741
    %v766 = vadd.f32 %v750, %v741
    %v767 = vadd.f32 %v751, %v742
    %v768 = vadd.f32 %v752, %v742
    %v769 = vadd.f32 %v753, %v742
    %v770 = vadd.f32 %v754, %v742
    %v771 = vadd.f32 %v755, %v742
    %v772 = vadd.f32 %v756, %v742
    %v773 = vadd.f32 %v757, %v742
    %v774 = vadd.f32 %v758, %v742
    %v775 = vmax.f32 %v759, 0.0
    %v776 = vmax.f32 %v760, 0.0
    %v777 = vmax.f32 %v761, 0.0
    %v778 = vmax.f32 %v762, 0.0
    %v779 = vmax.f32 %v763, 0.0
    %v780 = vmax.f32 %v764, 0.0
    %v781 = vmax.f32 %v765, 0.0
    %v782 = vmax.f32 %v766, 0.0
    %v783 = vmax.f32 %v767, 0.0
    %v784 = vmax.f32 %v768, 0.0
    %v785 = vmax.f32 %v769, 0.0
    %v786 = vmax.f32 %v770, 0.0
    %v787 = vmax.f32 %v771, 0.0
    %v788 = vmax.f32 %v772, 0.0
    %v789 = vmax.f32 %v773, 0.0
    %v790 = vmax.f32 %v774, 0.0
    %v791 = vpack.c.bf16 %v775, %v775
    %v792 = vpack.c.bf16 %v776, %v776
    %v793 = vpack.c.bf16 %v777, %v777
    %v794 = vpack.c.bf16 %v778, %v778
    %v795 = vpack.c.bf16 %v779, %v779
    %v796 = vpack.c.bf16 %v780, %v780
    %v797 = vpack.c.bf16 %v781, %v781
    %v798 = vpack.c.bf16 %v782, %v782
    %v799 = vpack.c.bf16 %v783, %v783
    %v800 = vpack.c.bf16 %v784, %v784
    %v801 = vpack.c.bf16 %v785, %v785
    %v802 = vpack.c.bf16 %v786, %v786
    %v803 = vpack.c.bf16 %v787, %v787
    %v804 = vpack.c.bf16 %v788, %v788
    %v805 = vpack.c.bf16 %v789, %v789
    %v806 = vpack.c.bf16 %v790, %v790
    %v807 = vld [vmem:[#allocation4] sm:$0xf]
    %v808 = vld [vmem:[#allocation4 + $0x4] sm:$0xf]
    %v809 = vld [vmem:[#allocation4 + $0x8] sm:$0xf]
    %v810 = vld [vmem:[#allocation4 + $0xc] sm:$0xf]
    %v811 = vld [vmem:[#allocation4 + $0x10] sm:$0xf]
    %v812 = vld [vmem:[#allocation4 + $0x14] sm:$0xf]
    %v813 = vld [vmem:[#allocation4 + $0x18] sm:$0xf]
    %v814 = vld [vmem:[#allocation4 + $0x1c] sm:$0xf]
    %v831 = vunpack.c.l.b16 %v791
    %v832 = vunpack.c.l.b16 %v792
    %v833 = vunpack.c.l.b16 %v793
    %v834 = vunpack.c.l.b16 %v794
    %v835 = vunpack.c.l.b16 %v795
    %v836 = vunpack.c.l.b16 %v796
    %v837 = vunpack.c.l.b16 %v797
    %v838 = vunpack.c.l.b16 %v798
    %v839 = vunpack.c.l.b16 %v799
    %v840 = vunpack.c.l.b16 %v800
    %v841 = vunpack.c.l.b16 %v801
    %v842 = vunpack.c.l.b16 %v802
    %v843 = vunpack.c.l.b16 %v803
    %v844 = vunpack.c.l.b16 %v804
    %v845 = vunpack.c.l.b16 %v805
    %v846 = vunpack.c.l.b16 %v806
    %v847 = vpack.c.b16 %v832, %v831
    %v848 = vpack.c.b16 %v834, %v833
    %v849 = vpack.c.b16 %v836, %v835
    %v850 = vpack.c.b16 %v838, %v837
    %v851 = vpack.c.b16 %v840, %v839
    %v852 = vpack.c.b16 %v842, %v841
    %v853 = vpack.c.b16 %v844, %v843
    %v854 = vpack.c.b16 %v846, %v845
    %v863 = vunpack.c.l.b16 %v807
    %v864 = vunpack.c.l.b16 %v808
    %v865 = vunpack.c.l.b16 %v809
    %v866 = vunpack.c.l.b16 %v810
    %v867 = vunpack.c.l.b16 %v811
    %v868 = vunpack.c.l.b16 %v812
    %v869 = vunpack.c.l.b16 %v813
    %v870 = vunpack.c.l.b16 %v814
    %v871 = vpack.c.b16 %v864, %v863
    %v872 = vpack.c.b16 %v866, %v865
    %v873 = vpack.c.b16 %v868, %v867
    %v874 = vpack.c.b16 %v870, %v869
    %v880 = vsel %vm261, %v847, 0
    %v883 = vsel %vm261, %v848, 0
    %v886 = vsel %vm261, %v849, 0
    %v889 = vsel %vm261, %v850, 0
    %v892 = vsel %vm261, %v851, 0
    %v895 = vsel %vm261, %v852, 0
    %v898 = vsel %vm261, %v853, 0
    %v901 = vsel %vm261, %v854, 0
    %903 = vmatpush.bf16.msra.mxu0 0
    %904 = vmatpush.bf16.msra.mxu0 0
    %905 = vmatpush.bf16.msra.mxu0 0
    %906 = vmatpush.bf16.msra.mxu0 0
    %907 = vmatpush.bf16.msra.mxu0 %v874
    %908 = vmatpush.bf16.msra.mxu0 %v873
    %909 = vmatpush.bf16.msra.mxu0 %v872
    %910 = vmatpush.bf16.msra.mxu0 %v871
    %911 = vmatmul.bf16.gmra.mxu0 %v880
    %v912 = vpop.f32.mrf.mxu0
    %v913 = vadd.f32 0.0, %v912
    %v914 = vpop.f32.mrf.mxu0
    %v915 = vadd.f32 0.0, %v914
    %916 = vmatmul.bf16.gmra.mxu0 %v883
    %v917 = vpop.f32.mrf.mxu0
    %v918 = vadd.f32 0.0, %v917
    %v919 = vpop.f32.mrf.mxu0
    %v920 = vadd.f32 0.0, %v919
    %921 = vmatmul.bf16.gmra.mxu0 %v886
    %v922 = vpop.f32.mrf.mxu0
    %v923 = vadd.f32 0.0, %v922
    %v924 = vpop.f32.mrf.mxu0
    %v925 = vadd.f32 0.0, %v924
    %926 = vmatmul.bf16.gmra.mxu0 %v889
    %v927 = vpop.f32.mrf.mxu0
    %v928 = vadd.f32 0.0, %v927
    %v929 = vpop.f32.mrf.mxu0
    %v930 = vadd.f32 0.0, %v929
    %931 = vmatmul.bf16.gmra.mxu0 %v892
    %v932 = vpop.f32.mrf.mxu0
    %v933 = vadd.f32 0.0, %v932
    %v934 = vpop.f32.mrf.mxu0
    %v935 = vadd.f32 0.0, %v934
    %936 = vmatmul.bf16.gmra.mxu0 %v895
    %v937 = vpop.f32.mrf.mxu0
    %v938 = vadd.f32 0.0, %v937
    %v939 = vpop.f32.mrf.mxu0
    %v940 = vadd.f32 0.0, %v939
    %941 = vmatmul.bf16.gmra.mxu0 %v898
    %v942 = vpop.f32.mrf.mxu0
    %v943 = vadd.f32 0.0, %v942
    %v944 = vpop.f32.mrf.mxu0
    %v945 = vadd.f32 0.0, %v944
    %946 = vmatmul.bf16.gmra.mxu0 %v901
    %v947 = vpop.f32.mrf.mxu0
    %v948 = vadd.f32 0.0, %v947
    %v949 = vpop.f32.mrf.mxu0
    %v950 = vadd.f32 0.0, %v949
    %951 = vdwg.mxu0
    %v952 = vsel %vm261, %v913, 0.0
    %v953 = vsel %vm261, %v915, 0.0
    %v954 = vadd.f32 %v952, %v953
    %v955 = vsel %vm261, %v918, 0.0
    %v956 = vadd.f32 %v954, %v955
    %v957 = vsel %vm261, %v920, 0.0
    %v958 = vadd.f32 %v956, %v957
    %v959 = vsel %vm261, %v923, 0.0
    %v960 = vadd.f32 %v958, %v959
    %v961 = vsel %vm261, %v925, 0.0
    %v962 = vadd.f32 %v960, %v961
    %v963 = vsel %vm261, %v928, 0.0
    %v964 = vadd.f32 %v962, %v963
    %v965 = vsel %vm261, %v930, 0.0
    %v966 = vadd.f32 %v964, %v965
    %v967 = vrot.slane %v966, 4
    %v968 = vadd.f32 %v966, %v967
    %v969 = vrot.slane %v968, 2
    %v970 = vadd.f32 %v968, %v969
    %v971 = vrot.slane %v970, 1
    %v972 = vadd.f32 %v970, %v971
    %v973 = vsel %vm261, %v933, 0.0
    %v974 = vsel %vm261, %v935, 0.0
    %v975 = vadd.f32 %v973, %v974
    %v976 = vsel %vm261, %v938, 0.0
    %v977 = vadd.f32 %v975, %v976
    %v978 = vsel %vm261, %v940, 0.0
    %v979 = vadd.f32 %v977, %v978
    %v980 = vsel %vm261, %v943, 0.0
    %v981 = vadd.f32 %v979, %v980
    %v982 = vsel %vm261, %v945, 0.0
    %v983 = vadd.f32 %v981, %v982
    %v984 = vsel %vm261, %v948, 0.0
    %v985 = vadd.f32 %v983, %v984
    %v986 = vsel %vm261, %v950, 0.0
    %v987 = vadd.f32 %v985, %v986
    %v988 = vrot.slane %v987, 4
    %v989 = vadd.f32 %v987, %v988
    %v990 = vrot.slane %v989, 2
    %v991 = vadd.f32 %v989, %v990
    %v992 = vrot.slane %v991, 1
    %v993 = vadd.f32 %v991, %v992
    %v994 = vmul.f32 %v913, %v913
    %v995 = vmul.f32 %v915, %v915
    %v996 = vmul.f32 %v918, %v918
    %v997 = vmul.f32 %v920, %v920
    %v998 = vmul.f32 %v923, %v923
    %v999 = vmul.f32 %v925, %v925
    %v1000 = vmul.f32 %v928, %v928
    %v1001 = vmul.f32 %v930, %v930
    %v1002 = vmul.f32 %v933, %v933
    %v1003 = vmul.f32 %v935, %v935
    %v1004 = vmul.f32 %v938, %v938
    %v1005 = vmul.f32 %v940, %v940
    %v1006 = vmul.f32 %v943, %v943
    %v1007 = vmul.f32 %v945, %v945
    %v1008 = vmul.f32 %v948, %v948
    %v1009 = vmul.f32 %v950, %v950
    %v1010 = vsel %vm261, %v994, 0.0
    %v1011 = vsel %vm261, %v995, 0.0
    %v1012 = vadd.f32 %v1010, %v1011
    %v1013 = vsel %vm261, %v996, 0.0
    %v1014 = vadd.f32 %v1012, %v1013
    %v1015 = vsel %vm261, %v997, 0.0
    %v1016 = vadd.f32 %v1014, %v1015
    %v1017 = vsel %vm261, %v998, 0.0
    %v1018 = vadd.f32 %v1016, %v1017
    %v1019 = vsel %vm261, %v999, 0.0
    %v1020 = vadd.f32 %v1018, %v1019
    %v1021 = vsel %vm261, %v1000, 0.0
    %v1022 = vadd.f32 %v1020, %v1021
    %v1023 = vsel %vm261, %v1001, 0.0
    %v1024 = vadd.f32 %v1022, %v1023
    %v1025 = vrot.slane %v1024, 4
    %v1026 = vadd.f32 %v1024, %v1025
    %v1027 = vrot.slane %v1026, 2
    %v1028 = vadd.f32 %v1026, %v1027
    %v1029 = vrot.slane %v1028, 1
    %v1030 = vadd.f32 %v1028, %v1029
    %v1031 = vsel %vm261, %v1002, 0.0
    %v1032 = vsel %vm261, %v1003, 0.0
    %v1033 = vadd.f32 %v1031, %v1032
    %v1034 = vsel %vm261, %v1004, 0.0
    %v1035 = vadd.f32 %v1033, %v1034
    %v1036 = vsel %vm261, %v1005, 0.0
    %v1037 = vadd.f32 %v1035, %v1036
    %v1038 = vsel %vm261, %v1006, 0.0
    %v1039 = vadd.f32 %v1037, %v1038
    %v1040 = vsel %vm261, %v1007, 0.0
    %v1041 = vadd.f32 %v1039, %v1040
    %v1042 = vsel %vm261, %v1008, 0.0
    %v1043 = vadd.f32 %v1041, %v1042
    %v1044 = vsel %vm261, %v1009, 0.0
    %v1045 = vadd.f32 %v1043, %v1044
    %v1046 = vrot.slane %v1045, 4
    %v1047 = vadd.f32 %v1045, %v1046
    %v1048 = vrot.slane %v1047, 2
    %v1049 = vadd.f32 %v1047, %v1048
    %v1050 = vrot.slane %v1049, 1
    %v1051 = vadd.f32 %v1049, %v1050
    %v1052 = vmul.f32 %v972, 0.015625
    %v1053 = vmul.f32 %v993, 0.015625
    %v1054 = vmul.f32 %v1030, 0.015625
    %v1055 = vmul.f32 %v1051, 0.015625
    %v1056 = vmul.f32 %v1052, %v1052
    %v1057 = vmul.f32 %v1053, %v1053
    %v1058 = vsub.f32 %v1054, %v1056
    %v1059 = vsub.f32 %v1055, %v1057
    %v1060 = vmax.f32 %v1058, 0.0
    %v1061 = vmax.f32 %v1059, 0.0
    %v1062 = vadd.f32 %v1060, 1e-05
    %v1063 = vadd.f32 %v1061, 1e-05
    %v1064 = vrsqrt.pop %v1062
    %v1065 = vmul.f32 %v1064, %v1062
    %v1066 = vmul.f32 %v1065, %v1064
    %v1067 = vmul.f32 0.5, %v1066
    %v1068 = vsub.f32 1.5, %v1067
    %v1069 = vmul.f32 %v1064, %v1068
    %vm1070 = vweird.f32 %v1062
    %vm1071 = vweird.f32 %v1064
    %vm1072 = vmor %vm1070, %vm1071
    %v1073 = vsel %vm1072, %v1064, %v1069
    %v1074 = vrsqrt.pop %v1063
    %v1075 = vmul.f32 %v1074, %v1063
    %v1076 = vmul.f32 %v1075, %v1074
    %v1077 = vmul.f32 0.5, %v1076
    %v1078 = vsub.f32 1.5, %v1077
    %v1079 = vmul.f32 %v1074, %v1078
    %vm1080 = vweird.f32 %v1063
    %vm1081 = vweird.f32 %v1074
    %vm1082 = vmor %vm1080, %vm1081
    %v1083 = vsel %vm1082, %v1074, %v1079
    %v1084 = vsub.f32 0.0, %v1052
    %v1085 = vsub.f32 0.0, %v1053
    %v1086 = vmul.f32 %v1084, %v1073
    %v1087 = vmul.f32 %v1085, %v1083
    %v1088 = vmul.f32 %v913, %v1073
    %v1089 = vmul.f32 %v915, %v1073
    %v1090 = vmul.f32 %v918, %v1073
    %v1091 = vmul.f32 %v920, %v1073
    %v1092 = vmul.f32 %v923, %v1073
    %v1093 = vmul.f32 %v925, %v1073
    %v1094 = vmul.f32 %v928, %v1073
    %v1095 = vmul.f32 %v930, %v1073
    %v1096 = vmul.f32 %v933, %v1083
    %v1097 = vmul.f32 %v935, %v1083
    %v1098 = vmul.f32 %v938, %v1083
    %v1099 = vmul.f32 %v940, %v1083
    %v1100 = vmul.f32 %v943, %v1083
    %v1101 = vmul.f32 %v945, %v1083
    %v1102 = vmul.f32 %v948, %v1083
    %v1103 = vmul.f32 %v950, %v1083
    %v1104 = vadd.f32 %v1088, %v1086
    %v1105 = vadd.f32 %v1089, %v1086
    %v1106 = vadd.f32 %v1090, %v1086
    %v1107 = vadd.f32 %v1091, %v1086
    %v1108 = vadd.f32 %v1092, %v1086
    %v1109 = vadd.f32 %v1093, %v1086
    %v1110 = vadd.f32 %v1094, %v1086
    %v1111 = vadd.f32 %v1095, %v1086
    %v1112 = vadd.f32 %v1096, %v1087
    %v1113 = vadd.f32 %v1097, %v1087
    %v1114 = vadd.f32 %v1098, %v1087
    %v1115 = vadd.f32 %v1099, %v1087
    %v1116 = vadd.f32 %v1100, %v1087
    %v1117 = vadd.f32 %v1101, %v1087
    %v1118 = vadd.f32 %v1102, %v1087
    %v1119 = vadd.f32 %v1103, %v1087
    %v1120 = vmax.f32 %v1104, 0.0
    %v1121 = vmax.f32 %v1105, 0.0
    %v1122 = vmax.f32 %v1106, 0.0
    %v1123 = vmax.f32 %v1107, 0.0
    %v1124 = vmax.f32 %v1108, 0.0
    %v1125 = vmax.f32 %v1109, 0.0
    %v1126 = vmax.f32 %v1110, 0.0
    %v1127 = vmax.f32 %v1111, 0.0
    %v1128 = vmax.f32 %v1112, 0.0
    %v1129 = vmax.f32 %v1113, 0.0
    %v1130 = vmax.f32 %v1114, 0.0
    %v1131 = vmax.f32 %v1115, 0.0
    %v1132 = vmax.f32 %v1116, 0.0
    %v1133 = vmax.f32 %v1117, 0.0
    %v1134 = vmax.f32 %v1118, 0.0
    %v1135 = vmax.f32 %v1119, 0.0
    %v1136 = vpack.c.bf16 %v1120, %v1120
    %v1137 = vpack.c.bf16 %v1121, %v1121
    %v1138 = vpack.c.bf16 %v1122, %v1122
    %v1139 = vpack.c.bf16 %v1123, %v1123
    %v1140 = vpack.c.bf16 %v1124, %v1124
    %v1141 = vpack.c.bf16 %v1125, %v1125
    %v1142 = vpack.c.bf16 %v1126, %v1126
    %v1143 = vpack.c.bf16 %v1127, %v1127
    %v1144 = vpack.c.bf16 %v1128, %v1128
    %v1145 = vpack.c.bf16 %v1129, %v1129
    %v1146 = vpack.c.bf16 %v1130, %v1130
    %v1147 = vpack.c.bf16 %v1131, %v1131
    %v1148 = vpack.c.bf16 %v1132, %v1132
    %v1149 = vpack.c.bf16 %v1133, %v1133
    %v1150 = vpack.c.bf16 %v1134, %v1134
    %v1151 = vpack.c.bf16 %v1135, %v1135
    %v1152 = vld [vmem:[#allocation6] sm:$0xf]
    %v1153 = vld [vmem:[#allocation6 + $0x4] sm:$0xf]
    %v1154 = vld [vmem:[#allocation6 + $0x8] sm:$0xf]
    %v1155 = vld [vmem:[#allocation6 + $0xc] sm:$0xf]
    %v1156 = vld [vmem:[#allocation6 + $0x10] sm:$0xf]
    %v1157 = vld [vmem:[#allocation6 + $0x14] sm:$0xf]
    %v1158 = vld [vmem:[#allocation6 + $0x18] sm:$0xf]
    %v1159 = vld [vmem:[#allocation6 + $0x1c] sm:$0xf]
    %v1176 = vunpack.c.l.b16 %v1136
    %v1177 = vunpack.c.l.b16 %v1137
    %v1178 = vunpack.c.l.b16 %v1138
    %v1179 = vunpack.c.l.b16 %v1139
    %v1180 = vunpack.c.l.b16 %v1140
    %v1181 = vunpack.c.l.b16 %v1141
    %v1182 = vunpack.c.l.b16 %v1142
    %v1183 = vunpack.c.l.b16 %v1143
    %v1184 = vunpack.c.l.b16 %v1144
    %v1185 = vunpack.c.l.b16 %v1145
    %v1186 = vunpack.c.l.b16 %v1146
    %v1187 = vunpack.c.l.b16 %v1147
    %v1188 = vunpack.c.l.b16 %v1148
    %v1189 = vunpack.c.l.b16 %v1149
    %v1190 = vunpack.c.l.b16 %v1150
    %v1191 = vunpack.c.l.b16 %v1151
    %v1192 = vpack.c.b16 %v1177, %v1176
    %v1193 = vpack.c.b16 %v1179, %v1178
    %v1194 = vpack.c.b16 %v1181, %v1180
    %v1195 = vpack.c.b16 %v1183, %v1182
    %v1196 = vpack.c.b16 %v1185, %v1184
    %v1197 = vpack.c.b16 %v1187, %v1186
    %v1198 = vpack.c.b16 %v1189, %v1188
    %v1199 = vpack.c.b16 %v1191, %v1190
    %v1208 = vunpack.c.l.b16 %v1152
    %v1209 = vunpack.c.l.b16 %v1153
    %v1210 = vunpack.c.l.b16 %v1154
    %v1211 = vunpack.c.l.b16 %v1155
    %v1212 = vunpack.c.l.b16 %v1156
    %v1213 = vunpack.c.l.b16 %v1157
    %v1214 = vunpack.c.l.b16 %v1158
    %v1215 = vunpack.c.l.b16 %v1159
    %v1216 = vpack.c.b16 %v1209, %v1208
    %v1217 = vpack.c.b16 %v1211, %v1210
    %v1218 = vpack.c.b16 %v1213, %v1212
    %v1219 = vpack.c.b16 %v1215, %v1214
    %v1225 = vsel %vm261, %v1192, 0
    %v1228 = vsel %vm261, %v1193, 0
    %v1231 = vsel %vm261, %v1194, 0
    %v1234 = vsel %vm261, %v1195, 0
    %v1237 = vsel %vm261, %v1196, 0
    %v1240 = vsel %vm261, %v1197, 0
    %v1243 = vsel %vm261, %v1198, 0
    %v1246 = vsel %vm261, %v1199, 0
    %1248 = vmatpush.bf16.msra.mxu0 0
    %1249 = vmatpush.bf16.msra.mxu0 0
    %1250 = vmatpush.bf16.msra.mxu0 0
    %1251 = vmatpush.bf16.msra.mxu0 0
    %1252 = vmatpush.bf16.msra.mxu0 %v1219
    %1253 = vmatpush.bf16.msra.mxu0 %v1218
    %1254 = vmatpush.bf16.msra.mxu0 %v1217
    %1255 = vmatpush.bf16.msra.mxu0 %v1216
    %1256 = vmatmul.bf16.gmra.mxu0 %v1225
    %v1257 = vpop.f32.mrf.mxu0
    %v1258 = vadd.f32 0.0, %v1257
    %v1259 = vpop.f32.mrf.mxu0
    %v1260 = vadd.f32 0.0, %v1259
    %1261 = vmatmul.bf16.gmra.mxu0 %v1228
    %v1262 = vpop.f32.mrf.mxu0
    %v1263 = vadd.f32 0.0, %v1262
    %v1264 = vpop.f32.mrf.mxu0
    %v1265 = vadd.f32 0.0, %v1264
    %1266 = vmatmul.bf16.gmra.mxu0 %v1231
    %v1267 = vpop.f32.mrf.mxu0
    %v1268 = vadd.f32 0.0, %v1267
    %v1269 = vpop.f32.mrf.mxu0
    %v1270 = vadd.f32 0.0, %v1269
    %1271 = vmatmul.bf16.gmra.mxu0 %v1234
    %v1272 = vpop.f32.mrf.mxu0
    %v1273 = vadd.f32 0.0, %v1272
    %v1274 = vpop.f32.mrf.mxu0
    %v1275 = vadd.f32 0.0, %v1274
    %1276 = vmatmul.bf16.gmra.mxu0 %v1237
    %v1277 = vpop.f32.mrf.mxu0
    %v1278 = vadd.f32 0.0, %v1277
    %v1279 = vpop.f32.mrf.mxu0
    %v1280 = vadd.f32 0.0, %v1279
    %1281 = vmatmul.bf16.gmra.mxu0 %v1240
    %v1282 = vpop.f32.mrf.mxu0
    %v1283 = vadd.f32 0.0, %v1282
    %v1284 = vpop.f32.mrf.mxu0
    %v1285 = vadd.f32 0.0, %v1284
    %1286 = vmatmul.bf16.gmra.mxu0 %v1243
    %v1287 = vpop.f32.mrf.mxu0
    %v1288 = vadd.f32 0.0, %v1287
    %v1289 = vpop.f32.mrf.mxu0
    %v1290 = vadd.f32 0.0, %v1289
    %1291 = vmatmul.bf16.gmra.mxu0 %v1246
    %v1292 = vpop.f32.mrf.mxu0
    %v1293 = vadd.f32 0.0, %v1292
    %v1294 = vpop.f32.mrf.mxu0
    %v1295 = vadd.f32 0.0, %v1294
    %1296 = vdwg.mxu0
    %v1297 = vadd.f32 %v1258, %v1260
    %v1298 = vadd.f32 %v1297, %v1263
    %v1299 = vadd.f32 %v1298, %v1265
    %v1300 = vadd.f32 %v1299, %v1268
    %v1301 = vadd.f32 %v1300, %v1270
    %v1302 = vadd.f32 %v1301, %v1273
    %v1303 = vadd.f32 %v1302, %v1275
    %v1304 = vrot.slane %v1303, 4
    %v1305 = vadd.f32 %v1303, %v1304
    %v1306 = vrot.slane %v1305, 2
    %v1307 = vadd.f32 %v1305, %v1306
    %v1308 = vrot.slane %v1307, 1
    %v1309 = vadd.f32 %v1307, %v1308
    %v1310 = vadd.f32 %v1278, %v1280
    %v1311 = vadd.f32 %v1310, %v1283
    %v1312 = vadd.f32 %v1311, %v1285
    %v1313 = vadd.f32 %v1312, %v1288
    %v1314 = vadd.f32 %v1313, %v1290
    %v1315 = vadd.f32 %v1314, %v1293
    %v1316 = vadd.f32 %v1315, %v1295
    %v1317 = vrot.slane %v1316, 4
    %v1318 = vadd.f32 %v1316, %v1317
    %v1319 = vrot.slane %v1318, 2
    %v1320 = vadd.f32 %v1318, %v1319
    %v1321 = vrot.slane %v1320, 1
    %v1322 = vadd.f32 %v1320, %v1321
    %v1323 = vmul.f32 %v1258, %v1258
    %v1324 = vmul.f32 %v1260, %v1260
    %v1325 = vmul.f32 %v1263, %v1263
    %v1326 = vmul.f32 %v1265, %v1265
    %v1327 = vmul.f32 %v1268, %v1268
    %v1328 = vmul.f32 %v1270, %v1270
    %v1329 = vmul.f32 %v1273, %v1273
    %v1330 = vmul.f32 %v1275, %v1275
    %v1331 = vmul.f32 %v1278, %v1278
    %v1332 = vmul.f32 %v1280, %v1280
    %v1333 = vmul.f32 %v1283, %v1283
    %v1334 = vmul.f32 %v1285, %v1285
    %v1335 = vmul.f32 %v1288, %v1288
    %v1336 = vmul.f32 %v1290, %v1290
    %v1337 = vmul.f32 %v1293, %v1293
    %v1338 = vmul.f32 %v1295, %v1295
    %v1339 = vadd.f32 %v1323, %v1324
    %v1340 = vadd.f32 %v1339, %v1325
    %v1341 = vadd.f32 %v1340, %v1326
    %v1342 = vadd.f32 %v1341, %v1327
    %v1343 = vadd.f32 %v1342, %v1328
    %v1344 = vadd.f32 %v1343, %v1329
    %v1345 = vadd.f32 %v1344, %v1330
    %v1346 = vrot.slane %v1345, 4
    %v1347 = vadd.f32 %v1345, %v1346
    %v1348 = vrot.slane %v1347, 2
    %v1349 = vadd.f32 %v1347, %v1348
    %v1350 = vrot.slane %v1349, 1
    %v1351 = vadd.f32 %v1349, %v1350
    %v1352 = vadd.f32 %v1331, %v1332
    %v1353 = vadd.f32 %v1352, %v1333
    %v1354 = vadd.f32 %v1353, %v1334
    %v1355 = vadd.f32 %v1354, %v1335
    %v1356 = vadd.f32 %v1355, %v1336
    %v1357 = vadd.f32 %v1356, %v1337
    %v1358 = vadd.f32 %v1357, %v1338
    %v1359 = vrot.slane %v1358, 4
    %v1360 = vadd.f32 %v1358, %v1359
    %v1361 = vrot.slane %v1360, 2
    %v1362 = vadd.f32 %v1360, %v1361
    %v1363 = vrot.slane %v1362, 1
    %v1364 = vadd.f32 %v1362, %v1363
    %v1365 = vmul.f32 %v1309, 0.015625
    %v1366 = vmul.f32 %v1322, 0.015625
    %v1367 = vmul.f32 %v1351, 0.015625
    %v1368 = vmul.f32 %v1364, 0.015625
    %v1369 = vmul.f32 %v1365, %v1365
    %v1370 = vmul.f32 %v1366, %v1366
    %v1371 = vsub.f32 %v1367, %v1369
    %v1372 = vsub.f32 %v1368, %v1370
    %v1373 = vmax.f32 %v1371, 0.0
    %v1374 = vmax.f32 %v1372, 0.0
    %v1375 = vadd.f32 %v1373, 1e-05
    %v1376 = vadd.f32 %v1374, 1e-05
    %v1377 = vrsqrt.pop %v1375
    %v1378 = vmul.f32 %v1377, %v1375
    %v1379 = vmul.f32 %v1378, %v1377
    %v1380 = vmul.f32 0.5, %v1379
    %v1381 = vsub.f32 1.5, %v1380
    %v1382 = vmul.f32 %v1377, %v1381
    %vm1383 = vweird.f32 %v1375
    %vm1384 = vweird.f32 %v1377
    %vm1385 = vmor %vm1383, %vm1384
    %v1386 = vsel %vm1385, %v1377, %v1382
    %v1387 = vrsqrt.pop %v1376
    %v1388 = vmul.f32 %v1387, %v1376
    %v1389 = vmul.f32 %v1388, %v1387
    %v1390 = vmul.f32 0.5, %v1389
    %v1391 = vsub.f32 1.5, %v1390
    %v1392 = vmul.f32 %v1387, %v1391
    %vm1393 = vweird.f32 %v1376
    %vm1394 = vweird.f32 %v1387
    %vm1395 = vmor %vm1393, %vm1394
    %v1396 = vsel %vm1395, %v1387, %v1392
    %v1397 = vsub.f32 0.0, %v1365
    %v1398 = vsub.f32 0.0, %v1366
    %v1399 = vmul.f32 %v1397, %v1386
    %v1400 = vmul.f32 %v1398, %v1396
    %v1401 = vmul.f32 %v1258, %v1386
    %v1402 = vmul.f32 %v1260, %v1386
    %v1403 = vmul.f32 %v1263, %v1386
    %v1404 = vmul.f32 %v1265, %v1386
    %v1405 = vmul.f32 %v1268, %v1386
    %v1406 = vmul.f32 %v1270, %v1386
    %v1407 = vmul.f32 %v1273, %v1386
    %v1408 = vmul.f32 %v1275, %v1386
    %v1409 = vmul.f32 %v1278, %v1396
    %v1410 = vmul.f32 %v1280, %v1396
    %v1411 = vmul.f32 %v1283, %v1396
    %v1412 = vmul.f32 %v1285, %v1396
    %v1413 = vmul.f32 %v1288, %v1396
    %v1414 = vmul.f32 %v1290, %v1396
    %v1415 = vmul.f32 %v1293, %v1396
    %v1416 = vmul.f32 %v1295, %v1396
    %v1417 = vadd.f32 %v1401, %v1399
    %v1418 = vadd.f32 %v1402, %v1399
    %v1419 = vadd.f32 %v1403, %v1399
    %v1420 = vadd.f32 %v1404, %v1399
    %v1421 = vadd.f32 %v1405, %v1399
    %v1422 = vadd.f32 %v1406, %v1399
    %v1423 = vadd.f32 %v1407, %v1399
    %v1424 = vadd.f32 %v1408, %v1399
    %v1425 = vadd.f32 %v1409, %v1400
    %v1426 = vadd.f32 %v1410, %v1400
    %v1427 = vadd.f32 %v1411, %v1400
    %v1428 = vadd.f32 %v1412, %v1400
    %v1429 = vadd.f32 %v1413, %v1400
    %v1430 = vadd.f32 %v1414, %v1400
    %v1431 = vadd.f32 %v1415, %v1400
    %v1432 = vadd.f32 %v1416, %v1400
    %v1433 = vmax.f32 %v1417, 0.0
    %v1434 = vmax.f32 %v1418, 0.0
    %v1435 = vmax.f32 %v1419, 0.0
    %v1436 = vmax.f32 %v1420, 0.0
    %v1437 = vmax.f32 %v1421, 0.0
    %v1438 = vmax.f32 %v1422, 0.0
    %v1439 = vmax.f32 %v1423, 0.0
    %v1440 = vmax.f32 %v1424, 0.0
    %v1441 = vmax.f32 %v1425, 0.0
    %v1442 = vmax.f32 %v1426, 0.0
    %v1443 = vmax.f32 %v1427, 0.0
    %v1444 = vmax.f32 %v1428, 0.0
    %v1445 = vmax.f32 %v1429, 0.0
    %v1446 = vmax.f32 %v1430, 0.0
    %v1447 = vmax.f32 %v1431, 0.0
    %v1448 = vmax.f32 %v1432, 0.0
    %v1449 = vpack.c.bf16 %v1433, %v1433
    %v1450 = vpack.c.bf16 %v1434, %v1434
    %v1451 = vpack.c.bf16 %v1435, %v1435
    %v1452 = vpack.c.bf16 %v1436, %v1436
    %v1453 = vpack.c.bf16 %v1437, %v1437
    %v1454 = vpack.c.bf16 %v1438, %v1438
    %v1455 = vpack.c.bf16 %v1439, %v1439
    %v1456 = vpack.c.bf16 %v1440, %v1440
    %v1457 = vpack.c.bf16 %v1441, %v1441
    %v1458 = vpack.c.bf16 %v1442, %v1442
    %v1459 = vpack.c.bf16 %v1443, %v1443
    %v1460 = vpack.c.bf16 %v1444, %v1444
    %v1461 = vpack.c.bf16 %v1445, %v1445
    %v1462 = vpack.c.bf16 %v1446, %v1446
    %v1463 = vpack.c.bf16 %v1447, %v1447
    %v1464 = vpack.c.bf16 %v1448, %v1448
    %v1465 = vld [vmem:[#allocation7] sm:$0xff]
    %v1466 = vld [vmem:[#allocation7 + $0x8] sm:$0xff]
    %v1467 = vld [vmem:[#allocation7 + $0x10] sm:$0xff]
    %v1468 = vld [vmem:[#allocation7 + $0x18] sm:$0xff]
    %v1469 = vld [vmem:[#allocation7 + $0x20] sm:$0xff]
    %v1470 = vld [vmem:[#allocation7 + $0x28] sm:$0xff]
    %v1471 = vld [vmem:[#allocation7 + $0x30] sm:$0xff]
    %v1472 = vld [vmem:[#allocation7 + $0x38] sm:$0xff]
    %v1473 = vld [vmem:[#allocation7 + $0x40] sm:$0xff]
    %v1474 = vld [vmem:[#allocation7 + $0x48] sm:$0xff]
    %v1475 = vld [vmem:[#allocation7 + $0x50] sm:$0xff]
    %v1476 = vld [vmem:[#allocation7 + $0x58] sm:$0xff]
    %v1477 = vld [vmem:[#allocation7 + $0x60] sm:$0xff]
    %v1478 = vld [vmem:[#allocation7 + $0x68] sm:$0xff]
    %v1479 = vld [vmem:[#allocation7 + $0x70] sm:$0xff]
    %v1480 = vld [vmem:[#allocation7 + $0x78] sm:$0xff]
    %v1497 = vunpack.c.l.b16 %v1449
    %v1498 = vunpack.c.l.b16 %v1450
    %v1499 = vunpack.c.l.b16 %v1451
    %v1500 = vunpack.c.l.b16 %v1452
    %v1501 = vunpack.c.l.b16 %v1453
    %v1502 = vunpack.c.l.b16 %v1454
    %v1503 = vunpack.c.l.b16 %v1455
    %v1504 = vunpack.c.l.b16 %v1456
    %v1505 = vunpack.c.l.b16 %v1457
    %v1506 = vunpack.c.l.b16 %v1458
    %v1507 = vunpack.c.l.b16 %v1459
    %v1508 = vunpack.c.l.b16 %v1460
    %v1509 = vunpack.c.l.b16 %v1461
    %v1510 = vunpack.c.l.b16 %v1462
    %v1511 = vunpack.c.l.b16 %v1463
    %v1512 = vunpack.c.l.b16 %v1464
    %v1513 = vpack.c.b16 %v1498, %v1497
    %v1514 = vpack.c.b16 %v1500, %v1499
    %v1515 = vpack.c.b16 %v1502, %v1501
    %v1516 = vpack.c.b16 %v1504, %v1503
    %v1517 = vpack.c.b16 %v1506, %v1505
    %v1518 = vpack.c.b16 %v1508, %v1507
    %v1519 = vpack.c.b16 %v1510, %v1509
    %v1520 = vpack.c.b16 %v1512, %v1511
    %v1545 = vunpack.c.l.b16 %v1465
    %v1546 = vunpack.c.h.b16 %v1465
    %v1547 = vunpack.c.l.b16 %v1466
    %v1548 = vunpack.c.h.b16 %v1466
    %v1549 = vunpack.c.l.b16 %v1467
    %v1550 = vunpack.c.h.b16 %v1467
    %v1551 = vunpack.c.l.b16 %v1468
    %v1552 = vunpack.c.h.b16 %v1468
    %v1553 = vunpack.c.l.b16 %v1469
    %v1554 = vunpack.c.h.b16 %v1469
    %v1555 = vunpack.c.l.b16 %v1470
    %v1556 = vunpack.c.h.b16 %v1470
    %v1557 = vunpack.c.l.b16 %v1471
    %v1558 = vunpack.c.h.b16 %v1471
    %v1559 = vunpack.c.l.b16 %v1472
    %v1560 = vunpack.c.h.b16 %v1472
    %v1561 = vunpack.c.l.b16 %v1473
    %v1562 = vunpack.c.h.b16 %v1473
    %v1563 = vunpack.c.l.b16 %v1474
    %v1564 = vunpack.c.h.b16 %v1474
    %v1565 = vunpack.c.l.b16 %v1475
    %v1566 = vunpack.c.h.b16 %v1475
    %v1567 = vunpack.c.l.b16 %v1476
    %v1568 = vunpack.c.h.b16 %v1476
    %v1569 = vunpack.c.l.b16 %v1477
    %v1570 = vunpack.c.h.b16 %v1477
    %v1571 = vunpack.c.l.b16 %v1478
    %v1572 = vunpack.c.h.b16 %v1478
    %v1573 = vunpack.c.l.b16 %v1479
    %v1574 = vunpack.c.h.b16 %v1479
    %v1575 = vunpack.c.l.b16 %v1480
    %v1576 = vunpack.c.h.b16 %v1480
    %v1577 = vpack.c.b16 %v1547, %v1545
    %v1578 = vpack.c.b16 %v1548, %v1546
    %v1579 = vpack.c.b16 %v1551, %v1549
    %v1580 = vpack.c.b16 %v1552, %v1550
    %v1581 = vpack.c.b16 %v1555, %v1553
    %v1582 = vpack.c.b16 %v1556, %v1554
    %v1583 = vpack.c.b16 %v1559, %v1557
    %v1584 = vpack.c.b16 %v1560, %v1558
    %v1585 = vpack.c.b16 %v1563, %v1561
    %v1586 = vpack.c.b16 %v1564, %v1562
    %v1587 = vpack.c.b16 %v1567, %v1565
    %v1588 = vpack.c.b16 %v1568, %v1566
    %v1589 = vpack.c.b16 %v1571, %v1569
    %v1590 = vpack.c.b16 %v1572, %v1570
    %v1591 = vpack.c.b16 %v1575, %v1573
    %v1592 = vpack.c.b16 %v1576, %v1574
    %1609 = vmatpush.bf16.msra.mxu0 %v1591
    %1610 = vmatpush.bf16.msra.mxu0 %v1589
    %1611 = vmatpush.bf16.msra.mxu0 %v1587
    %1612 = vmatpush.bf16.msra.mxu0 %v1585
    %1613 = vmatpush.bf16.msra.mxu0 %v1583
    %1614 = vmatpush.bf16.msra.mxu0 %v1581
    %1615 = vmatpush.bf16.msra.mxu0 %v1579
    %1616 = vmatpush.bf16.msra.mxu0 %v1577
    %1617 = vmatmul.bf16.gmra.mxu0 %v1513
    %v1618 = vpop.f32.mrf.mxu0
    %v1619 = vadd.f32 0.0, %v1618
    %v1620 = vpop.f32.mrf.mxu0
    %v1621 = vadd.f32 0.0, %v1620
    %1622 = vmatmul.bf16.gmra.mxu0 %v1514
    %v1623 = vpop.f32.mrf.mxu0
    %v1624 = vadd.f32 0.0, %v1623
    %v1625 = vpop.f32.mrf.mxu0
    %v1626 = vadd.f32 0.0, %v1625
    %1627 = vmatmul.bf16.gmra.mxu0 %v1515
    %v1628 = vpop.f32.mrf.mxu0
    %v1629 = vadd.f32 0.0, %v1628
    %v1630 = vpop.f32.mrf.mxu0
    %v1631 = vadd.f32 0.0, %v1630
    %1632 = vmatmul.bf16.gmra.mxu0 %v1516
    %v1633 = vpop.f32.mrf.mxu0
    %v1634 = vadd.f32 0.0, %v1633
    %v1635 = vpop.f32.mrf.mxu0
    %v1636 = vadd.f32 0.0, %v1635
    %1637 = vmatmul.bf16.gmra.mxu0 %v1517
    %v1638 = vpop.f32.mrf.mxu0
    %v1639 = vadd.f32 0.0, %v1638
    %v1640 = vpop.f32.mrf.mxu0
    %v1641 = vadd.f32 0.0, %v1640
    %1642 = vmatmul.bf16.gmra.mxu0 %v1518
    %v1643 = vpop.f32.mrf.mxu0
    %v1644 = vadd.f32 0.0, %v1643
    %v1645 = vpop.f32.mrf.mxu0
    %v1646 = vadd.f32 0.0, %v1645
    %1647 = vmatmul.bf16.gmra.mxu0 %v1519
    %v1648 = vpop.f32.mrf.mxu0
    %v1649 = vadd.f32 0.0, %v1648
    %v1650 = vpop.f32.mrf.mxu0
    %v1651 = vadd.f32 0.0, %v1650
    %1652 = vmatmul.bf16.gmra.mxu0 %v1520
    %v1653 = vpop.f32.mrf.mxu0
    %v1654 = vadd.f32 0.0, %v1653
    %v1655 = vpop.f32.mrf.mxu0
    %v1656 = vadd.f32 0.0, %v1655
    %1657 = vdwg.mxu0
    %1658 = vmatpush.bf16.msra.mxu0 %v1592
    %1659 = vmatpush.bf16.msra.mxu0 %v1590
    %1660 = vmatpush.bf16.msra.mxu0 %v1588
    %1661 = vmatpush.bf16.msra.mxu0 %v1586
    %1662 = vmatpush.bf16.msra.mxu0 %v1584
    %1663 = vmatpush.bf16.msra.mxu0 %v1582
    %1664 = vmatpush.bf16.msra.mxu0 %v1580
    %1665 = vmatpush.bf16.msra.mxu0 %v1578
    %1666 = vmatmul.bf16.gmra.mxu0 %v1513
    %v1667 = vpop.f32.mrf.mxu0
    %v1668 = vadd.f32 0.0, %v1667
    %v1669 = vpop.f32.mrf.mxu0
    %v1670 = vadd.f32 0.0, %v1669
    %1671 = vmatmul.bf16.gmra.mxu0 %v1514
    %v1672 = vpop.f32.mrf.mxu0
    %v1673 = vadd.f32 0.0, %v1672
    %v1674 = vpop.f32.mrf.mxu0
    %v1675 = vadd.f32 0.0, %v1674
    %1676 = vmatmul.bf16.gmra.mxu0 %v1515
    %v1677 = vpop.f32.mrf.mxu0
    %v1678 = vadd.f32 0.0, %v1677
    %v1679 = vpop.f32.mrf.mxu0
    %v1680 = vadd.f32 0.0, %v1679
    %1681 = vmatmul.bf16.gmra.mxu0 %v1516
    %v1682 = vpop.f32.mrf.mxu0
    %v1683 = vadd.f32 0.0, %v1682
    %v1684 = vpop.f32.mrf.mxu0
    %v1685 = vadd.f32 0.0, %v1684
    %1686 = vmatmul.bf16.gmra.mxu0 %v1517
    %v1687 = vpop.f32.mrf.mxu0
    %v1688 = vadd.f32 0.0, %v1687
    %v1689 = vpop.f32.mrf.mxu0
    %v1690 = vadd.f32 0.0, %v1689
    %1691 = vmatmul.bf16.gmra.mxu0 %v1518
    %v1692 = vpop.f32.mrf.mxu0
    %v1693 = vadd.f32 0.0, %v1692
    %v1694 = vpop.f32.mrf.mxu0
    %v1695 = vadd.f32 0.0, %v1694
    %1696 = vmatmul.bf16.gmra.mxu0 %v1519
    %v1697 = vpop.f32.mrf.mxu0
    %v1698 = vadd.f32 0.0, %v1697
    %v1699 = vpop.f32.mrf.mxu0
    %v1700 = vadd.f32 0.0, %v1699
    %1701 = vmatmul.bf16.gmra.mxu0 %v1520
    %v1702 = vpop.f32.mrf.mxu0
    %v1703 = vadd.f32 0.0, %v1702
    %v1704 = vpop.f32.mrf.mxu0
    %v1705 = vadd.f32 0.0, %v1704
    %1706 = vdwg.mxu0
    %v1707 = vadd.f32 %v1619, %v1621
    %v1708 = vadd.f32 %v1707, %v1624
    %v1709 = vadd.f32 %v1708, %v1626
    %v1710 = vadd.f32 %v1709, %v1629
    %v1711 = vadd.f32 %v1710, %v1631
    %v1712 = vadd.f32 %v1711, %v1634
    %v1713 = vadd.f32 %v1712, %v1636
    %v1714 = vrot.slane %v1713, 4
    %v1715 = vadd.f32 %v1713, %v1714
    %v1716 = vrot.slane %v1715, 2
    %v1717 = vadd.f32 %v1715, %v1716
    %v1718 = vrot.slane %v1717, 1
    %v1719 = vadd.f32 %v1717, %v1718
    %v1720 = vadd.f32 %v1668, %v1670
    %v1721 = vadd.f32 %v1720, %v1673
    %v1722 = vadd.f32 %v1721, %v1675
    %v1723 = vadd.f32 %v1722, %v1678
    %v1724 = vadd.f32 %v1723, %v1680
    %v1725 = vadd.f32 %v1724, %v1683
    %v1726 = vadd.f32 %v1725, %v1685
    %v1727 = vrot.slane %v1726, 4
    %v1728 = vadd.f32 %v1726, %v1727
    %v1729 = vrot.slane %v1728, 2
    %v1730 = vadd.f32 %v1728, %v1729
    %v1731 = vrot.slane %v1730, 1
    %v1732 = vadd.f32 %v1730, %v1731
    %v1733 = vadd.f32 %v1639, %v1641
    %v1734 = vadd.f32 %v1733, %v1644
    %v1735 = vadd.f32 %v1734, %v1646
    %v1736 = vadd.f32 %v1735, %v1649
    %v1737 = vadd.f32 %v1736, %v1651
    %v1738 = vadd.f32 %v1737, %v1654
    %v1739 = vadd.f32 %v1738, %v1656
    %v1740 = vrot.slane %v1739, 4
    %v1741 = vadd.f32 %v1739, %v1740
    %v1742 = vrot.slane %v1741, 2
    %v1743 = vadd.f32 %v1741, %v1742
    %v1744 = vrot.slane %v1743, 1
    %v1745 = vadd.f32 %v1743, %v1744
    %v1746 = vadd.f32 %v1688, %v1690
    %v1747 = vadd.f32 %v1746, %v1693
    %v1748 = vadd.f32 %v1747, %v1695
    %v1749 = vadd.f32 %v1748, %v1698
    %v1750 = vadd.f32 %v1749, %v1700
    %v1751 = vadd.f32 %v1750, %v1703
    %v1752 = vadd.f32 %v1751, %v1705
    %v1753 = vrot.slane %v1752, 4
    %v1754 = vadd.f32 %v1752, %v1753
    %v1755 = vrot.slane %v1754, 2
    %v1756 = vadd.f32 %v1754, %v1755
    %v1757 = vrot.slane %v1756, 1
    %v1758 = vadd.f32 %v1756, %v1757
    %v1759 = vmul.f32 %v1619, %v1619
    %v1760 = vmul.f32 %v1668, %v1668
    %v1761 = vmul.f32 %v1621, %v1621
    %v1762 = vmul.f32 %v1670, %v1670
    %v1763 = vmul.f32 %v1624, %v1624
    %v1764 = vmul.f32 %v1673, %v1673
    %v1765 = vmul.f32 %v1626, %v1626
    %v1766 = vmul.f32 %v1675, %v1675
    %v1767 = vmul.f32 %v1629, %v1629
    %v1768 = vmul.f32 %v1678, %v1678
    %v1769 = vmul.f32 %v1631, %v1631
    %v1770 = vmul.f32 %v1680, %v1680
    %v1771 = vmul.f32 %v1634, %v1634
    %v1772 = vmul.f32 %v1683, %v1683
    %v1773 = vmul.f32 %v1636, %v1636
    %v1774 = vmul.f32 %v1685, %v1685
    %v1775 = vmul.f32 %v1639, %v1639
    %v1776 = vmul.f32 %v1688, %v1688
    %v1777 = vmul.f32 %v1641, %v1641
    %v1778 = vmul.f32 %v1690, %v1690
    %v1779 = vmul.f32 %v1644, %v1644
    %v1780 = vmul.f32 %v1693, %v1693
    %v1781 = vmul.f32 %v1646, %v1646
    %v1782 = vmul.f32 %v1695, %v1695
    %v1783 = vmul.f32 %v1649, %v1649
    %v1784 = vmul.f32 %v1698, %v1698
    %v1785 = vmul.f32 %v1651, %v1651
    %v1786 = vmul.f32 %v1700, %v1700
    %v1787 = vmul.f32 %v1654, %v1654
    %v1788 = vmul.f32 %v1703, %v1703
    %v1789 = vmul.f32 %v1656, %v1656
    %v1790 = vmul.f32 %v1705, %v1705
    %v1791 = vadd.f32 %v1759, %v1761
    %v1792 = vadd.f32 %v1791, %v1763
    %v1793 = vadd.f32 %v1792, %v1765
    %v1794 = vadd.f32 %v1793, %v1767
    %v1795 = vadd.f32 %v1794, %v1769
    %v1796 = vadd.f32 %v1795, %v1771
    %v1797 = vadd.f32 %v1796, %v1773
    %v1798 = vrot.slane %v1797, 4
    %v1799 = vadd.f32 %v1797, %v1798
    %v1800 = vrot.slane %v1799, 2
    %v1801 = vadd.f32 %v1799, %v1800
    %v1802 = vrot.slane %v1801, 1
    %v1803 = vadd.f32 %v1801, %v1802
    %v1804 = vadd.f32 %v1760, %v1762
    %v1805 = vadd.f32 %v1804, %v1764
    %v1806 = vadd.f32 %v1805, %v1766
    %v1807 = vadd.f32 %v1806, %v1768
    %v1808 = vadd.f32 %v1807, %v1770
    %v1809 = vadd.f32 %v1808, %v1772
    %v1810 = vadd.f32 %v1809, %v1774
    %v1811 = vrot.slane %v1810, 4
    %v1812 = vadd.f32 %v1810, %v1811
    %v1813 = vrot.slane %v1812, 2
    %v1814 = vadd.f32 %v1812, %v1813
    %v1815 = vrot.slane %v1814, 1
    %v1816 = vadd.f32 %v1814, %v1815
    %v1817 = vadd.f32 %v1775, %v1777
    %v1818 = vadd.f32 %v1817, %v1779
    %v1819 = vadd.f32 %v1818, %v1781
    %v1820 = vadd.f32 %v1819, %v1783
    %v1821 = vadd.f32 %v1820, %v1785
    %v1822 = vadd.f32 %v1821, %v1787
    %v1823 = vadd.f32 %v1822, %v1789
    %v1824 = vrot.slane %v1823, 4
    %v1825 = vadd.f32 %v1823, %v1824
    %v1826 = vrot.slane %v1825, 2
    %v1827 = vadd.f32 %v1825, %v1826
    %v1828 = vrot.slane %v1827, 1
    %v1829 = vadd.f32 %v1827, %v1828
    %v1830 = vadd.f32 %v1776, %v1778
    %v1831 = vadd.f32 %v1830, %v1780
    %v1832 = vadd.f32 %v1831, %v1782
    %v1833 = vadd.f32 %v1832, %v1784
    %v1834 = vadd.f32 %v1833, %v1786
    %v1835 = vadd.f32 %v1834, %v1788
    %v1836 = vadd.f32 %v1835, %v1790
    %v1837 = vrot.slane %v1836, 4
    %v1838 = vadd.f32 %v1836, %v1837
    %v1839 = vrot.slane %v1838, 2
    %v1840 = vadd.f32 %v1838, %v1839
    %v1841 = vrot.slane %v1840, 1
    %v1842 = vadd.f32 %v1840, %v1841
    %v1843 = vmul.f32 %v1719, 0.015625
    %v1844 = vmul.f32 %v1732, 0.015625
    %v1845 = vmul.f32 %v1745, 0.015625
    %v1846 = vmul.f32 %v1758, 0.015625
    %v1847 = vmul.f32 %v1803, 0.015625
    %v1848 = vmul.f32 %v1816, 0.015625
    %v1849 = vmul.f32 %v1829, 0.015625
    %v1850 = vmul.f32 %v1842, 0.015625
    %v1851 = vmul.f32 %v1843, %v1843
    %v1852 = vmul.f32 %v1844, %v1844
    %v1853 = vmul.f32 %v1845, %v1845
    %v1854 = vmul.f32 %v1846, %v1846
    %v1855 = vsub.f32 %v1847, %v1851
    %v1856 = vsub.f32 %v1848, %v1852
    %v1857 = vsub.f32 %v1849, %v1853
    %v1858 = vsub.f32 %v1850, %v1854
    %v1859 = vmax.f32 %v1855, 0.0
    %v1860 = vmax.f32 %v1856, 0.0
    %v1861 = vmax.f32 %v1857, 0.0
    %v1862 = vmax.f32 %v1858, 0.0
    %v1863 = vadd.f32 %v1859, 1e-05
    %v1864 = vadd.f32 %v1860, 1e-05
    %v1865 = vadd.f32 %v1861, 1e-05
    %v1866 = vadd.f32 %v1862, 1e-05
    %v1867 = vrsqrt.pop %v1863
    %v1868 = vmul.f32 %v1867, %v1863
    %v1869 = vmul.f32 %v1868, %v1867
    %v1870 = vmul.f32 0.5, %v1869
    %v1871 = vsub.f32 1.5, %v1870
    %v1872 = vmul.f32 %v1867, %v1871
    %vm1873 = vweird.f32 %v1863
    %vm1874 = vweird.f32 %v1867
    %vm1875 = vmor %vm1873, %vm1874
    %v1876 = vsel %vm1875, %v1867, %v1872
    %v1877 = vrsqrt.pop %v1864
    %v1878 = vmul.f32 %v1877, %v1864
    %v1879 = vmul.f32 %v1878, %v1877
    %v1880 = vmul.f32 0.5, %v1879
    %v1881 = vsub.f32 1.5, %v1880
    %v1882 = vmul.f32 %v1877, %v1881
    %vm1883 = vweird.f32 %v1864
    %vm1884 = vweird.f32 %v1877
    %vm1885 = vmor %vm1883, %vm1884
    %v1886 = vsel %vm1885, %v1877, %v1882
    %v1887 = vrsqrt.pop %v1865
    %v1888 = vmul.f32 %v1887, %v1865
    %v1889 = vmul.f32 %v1888, %v1887
    %v1890 = vmul.f32 0.5, %v1889
    %v1891 = vsub.f32 1.5, %v1890
    %v1892 = vmul.f32 %v1887, %v1891
    %vm1893 = vweird.f32 %v1865
    %vm1894 = vweird.f32 %v1887
    %vm1895 = vmor %vm1893, %vm1894
    %v1896 = vsel %vm1895, %v1887, %v1892
    %v1897 = vrsqrt.pop %v1866
    %v1898 = vmul.f32 %v1897, %v1866
    %v1899 = vmul.f32 %v1898, %v1897
    %v1900 = vmul.f32 0.5, %v1899
    %v1901 = vsub.f32 1.5, %v1900
    %v1902 = vmul.f32 %v1897, %v1901
    %vm1903 = vweird.f32 %v1866
    %vm1904 = vweird.f32 %v1897
    %vm1905 = vmor %vm1903, %vm1904
    %v1906 = vsel %vm1905, %v1897, %v1902
    %v1907 = vsub.f32 0.0, %v1843
    %v1908 = vsub.f32 0.0, %v1844
    %v1909 = vsub.f32 0.0, %v1845
    %v1910 = vsub.f32 0.0, %v1846
    %v1911 = vmul.f32 %v1907, %v1876
    %v1912 = vmul.f32 %v1908, %v1886
    %v1913 = vmul.f32 %v1909, %v1896
    %v1914 = vmul.f32 %v1910, %v1906
    %v1915 = vmul.f32 %v1619, %v1876
    %v1916 = vmul.f32 %v1668, %v1886
    %v1917 = vmul.f32 %v1621, %v1876
    %v1918 = vmul.f32 %v1670, %v1886
    %v1919 = vmul.f32 %v1624, %v1876
    %v1920 = vmul.f32 %v1673, %v1886
    %v1921 = vmul.f32 %v1626, %v1876
    %v1922 = vmul.f32 %v1675, %v1886
    %v1923 = vmul.f32 %v1629, %v1876
    %v1924 = vmul.f32 %v1678, %v1886
    %v1925 = vmul.f32 %v1631, %v1876
    %v1926 = vmul.f32 %v1680, %v1886
    %v1927 = vmul.f32 %v1634, %v1876
    %v1928 = vmul.f32 %v1683, %v1886
    %v1929 = vmul.f32 %v1636, %v1876
    %v1930 = vmul.f32 %v1685, %v1886
    %v1931 = vmul.f32 %v1639, %v1896
    %v1932 = vmul.f32 %v1688, %v1906
    %v1933 = vmul.f32 %v1641, %v1896
    %v1934 = vmul.f32 %v1690, %v1906
    %v1935 = vmul.f32 %v1644, %v1896
    %v1936 = vmul.f32 %v1693, %v1906
    %v1937 = vmul.f32 %v1646, %v1896
    %v1938 = vmul.f32 %v1695, %v1906
    %v1939 = vmul.f32 %v1649, %v1896
    %v1940 = vmul.f32 %v1698, %v1906
    %v1941 = vmul.f32 %v1651, %v1896
    %v1942 = vmul.f32 %v1700, %v1906
    %v1943 = vmul.f32 %v1654, %v1896
    %v1944 = vmul.f32 %v1703, %v1906
    %v1945 = vmul.f32 %v1656, %v1896
    %v1946 = vmul.f32 %v1705, %v1906
    %v1947 = vadd.f32 %v1915, %v1911
    %v1948 = vadd.f32 %v1916, %v1912
    %v1949 = vadd.f32 %v1917, %v1911
    %v1950 = vadd.f32 %v1918, %v1912
    %v1951 = vadd.f32 %v1919, %v1911
    %v1952 = vadd.f32 %v1920, %v1912
    %v1953 = vadd.f32 %v1921, %v1911
    %v1954 = vadd.f32 %v1922, %v1912
    %v1955 = vadd.f32 %v1923, %v1911
    %v1956 = vadd.f32 %v1924, %v1912
    %v1957 = vadd.f32 %v1925, %v1911
    %v1958 = vadd.f32 %v1926, %v1912
    %v1959 = vadd.f32 %v1927, %v1911
    %v1960 = vadd.f32 %v1928, %v1912
    %v1961 = vadd.f32 %v1929, %v1911
    %v1962 = vadd.f32 %v1930, %v1912
    %v1963 = vadd.f32 %v1931, %v1913
    %v1964 = vadd.f32 %v1932, %v1914
    %v1965 = vadd.f32 %v1933, %v1913
    %v1966 = vadd.f32 %v1934, %v1914
    %v1967 = vadd.f32 %v1935, %v1913
    %v1968 = vadd.f32 %v1936, %v1914
    %v1969 = vadd.f32 %v1937, %v1913
    %v1970 = vadd.f32 %v1938, %v1914
    %v1971 = vadd.f32 %v1939, %v1913
    %v1972 = vadd.f32 %v1940, %v1914
    %v1973 = vadd.f32 %v1941, %v1913
    %v1974 = vadd.f32 %v1942, %v1914
    %v1975 = vadd.f32 %v1943, %v1913
    %v1976 = vadd.f32 %v1944, %v1914
    %v1977 = vadd.f32 %v1945, %v1913
    %v1978 = vadd.f32 %v1946, %v1914
    %v1979 = vmax.f32 %v1947, 0.0
    %v1980 = vmax.f32 %v1948, 0.0
    %v1981 = vmax.f32 %v1949, 0.0
    %v1982 = vmax.f32 %v1950, 0.0
    %v1983 = vmax.f32 %v1951, 0.0
    %v1984 = vmax.f32 %v1952, 0.0
    %v1985 = vmax.f32 %v1953, 0.0
    %v1986 = vmax.f32 %v1954, 0.0
    %v1987 = vmax.f32 %v1955, 0.0
    %v1988 = vmax.f32 %v1956, 0.0
    %v1989 = vmax.f32 %v1957, 0.0
    %v1990 = vmax.f32 %v1958, 0.0
    %v1991 = vmax.f32 %v1959, 0.0
    %v1992 = vmax.f32 %v1960, 0.0
    %v1993 = vmax.f32 %v1961, 0.0
    %v1994 = vmax.f32 %v1962, 0.0
    %v1995 = vmax.f32 %v1963, 0.0
    %v1996 = vmax.f32 %v1964, 0.0
    %v1997 = vmax.f32 %v1965, 0.0
    %v1998 = vmax.f32 %v1966, 0.0
    %v1999 = vmax.f32 %v1967, 0.0
    %v2000 = vmax.f32 %v1968, 0.0
    %v2001 = vmax.f32 %v1969, 0.0
    %v2002 = vmax.f32 %v1970, 0.0
    %v2003 = vmax.f32 %v1971, 0.0
    %v2004 = vmax.f32 %v1972, 0.0
    %v2005 = vmax.f32 %v1973, 0.0
    %v2006 = vmax.f32 %v1974, 0.0
    %v2007 = vmax.f32 %v1975, 0.0
    %v2008 = vmax.f32 %v1976, 0.0
    %v2009 = vmax.f32 %v1977, 0.0
    %v2010 = vmax.f32 %v1978, 0.0
    %v2011 = vpack.c.bf16 %v1980, %v1979
    %v2012 = vpack.c.bf16 %v1982, %v1981
    %v2013 = vpack.c.bf16 %v1984, %v1983
    %v2014 = vpack.c.bf16 %v1986, %v1985
    %v2015 = vpack.c.bf16 %v1988, %v1987
    %v2016 = vpack.c.bf16 %v1990, %v1989
    %v2017 = vpack.c.bf16 %v1992, %v1991
    %v2018 = vpack.c.bf16 %v1994, %v1993
    %v2019 = vpack.c.bf16 %v1996, %v1995
    %v2020 = vpack.c.bf16 %v1998, %v1997
    %v2021 = vpack.c.bf16 %v2000, %v1999
    %v2022 = vpack.c.bf16 %v2002, %v2001
    %v2023 = vpack.c.bf16 %v2004, %v2003
    %v2024 = vpack.c.bf16 %v2006, %v2005
    %v2025 = vpack.c.bf16 %v2008, %v2007
    %v2026 = vpack.c.bf16 %v2010, %v2009
    %v2027 = vld [vmem:[#allocation9] sm:$0xff]
    %v2028 = vld [vmem:[#allocation9 + $0x8] sm:$0xff]
    %v2029 = vld [vmem:[#allocation9 + $0x10] sm:$0xff]
    %v2030 = vld [vmem:[#allocation9 + $0x18] sm:$0xff]
    %v2031 = vld [vmem:[#allocation9 + $0x20] sm:$0xff]
    %v2032 = vld [vmem:[#allocation9 + $0x28] sm:$0xff]
    %v2033 = vld [vmem:[#allocation9 + $0x30] sm:$0xff]
    %v2034 = vld [vmem:[#allocation9 + $0x38] sm:$0xff]
    %v2035 = vld [vmem:[#allocation9 + $0x40] sm:$0xff]
    %v2036 = vld [vmem:[#allocation9 + $0x48] sm:$0xff]
    %v2037 = vld [vmem:[#allocation9 + $0x50] sm:$0xff]
    %v2038 = vld [vmem:[#allocation9 + $0x58] sm:$0xff]
    %v2039 = vld [vmem:[#allocation9 + $0x60] sm:$0xff]
    %v2040 = vld [vmem:[#allocation9 + $0x68] sm:$0xff]
    %v2041 = vld [vmem:[#allocation9 + $0x70] sm:$0xff]
    %v2042 = vld [vmem:[#allocation9 + $0x78] sm:$0xff]
    %v2043 = vld [vmem:[#allocation9 + $0x80] sm:$0xff]
    %v2044 = vld [vmem:[#allocation9 + $0x88] sm:$0xff]
    %v2045 = vld [vmem:[#allocation9 + $0x90] sm:$0xff]
    %v2046 = vld [vmem:[#allocation9 + $0x98] sm:$0xff]
    %v2047 = vld [vmem:[#allocation9 + $0xa0] sm:$0xff]
    %v2048 = vld [vmem:[#allocation9 + $0xa8] sm:$0xff]
    %v2049 = vld [vmem:[#allocation9 + $0xb0] sm:$0xff]
    %v2050 = vld [vmem:[#allocation9 + $0xb8] sm:$0xff]
    %v2051 = vld [vmem:[#allocation9 + $0xc0] sm:$0xff]
    %v2052 = vld [vmem:[#allocation9 + $0xc8] sm:$0xff]
    %v2053 = vld [vmem:[#allocation9 + $0xd0] sm:$0xff]
    %v2054 = vld [vmem:[#allocation9 + $0xd8] sm:$0xff]
    %v2055 = vld [vmem:[#allocation9 + $0xe0] sm:$0xff]
    %v2056 = vld [vmem:[#allocation9 + $0xe8] sm:$0xff]
    %v2057 = vld [vmem:[#allocation9 + $0xf0] sm:$0xff]
    %v2058 = vld [vmem:[#allocation9 + $0xf8] sm:$0xff]
    %v2059 = vld [vmem:[#allocation9 + $0x100] sm:$0xff]
    %v2060 = vld [vmem:[#allocation9 + $0x108] sm:$0xff]
    %v2061 = vld [vmem:[#allocation9 + $0x110] sm:$0xff]
    %v2062 = vld [vmem:[#allocation9 + $0x118] sm:$0xff]
    %v2063 = vld [vmem:[#allocation9 + $0x120] sm:$0xff]
    %v2064 = vld [vmem:[#allocation9 + $0x128] sm:$0xff]
    %v2065 = vld [vmem:[#allocation9 + $0x130] sm:$0xff]
    %v2066 = vld [vmem:[#allocation9 + $0x138] sm:$0xff]
    %v2067 = vld [vmem:[#allocation9 + $0x140] sm:$0xff]
    %v2068 = vld [vmem:[#allocation9 + $0x148] sm:$0xff]
    %v2069 = vld [vmem:[#allocation9 + $0x150] sm:$0xff]
    %v2070 = vld [vmem:[#allocation9 + $0x158] sm:$0xff]
    %v2071 = vld [vmem:[#allocation9 + $0x160] sm:$0xff]
    %v2072 = vld [vmem:[#allocation9 + $0x168] sm:$0xff]
    %v2073 = vld [vmem:[#allocation9 + $0x170] sm:$0xff]
    %v2074 = vld [vmem:[#allocation9 + $0x178] sm:$0xff]
    %v2075 = vld [vmem:[#allocation9 + $0x180] sm:$0xff]
    %v2076 = vld [vmem:[#allocation9 + $0x188] sm:$0xff]
    %v2077 = vld [vmem:[#allocation9 + $0x190] sm:$0xff]
    %v2078 = vld [vmem:[#allocation9 + $0x198] sm:$0xff]
    %v2079 = vld [vmem:[#allocation9 + $0x1a0] sm:$0xff]
    %v2080 = vld [vmem:[#allocation9 + $0x1a8] sm:$0xff]
    %v2081 = vld [vmem:[#allocation9 + $0x1b0] sm:$0xff]
    %v2082 = vld [vmem:[#allocation9 + $0x1b8] sm:$0xff]
    %v2083 = vld [vmem:[#allocation9 + $0x1c0] sm:$0xff]
    %v2084 = vld [vmem:[#allocation9 + $0x1c8] sm:$0xff]
    %v2085 = vld [vmem:[#allocation9 + $0x1d0] sm:$0xff]
    %v2086 = vld [vmem:[#allocation9 + $0x1d8] sm:$0xff]
    %v2087 = vld [vmem:[#allocation9 + $0x1e0] sm:$0xff]
    %v2088 = vld [vmem:[#allocation9 + $0x1e8] sm:$0xff]
    %v2089 = vld [vmem:[#allocation9 + $0x1f0] sm:$0xff]
    %v2090 = vld [vmem:[#allocation9 + $0x1f8] sm:$0xff]
    %v2107 = vunpack.c.l.b16 %v2011
    %v2108 = vunpack.c.h.b16 %v2011
    %v2109 = vunpack.c.l.b16 %v2012
    %v2110 = vunpack.c.h.b16 %v2012
    %v2111 = vunpack.c.l.b16 %v2013
    %v2112 = vunpack.c.h.b16 %v2013
    %v2113 = vunpack.c.l.b16 %v2014
    %v2114 = vunpack.c.h.b16 %v2014
    %v2115 = vunpack.c.l.b16 %v2015
    %v2116 = vunpack.c.h.b16 %v2015
    %v2117 = vunpack.c.l.b16 %v2016
    %v2118 = vunpack.c.h.b16 %v2016
    %v2119 = vunpack.c.l.b16 %v2017
    %v2120 = vunpack.c.h.b16 %v2017
    %v2121 = vunpack.c.l.b16 %v2018
    %v2122 = vunpack.c.h.b16 %v2018
    %v2123 = vunpack.c.l.b16 %v2019
    %v2124 = vunpack.c.h.b16 %v2019
    %v2125 = vunpack.c.l.b16 %v2020
    %v2126 = vunpack.c.h.b16 %v2020
    %v2127 = vunpack.c.l.b16 %v2021
    %v2128 = vunpack.c.h.b16 %v2021
    %v2129 = vunpack.c.l.b16 %v2022
    %v2130 = vunpack.c.h.b16 %v2022
    %v2131 = vunpack.c.l.b16 %v2023
    %v2132 = vunpack.c.h.b16 %v2023
    %v2133 = vunpack.c.l.b16 %v2024
    %v2134 = vunpack.c.h.b16 %v2024
    %v2135 = vunpack.c.l.b16 %v2025
    %v2136 = vunpack.c.h.b16 %v2025
    %v2137 = vunpack.c.l.b16 %v2026
    %v2138 = vunpack.c.h.b16 %v2026
    %v2139 = vpack.c.b16 %v2109, %v2107
    %v2140 = vpack.c.b16 %v2110, %v2108
    %v2141 = vpack.c.b16 %v2113, %v2111
    %v2142 = vpack.c.b16 %v2114, %v2112
    %v2143 = vpack.c.b16 %v2117, %v2115
    %v2144 = vpack.c.b16 %v2118, %v2116
    %v2145 = vpack.c.b16 %v2121, %v2119
    %v2146 = vpack.c.b16 %v2122, %v2120
    %v2147 = vpack.c.b16 %v2125, %v2123
    %v2148 = vpack.c.b16 %v2126, %v2124
    %v2149 = vpack.c.b16 %v2129, %v2127
    %v2150 = vpack.c.b16 %v2130, %v2128
    %v2151 = vpack.c.b16 %v2133, %v2131
    %v2152 = vpack.c.b16 %v2134, %v2132
    %v2153 = vpack.c.b16 %v2137, %v2135
    %v2154 = vpack.c.b16 %v2138, %v2136
    %v2235 = vunpack.c.l.b16 %v2027
    %v2236 = vunpack.c.h.b16 %v2027
    %v2237 = vunpack.c.l.b16 %v2028
    %v2238 = vunpack.c.h.b16 %v2028
    %v2239 = vunpack.c.l.b16 %v2029
    %v2240 = vunpack.c.h.b16 %v2029
    %v2241 = vunpack.c.l.b16 %v2030
    %v2242 = vunpack.c.h.b16 %v2030
    %v2243 = vunpack.c.l.b16 %v2031
    %v2244 = vunpack.c.h.b16 %v2031
    %v2245 = vunpack.c.l.b16 %v2032
    %v2246 = vunpack.c.h.b16 %v2032
    %v2247 = vunpack.c.l.b16 %v2033
    %v2248 = vunpack.c.h.b16 %v2033
    %v2249 = vunpack.c.l.b16 %v2034
    %v2250 = vunpack.c.h.b16 %v2034
    %v2251 = vunpack.c.l.b16 %v2035
    %v2252 = vunpack.c.h.b16 %v2035
    %v2253 = vunpack.c.l.b16 %v2036
    %v2254 = vunpack.c.h.b16 %v2036
    %v2255 = vunpack.c.l.b16 %v2037
    %v2256 = vunpack.c.h.b16 %v2037
    %v2257 = vunpack.c.l.b16 %v2038
    %v2258 = vunpack.c.h.b16 %v2038
    %v2259 = vunpack.c.l.b16 %v2039
    %v2260 = vunpack.c.h.b16 %v2039
    %v2261 = vunpack.c.l.b16 %v2040
    %v2262 = vunpack.c.h.b16 %v2040
    %v2263 = vunpack.c.l.b16 %v2041
    %v2264 = vunpack.c.h.b16 %v2041
    %v2265 = vunpack.c.l.b16 %v2042
    %v2266 = vunpack.c.h.b16 %v2042
    %v2267 = vunpack.c.l.b16 %v2043
    %v2268 = vunpack.c.h.b16 %v2043
    %v2269 = vunpack.c.l.b16 %v2044
    %v2270 = vunpack.c.h.b16 %v2044
    %v2271 = vunpack.c.l.b16 %v2045
    %v2272 = vunpack.c.h.b16 %v2045
    %v2273 = vunpack.c.l.b16 %v2046
    %v2274 = vunpack.c.h.b16 %v2046
    %v2275 = vunpack.c.l.b16 %v2047
    %v2276 = vunpack.c.h.b16 %v2047
    %v2277 = vunpack.c.l.b16 %v2048
    %v2278 = vunpack.c.h.b16 %v2048
    %v2279 = vunpack.c.l.b16 %v2049
    %v2280 = vunpack.c.h.b16 %v2049
    %v2281 = vunpack.c.l.b16 %v2050
    %v2282 = vunpack.c.h.b16 %v2050
    %v2283 = vunpack.c.l.b16 %v2051
    %v2284 = vunpack.c.h.b16 %v2051
    %v2285 = vunpack.c.l.b16 %v2052
    %v2286 = vunpack.c.h.b16 %v2052
    %v2287 = vunpack.c.l.b16 %v2053
    %v2288 = vunpack.c.h.b16 %v2053
    %v2289 = vunpack.c.l.b16 %v2054
    %v2290 = vunpack.c.h.b16 %v2054
    %v2291 = vunpack.c.l.b16 %v2055
    %v2292 = vunpack.c.h.b16 %v2055
    %v2293 = vunpack.c.l.b16 %v2056
    %v2294 = vunpack.c.h.b16 %v2056
    %v2295 = vunpack.c.l.b16 %v2057
    %v2296 = vunpack.c.h.b16 %v2057
    %v2297 = vunpack.c.l.b16 %v2058
    %v2298 = vunpack.c.h.b16 %v2058
    %v2299 = vunpack.c.l.b16 %v2059
    %v2300 = vunpack.c.h.b16 %v2059
    %v2301 = vunpack.c.l.b16 %v2060
    %v2302 = vunpack.c.h.b16 %v2060
    %v2303 = vunpack.c.l.b16 %v2061
    %v2304 = vunpack.c.h.b16 %v2061
    %v2305 = vunpack.c.l.b16 %v2062
    %v2306 = vunpack.c.h.b16 %v2062
    %v2307 = vunpack.c.l.b16 %v2063
    %v2308 = vunpack.c.h.b16 %v2063
    %v2309 = vunpack.c.l.b16 %v2064
    %v2310 = vunpack.c.h.b16 %v2064
    %v2311 = vunpack.c.l.b16 %v2065
    %v2312 = vunpack.c.h.b16 %v2065
    %v2313 = vunpack.c.l.b16 %v2066
    %v2314 = vunpack.c.h.b16 %v2066
    %v2315 = vunpack.c.l.b16 %v2067
    %v2316 = vunpack.c.h.b16 %v2067
    %v2317 = vunpack.c.l.b16 %v2068
    %v2318 = vunpack.c.h.b16 %v2068
    %v2319 = vunpack.c.l.b16 %v2069
    %v2320 = vunpack.c.h.b16 %v2069
    %v2321 = vunpack.c.l.b16 %v2070
    %v2322 = vunpack.c.h.b16 %v2070
    %v2323 = vunpack.c.l.b16 %v2071
    %v2324 = vunpack.c.h.b16 %v2071
    %v2325 = vunpack.c.l.b16 %v2072
    %v2326 = vunpack.c.h.b16 %v2072
    %v2327 = vunpack.c.l.b16 %v2073
    %v2328 = vunpack.c.h.b16 %v2073
    %v2329 = vunpack.c.l.b16 %v2074
    %v2330 = vunpack.c.h.b16 %v2074
    %v2331 = vunpack.c.l.b16 %v2075
    %v2332 = vunpack.c.h.b16 %v2075
    %v2333 = vunpack.c.l.b16 %v2076
    %v2334 = vunpack.c.h.b16 %v2076
    %v2335 = vunpack.c.l.b16 %v2077
    %v2336 = vunpack.c.h.b16 %v2077
    %v2337 = vunpack.c.l.b16 %v2078
    %v2338 = vunpack.c.h.b16 %v2078
    %v2339 = vunpack.c.l.b16 %v2079
    %v2340 = vunpack.c.h.b16 %v2079
    %v2341 = vunpack.c.l.b16 %v2080
    %v2342 = vunpack.c.h.b16 %v2080
    %v2343 = vunpack.c.l.b16 %v2081
    %v2344 = vunpack.c.h.b16 %v2081
    %v2345 = vunpack.c.l.b16 %v2082
    %v2346 = vunpack.c.h.b16 %v2082
    %v2347 = vunpack.c.l.b16 %v2083
    %v2348 = vunpack.c.h.b16 %v2083
    %v2349 = vunpack.c.l.b16 %v2084
    %v2350 = vunpack.c.h.b16 %v2084
    %v2351 = vunpack.c.l.b16 %v2085
    %v2352 = vunpack.c.h.b16 %v2085
    %v2353 = vunpack.c.l.b16 %v2086
    %v2354 = vunpack.c.h.b16 %v2086
    %v2355 = vunpack.c.l.b16 %v2087
    %v2356 = vunpack.c.h.b16 %v2087
    %v2357 = vunpack.c.l.b16 %v2088
    %v2358 = vunpack.c.h.b16 %v2088
    %v2359 = vunpack.c.l.b16 %v2089
    %v2360 = vunpack.c.h.b16 %v2089
    %v2361 = vunpack.c.l.b16 %v2090
    %v2362 = vunpack.c.h.b16 %v2090
    %v2363 = vpack.c.b16 %v2239, %v2235
    %v2364 = vpack.c.b16 %v2240, %v2236
    %v2365 = vpack.c.b16 %v2241, %v2237
    %v2366 = vpack.c.b16 %v2242, %v2238
    %v2367 = vpack.c.b16 %v2247, %v2243
    %v2368 = vpack.c.b16 %v2248, %v2244
    %v2369 = vpack.c.b16 %v2249, %v2245
    %v2370 = vpack.c.b16 %v2250, %v2246
    %v2371 = vpack.c.b16 %v2255, %v2251
    %v2372 = vpack.c.b16 %v2256, %v2252
    %v2373 = vpack.c.b16 %v2257, %v2253
    %v2374 = vpack.c.b16 %v2258, %v2254
    %v2375 = vpack.c.b16 %v2263, %v2259
    %v2376 = vpack.c.b16 %v2264, %v2260
    %v2377 = vpack.c.b16 %v2265, %v2261
    %v2378 = vpack.c.b16 %v2266, %v2262
    %v2379 = vpack.c.b16 %v2271, %v2267
    %v2380 = vpack.c.b16 %v2272, %v2268
    %v2381 = vpack.c.b16 %v2273, %v2269
    %v2382 = vpack.c.b16 %v2274, %v2270
    %v2383 = vpack.c.b16 %v2279, %v2275
    %v2384 = vpack.c.b16 %v2280, %v2276
    %v2385 = vpack.c.b16 %v2281, %v2277
    %v2386 = vpack.c.b16 %v2282, %v2278
    %v2387 = vpack.c.b16 %v2287, %v2283
    %v2388 = vpack.c.b16 %v2288, %v2284
    %v2389 = vpack.c.b16 %v2289, %v2285
    %v2390 = vpack.c.b16 %v2290, %v2286
    %v2391 = vpack.c.b16 %v2295, %v2291
    %v2392 = vpack.c.b16 %v2296, %v2292
    %v2393 = vpack.c.b16 %v2297, %v2293
    %v2394 = vpack.c.b16 %v2298, %v2294
    %v2395 = vpack.c.b16 %v2303, %v2299
    %v2396 = vpack.c.b16 %v2304, %v2300
    %v2397 = vpack.c.b16 %v2305, %v2301
    %v2398 = vpack.c.b16 %v2306, %v2302
    %v2399 = vpack.c.b16 %v2311, %v2307
    %v2400 = vpack.c.b16 %v2312, %v2308
    %v2401 = vpack.c.b16 %v2313, %v2309
    %v2402 = vpack.c.b16 %v2314, %v2310
    %v2403 = vpack.c.b16 %v2319, %v2315
    %v2404 = vpack.c.b16 %v2320, %v2316
    %v2405 = vpack.c.b16 %v2321, %v2317
    %v2406 = vpack.c.b16 %v2322, %v2318
    %v2407 = vpack.c.b16 %v2327, %v2323
    %v2408 = vpack.c.b16 %v2328, %v2324
    %v2409 = vpack.c.b16 %v2329, %v2325
    %v2410 = vpack.c.b16 %v2330, %v2326
    %v2411 = vpack.c.b16 %v2335, %v2331
    %v2412 = vpack.c.b16 %v2336, %v2332
    %v2413 = vpack.c.b16 %v2337, %v2333
    %v2414 = vpack.c.b16 %v2338, %v2334
    %v2415 = vpack.c.b16 %v2343, %v2339
    %v2416 = vpack.c.b16 %v2344, %v2340
    %v2417 = vpack.c.b16 %v2345, %v2341
    %v2418 = vpack.c.b16 %v2346, %v2342
    %v2419 = vpack.c.b16 %v2351, %v2347
    %v2420 = vpack.c.b16 %v2352, %v2348
    %v2421 = vpack.c.b16 %v2353, %v2349
    %v2422 = vpack.c.b16 %v2354, %v2350
    %v2423 = vpack.c.b16 %v2359, %v2355
    %v2424 = vpack.c.b16 %v2360, %v2356
    %v2425 = vpack.c.b16 %v2361, %v2357
    %v2426 = vpack.c.b16 %v2362, %v2358
    %2491 = vmatpush.bf16.msra.mxu0 %v2391
    %2492 = vmatpush.bf16.msra.mxu0 %v2387
    %2493 = vmatpush.bf16.msra.mxu0 %v2383
    %2494 = vmatpush.bf16.msra.mxu0 %v2379
    %2495 = vmatpush.bf16.msra.mxu0 %v2375
    %2496 = vmatpush.bf16.msra.mxu0 %v2371
    %2497 = vmatpush.bf16.msra.mxu0 %v2367
    %2498 = vmatpush.bf16.msra.mxu0 %v2363
    %2499 = vmatmul.bf16.gmra.mxu0 %v2139
    %v2500 = vpop.f32.mrf.mxu0
    %v2501 = vadd.f32 0.0, %v2500
    %v2502 = vpop.f32.mrf.mxu0
    %v2503 = vadd.f32 0.0, %v2502
    %2504 = vmatmul.bf16.gmra.mxu0 %v2141
    %v2505 = vpop.f32.mrf.mxu0
    %v2506 = vadd.f32 0.0, %v2505
    %v2507 = vpop.f32.mrf.mxu0
    %v2508 = vadd.f32 0.0, %v2507
    %2509 = vmatmul.bf16.gmra.mxu0 %v2143
    %v2510 = vpop.f32.mrf.mxu0
    %v2511 = vadd.f32 0.0, %v2510
    %v2512 = vpop.f32.mrf.mxu0
    %v2513 = vadd.f32 0.0, %v2512
    %2514 = vmatmul.bf16.gmra.mxu0 %v2145
    %v2515 = vpop.f32.mrf.mxu0
    %v2516 = vadd.f32 0.0, %v2515
    %v2517 = vpop.f32.mrf.mxu0
    %v2518 = vadd.f32 0.0, %v2517
    %2519 = vmatmul.bf16.gmra.mxu0 %v2147
    %v2520 = vpop.f32.mrf.mxu0
    %v2521 = vadd.f32 0.0, %v2520
    %v2522 = vpop.f32.mrf.mxu0
    %v2523 = vadd.f32 0.0, %v2522
    %2524 = vmatmul.bf16.gmra.mxu0 %v2149
    %v2525 = vpop.f32.mrf.mxu0
    %v2526 = vadd.f32 0.0, %v2525
    %v2527 = vpop.f32.mrf.mxu0
    %v2528 = vadd.f32 0.0, %v2527
    %2529 = vmatmul.bf16.gmra.mxu0 %v2151
    %v2530 = vpop.f32.mrf.mxu0
    %v2531 = vadd.f32 0.0, %v2530
    %v2532 = vpop.f32.mrf.mxu0
    %v2533 = vadd.f32 0.0, %v2532
    %2534 = vmatmul.bf16.gmra.mxu0 %v2153
    %v2535 = vpop.f32.mrf.mxu0
    %v2536 = vadd.f32 0.0, %v2535
    %v2537 = vpop.f32.mrf.mxu0
    %v2538 = vadd.f32 0.0, %v2537
    %2539 = vdwg.mxu0
    %2540 = vmatpush.bf16.msra.mxu0 %v2423
    %2541 = vmatpush.bf16.msra.mxu0 %v2419
    %2542 = vmatpush.bf16.msra.mxu0 %v2415
    %2543 = vmatpush.bf16.msra.mxu0 %v2411
    %2544 = vmatpush.bf16.msra.mxu0 %v2407
    %2545 = vmatpush.bf16.msra.mxu0 %v2403
    %2546 = vmatpush.bf16.msra.mxu0 %v2399
    %2547 = vmatpush.bf16.msra.mxu0 %v2395
    %2548 = vmatmul.bf16.gmra.mxu0 %v2140
    %v2549 = vpop.f32.mrf.mxu0
    %v2550 = vadd.f32 %v2501, %v2549
    %v2551 = vpop.f32.mrf.mxu0
    %v2552 = vadd.f32 %v2503, %v2551
    %2553 = vmatmul.bf16.gmra.mxu0 %v2142
    %v2554 = vpop.f32.mrf.mxu0
    %v2555 = vadd.f32 %v2506, %v2554
    %v2556 = vpop.f32.mrf.mxu0
    %v2557 = vadd.f32 %v2508, %v2556
    %2558 = vmatmul.bf16.gmra.mxu0 %v2144
    %v2559 = vpop.f32.mrf.mxu0
    %v2560 = vadd.f32 %v2511, %v2559
    %v2561 = vpop.f32.mrf.mxu0
    %v2562 = vadd.f32 %v2513, %v2561
    %2563 = vmatmul.bf16.gmra.mxu0 %v2146
    %v2564 = vpop.f32.mrf.mxu0
    %v2565 = vadd.f32 %v2516, %v2564
    %v2566 = vpop.f32.mrf.mxu0
    %v2567 = vadd.f32 %v2518, %v2566
    %2568 = vmatmul.bf16.gmra.mxu0 %v2148
    %v2569 = vpop.f32.mrf.mxu0
    %v2570 = vadd.f32 %v2521, %v2569
    %v2571 = vpop.f32.mrf.mxu0
    %v2572 = vadd.f32 %v2523, %v2571
    %2573 = vmatmul.bf16.gmra.mxu0 %v2150
    %v2574 = vpop.f32.mrf.mxu0
    %v2575 = vadd.f32 %v2526, %v2574
    %v2576 = vpop.f32.mrf.mxu0
    %v2577 = vadd.f32 %v2528, %v2576
    %2578 = vmatmul.bf16.gmra.mxu0 %v2152
    %v2579 = vpop.f32.mrf.mxu0
    %v2580 = vadd.f32 %v2531, %v2579
    %v2581 = vpop.f32.mrf.mxu0
    %v2582 = vadd.f32 %v2533, %v2581
    %2583 = vmatmul.bf16.gmra.mxu0 %v2154
    %v2584 = vpop.f32.mrf.mxu0
    %v2585 = vadd.f32 %v2536, %v2584
    %v2586 = vpop.f32.mrf.mxu0
    %v2587 = vadd.f32 %v2538, %v2586
    %2588 = vdwg.mxu0
    %2589 = vmatpush.bf16.msra.mxu0 %v2392
    %2590 = vmatpush.bf16.msra.mxu0 %v2388
    %2591 = vmatpush.bf16.msra.mxu0 %v2384
    %2592 = vmatpush.bf16.msra.mxu0 %v2380
    %2593 = vmatpush.bf16.msra.mxu0 %v2376
    %2594 = vmatpush.bf16.msra.mxu0 %v2372
    %2595 = vmatpush.bf16.msra.mxu0 %v2368
    %2596 = vmatpush.bf16.msra.mxu0 %v2364
    %2597 = vmatmul.bf16.gmra.mxu0 %v2139
    %v2598 = vpop.f32.mrf.mxu0
    %v2599 = vadd.f32 0.0, %v2598
    %v2600 = vpop.f32.mrf.mxu0
    %v2601 = vadd.f32 0.0, %v2600
    %2602 = vmatmul.bf16.gmra.mxu0 %v2141
    %v2603 = vpop.f32.mrf.mxu0
    %v2604 = vadd.f32 0.0, %v2603
    %v2605 = vpop.f32.mrf.mxu0
    %v2606 = vadd.f32 0.0, %v2605
    %2607 = vmatmul.bf16.gmra.mxu0 %v2143
    %v2608 = vpop.f32.mrf.mxu0
    %v2609 = vadd.f32 0.0, %v2608
    %v2610 = vpop.f32.mrf.mxu0
    %v2611 = vadd.f32 0.0, %v2610
    %2612 = vmatmul.bf16.gmra.mxu0 %v2145
    %v2613 = vpop.f32.mrf.mxu0
    %v2614 = vadd.f32 0.0, %v2613
    %v2615 = vpop.f32.mrf.mxu0
    %v2616 = vadd.f32 0.0, %v2615
    %2617 = vmatmul.bf16.gmra.mxu0 %v2147
    %v2618 = vpop.f32.mrf.mxu0
    %v2619 = vadd.f32 0.0, %v2618
    %v2620 = vpop.f32.mrf.mxu0
    %v2621 = vadd.f32 0.0, %v2620
    %2622 = vmatmul.bf16.gmra.mxu0 %v2149
    %v2623 = vpop.f32.mrf.mxu0
    %v2624 = vadd.f32 0.0, %v2623
    %v2625 = vpop.f32.mrf.mxu0
    %v2626 = vadd.f32 0.0, %v2625
    %2627 = vmatmul.bf16.gmra.mxu0 %v2151
    %v2628 = vpop.f32.mrf.mxu0
    %v2629 = vadd.f32 0.0, %v2628
    %v2630 = vpop.f32.mrf.mxu0
    %v2631 = vadd.f32 0.0, %v2630
    %2632 = vmatmul.bf16.gmra.mxu0 %v2153
    %v2633 = vpop.f32.mrf.mxu0
    %v2634 = vadd.f32 0.0, %v2633
    %v2635 = vpop.f32.mrf.mxu0
    %v2636 = vadd.f32 0.0, %v2635
    %2637 = vdwg.mxu0
    %2638 = vmatpush.bf16.msra.mxu0 %v2424
    %2639 = vmatpush.bf16.msra.mxu0 %v2420
    %2640 = vmatpush.bf16.msra.mxu0 %v2416
    %2641 = vmatpush.bf16.msra.mxu0 %v2412
    %2642 = vmatpush.bf16.msra.mxu0 %v2408
    %2643 = vmatpush.bf16.msra.mxu0 %v2404
    %2644 = vmatpush.bf16.msra.mxu0 %v2400
    %2645 = vmatpush.bf16.msra.mxu0 %v2396
    %2646 = vmatmul.bf16.gmra.mxu0 %v2140
    %v2647 = vpop.f32.mrf.mxu0
    %v2648 = vadd.f32 %v2599, %v2647
    %v2649 = vpop.f32.mrf.mxu0
    %v2650 = vadd.f32 %v2601, %v2649
    %2651 = vmatmul.bf16.gmra.mxu0 %v2142
    %v2652 = vpop.f32.mrf.mxu0
    %v2653 = vadd.f32 %v2604, %v2652
    %v2654 = vpop.f32.mrf.mxu0
    %v2655 = vadd.f32 %v2606, %v2654
    %2656 = vmatmul.bf16.gmra.mxu0 %v2144
    %v2657 = vpop.f32.mrf.mxu0
    %v2658 = vadd.f32 %v2609, %v2657
    %v2659 = vpop.f32.mrf.mxu0
    %v2660 = vadd.f32 %v2611, %v2659
    %2661 = vmatmul.bf16.gmra.mxu0 %v2146
    %v2662 = vpop.f32.mrf.mxu0
    %v2663 = vadd.f32 %v2614, %v2662
    %v2664 = vpop.f32.mrf.mxu0
    %v2665 = vadd.f32 %v2616, %v2664
    %2666 = vmatmul.bf16.gmra.mxu0 %v2148
    %v2667 = vpop.f32.mrf.mxu0
    %v2668 = vadd.f32 %v2619, %v2667
    %v2669 = vpop.f32.mrf.mxu0
    %v2670 = vadd.f32 %v2621, %v2669
    %2671 = vmatmul.bf16.gmra.mxu0 %v2150
    %v2672 = vpop.f32.mrf.mxu0
    %v2673 = vadd.f32 %v2624, %v2672
    %v2674 = vpop.f32.mrf.mxu0
    %v2675 = vadd.f32 %v2626, %v2674
    %2676 = vmatmul.bf16.gmra.mxu0 %v2152
    %v2677 = vpop.f32.mrf.mxu0
    %v2678 = vadd.f32 %v2629, %v2677
    %v2679 = vpop.f32.mrf.mxu0
    %v2680 = vadd.f32 %v2631, %v2679
    %2681 = vmatmul.bf16.gmra.mxu0 %v2154
    %v2682 = vpop.f32.mrf.mxu0
    %v2683 = vadd.f32 %v2634, %v2682
    %v2684 = vpop.f32.mrf.mxu0
    %v2685 = vadd.f32 %v2636, %v2684
    %2686 = vdwg.mxu0
    %2687 = vmatpush.bf16.msra.mxu0 %v2393
    %2688 = vmatpush.bf16.msra.mxu0 %v2389
    %2689 = vmatpush.bf16.msra.mxu0 %v2385
    %2690 = vmatpush.bf16.msra.mxu0 %v2381
    %2691 = vmatpush.bf16.msra.mxu0 %v2377
    %2692 = vmatpush.bf16.msra.mxu0 %v2373
    %2693 = vmatpush.bf16.msra.mxu0 %v2369
    %2694 = vmatpush.bf16.msra.mxu0 %v2365
    %2695 = vmatmul.bf16.gmra.mxu0 %v2139
    %v2696 = vpop.f32.mrf.mxu0
    %v2697 = vadd.f32 0.0, %v2696
    %v2698 = vpop.f32.mrf.mxu0
    %v2699 = vadd.f32 0.0, %v2698
    %2700 = vmatmul.bf16.gmra.mxu0 %v2141
    %v2701 = vpop.f32.mrf.mxu0
    %v2702 = vadd.f32 0.0, %v2701
    %v2703 = vpop.f32.mrf.mxu0
    %v2704 = vadd.f32 0.0, %v2703
    %2705 = vmatmul.bf16.gmra.mxu0 %v2143
    %v2706 = vpop.f32.mrf.mxu0
    %v2707 = vadd.f32 0.0, %v2706
    %v2708 = vpop.f32.mrf.mxu0
    %v2709 = vadd.f32 0.0, %v2708
    %2710 = vmatmul.bf16.gmra.mxu0 %v2145
    %v2711 = vpop.f32.mrf.mxu0
    %v2712 = vadd.f32 0.0, %v2711
    %v2713 = vpop.f32.mrf.mxu0
    %v2714 = vadd.f32 0.0, %v2713
    %2715 = vmatmul.bf16.gmra.mxu0 %v2147
    %v2716 = vpop.f32.mrf.mxu0
    %v2717 = vadd.f32 0.0, %v2716
    %v2718 = vpop.f32.mrf.mxu0
    %v2719 = vadd.f32 0.0, %v2718
    %2720 = vmatmul.bf16.gmra.mxu0 %v2149
    %v2721 = vpop.f32.mrf.mxu0
    %v2722 = vadd.f32 0.0, %v2721
    %v2723 = vpop.f32.mrf.mxu0
    %v2724 = vadd.f32 0.0, %v2723
    %2725 = vmatmul.bf16.gmra.mxu0 %v2151
    %v2726 = vpop.f32.mrf.mxu0
    %v2727 = vadd.f32 0.0, %v2726
    %v2728 = vpop.f32.mrf.mxu0
    %v2729 = vadd.f32 0.0, %v2728
    %2730 = vmatmul.bf16.gmra.mxu0 %v2153
    %v2731 = vpop.f32.mrf.mxu0
    %v2732 = vadd.f32 0.0, %v2731
    %v2733 = vpop.f32.mrf.mxu0
    %v2734 = vadd.f32 0.0, %v2733
    %2735 = vdwg.mxu0
    %2736 = vmatpush.bf16.msra.mxu0 %v2425
    %2737 = vmatpush.bf16.msra.mxu0 %v2421
    %2738 = vmatpush.bf16.msra.mxu0 %v2417
    %2739 = vmatpush.bf16.msra.mxu0 %v2413
    %2740 = vmatpush.bf16.msra.mxu0 %v2409
    %2741 = vmatpush.bf16.msra.mxu0 %v2405
    %2742 = vmatpush.bf16.msra.mxu0 %v2401
    %2743 = vmatpush.bf16.msra.mxu0 %v2397
    %2744 = vmatmul.bf16.gmra.mxu0 %v2140
    %v2745 = vpop.f32.mrf.mxu0
    %v2746 = vadd.f32 %v2697, %v2745
    %v2747 = vpop.f32.mrf.mxu0
    %v2748 = vadd.f32 %v2699, %v2747
    %2749 = vmatmul.bf16.gmra.mxu0 %v2142
    %v2750 = vpop.f32.mrf.mxu0
    %v2751 = vadd.f32 %v2702, %v2750
    %v2752 = vpop.f32.mrf.mxu0
    %v2753 = vadd.f32 %v2704, %v2752
    %2754 = vmatmul.bf16.gmra.mxu0 %v2144
    %v2755 = vpop.f32.mrf.mxu0
    %v2756 = vadd.f32 %v2707, %v2755
    %v2757 = vpop.f32.mrf.mxu0
    %v2758 = vadd.f32 %v2709, %v2757
    %2759 = vmatmul.bf16.gmra.mxu0 %v2146
    %v2760 = vpop.f32.mrf.mxu0
    %v2761 = vadd.f32 %v2712, %v2760
    %v2762 = vpop.f32.mrf.mxu0
    %v2763 = vadd.f32 %v2714, %v2762
    %2764 = vmatmul.bf16.gmra.mxu0 %v2148
    %v2765 = vpop.f32.mrf.mxu0
    %v2766 = vadd.f32 %v2717, %v2765
    %v2767 = vpop.f32.mrf.mxu0
    %v2768 = vadd.f32 %v2719, %v2767
    %2769 = vmatmul.bf16.gmra.mxu0 %v2150
    %v2770 = vpop.f32.mrf.mxu0
    %v2771 = vadd.f32 %v2722, %v2770
    %v2772 = vpop.f32.mrf.mxu0
    %v2773 = vadd.f32 %v2724, %v2772
    %2774 = vmatmul.bf16.gmra.mxu0 %v2152
    %v2775 = vpop.f32.mrf.mxu0
    %v2776 = vadd.f32 %v2727, %v2775
    %v2777 = vpop.f32.mrf.mxu0
    %v2778 = vadd.f32 %v2729, %v2777
    %2779 = vmatmul.bf16.gmra.mxu0 %v2154
    %v2780 = vpop.f32.mrf.mxu0
    %v2781 = vadd.f32 %v2732, %v2780
    %v2782 = vpop.f32.mrf.mxu0
    %v2783 = vadd.f32 %v2734, %v2782
    %2784 = vdwg.mxu0
    %2785 = vmatpush.bf16.msra.mxu0 %v2394
    %2786 = vmatpush.bf16.msra.mxu0 %v2390
    %2787 = vmatpush.bf16.msra.mxu0 %v2386
    %2788 = vmatpush.bf16.msra.mxu0 %v2382
    %2789 = vmatpush.bf16.msra.mxu0 %v2378
    %2790 = vmatpush.bf16.msra.mxu0 %v2374
    %2791 = vmatpush.bf16.msra.mxu0 %v2370
    %2792 = vmatpush.bf16.msra.mxu0 %v2366
    %2793 = vmatmul.bf16.gmra.mxu0 %v2139
    %v2794 = vpop.f32.mrf.mxu0
    %v2795 = vadd.f32 0.0, %v2794
    %v2796 = vpop.f32.mrf.mxu0
    %v2797 = vadd.f32 0.0, %v2796
    %2798 = vmatmul.bf16.gmra.mxu0 %v2141
    %v2799 = vpop.f32.mrf.mxu0
    %v2800 = vadd.f32 0.0, %v2799
    %v2801 = vpop.f32.mrf.mxu0
    %v2802 = vadd.f32 0.0, %v2801
    %2803 = vmatmul.bf16.gmra.mxu0 %v2143
    %v2804 = vpop.f32.mrf.mxu0
    %v2805 = vadd.f32 0.0, %v2804
    %v2806 = vpop.f32.mrf.mxu0
    %v2807 = vadd.f32 0.0, %v2806
    %2808 = vmatmul.bf16.gmra.mxu0 %v2145
    %v2809 = vpop.f32.mrf.mxu0
    %v2810 = vadd.f32 0.0, %v2809
    %v2811 = vpop.f32.mrf.mxu0
    %v2812 = vadd.f32 0.0, %v2811
    %2813 = vmatmul.bf16.gmra.mxu0 %v2147
    %v2814 = vpop.f32.mrf.mxu0
    %v2815 = vadd.f32 0.0, %v2814
    %v2816 = vpop.f32.mrf.mxu0
    %v2817 = vadd.f32 0.0, %v2816
    %2818 = vmatmul.bf16.gmra.mxu0 %v2149
    %v2819 = vpop.f32.mrf.mxu0
    %v2820 = vadd.f32 0.0, %v2819
    %v2821 = vpop.f32.mrf.mxu0
    %v2822 = vadd.f32 0.0, %v2821
    %2823 = vmatmul.bf16.gmra.mxu0 %v2151
    %v2824 = vpop.f32.mrf.mxu0
    %v2825 = vadd.f32 0.0, %v2824
    %v2826 = vpop.f32.mrf.mxu0
    %v2827 = vadd.f32 0.0, %v2826
    %2828 = vmatmul.bf16.gmra.mxu0 %v2153
    %v2829 = vpop.f32.mrf.mxu0
    %v2830 = vadd.f32 0.0, %v2829
    %v2831 = vpop.f32.mrf.mxu0
    %v2832 = vadd.f32 0.0, %v2831
    %2833 = vdwg.mxu0
    %2834 = vmatpush.bf16.msra.mxu0 %v2426
    %2835 = vmatpush.bf16.msra.mxu0 %v2422
    %2836 = vmatpush.bf16.msra.mxu0 %v2418
    %2837 = vmatpush.bf16.msra.mxu0 %v2414
    %2838 = vmatpush.bf16.msra.mxu0 %v2410
    %2839 = vmatpush.bf16.msra.mxu0 %v2406
    %2840 = vmatpush.bf16.msra.mxu0 %v2402
    %2841 = vmatpush.bf16.msra.mxu0 %v2398
    %2842 = vmatmul.bf16.gmra.mxu0 %v2140
    %v2843 = vpop.f32.mrf.mxu0
    %v2844 = vadd.f32 %v2795, %v2843
    %v2845 = vpop.f32.mrf.mxu0
    %v2846 = vadd.f32 %v2797, %v2845
    %2847 = vmatmul.bf16.gmra.mxu0 %v2142
    %v2848 = vpop.f32.mrf.mxu0
    %v2849 = vadd.f32 %v2800, %v2848
    %v2850 = vpop.f32.mrf.mxu0
    %v2851 = vadd.f32 %v2802, %v2850
    %2852 = vmatmul.bf16.gmra.mxu0 %v2144
    %v2853 = vpop.f32.mrf.mxu0
    %v2854 = vadd.f32 %v2805, %v2853
    %v2855 = vpop.f32.mrf.mxu0
    %v2856 = vadd.f32 %v2807, %v2855
    %2857 = vmatmul.bf16.gmra.mxu0 %v2146
    %v2858 = vpop.f32.mrf.mxu0
    %v2859 = vadd.f32 %v2810, %v2858
    %v2860 = vpop.f32.mrf.mxu0
    %v2861 = vadd.f32 %v2812, %v2860
    %2862 = vmatmul.bf16.gmra.mxu0 %v2148
    %v2863 = vpop.f32.mrf.mxu0
    %v2864 = vadd.f32 %v2815, %v2863
    %v2865 = vpop.f32.mrf.mxu0
    %v2866 = vadd.f32 %v2817, %v2865
    %2867 = vmatmul.bf16.gmra.mxu0 %v2150
    %v2868 = vpop.f32.mrf.mxu0
    %v2869 = vadd.f32 %v2820, %v2868
    %v2870 = vpop.f32.mrf.mxu0
    %v2871 = vadd.f32 %v2822, %v2870
    %2872 = vmatmul.bf16.gmra.mxu0 %v2152
    %v2873 = vpop.f32.mrf.mxu0
    %v2874 = vadd.f32 %v2825, %v2873
    %v2875 = vpop.f32.mrf.mxu0
    %v2876 = vadd.f32 %v2827, %v2875
    %2877 = vmatmul.bf16.gmra.mxu0 %v2154
    %v2878 = vpop.f32.mrf.mxu0
    %v2879 = vadd.f32 %v2830, %v2878
    %v2880 = vpop.f32.mrf.mxu0
    %v2881 = vadd.f32 %v2832, %v2880
    %2882 = vdwg.mxu0
    %v2883 = vadd.f32 %v2550, %v2552
    %v2884 = vadd.f32 %v2883, %v2555
    %v2885 = vadd.f32 %v2884, %v2557
    %v2886 = vadd.f32 %v2885, %v2560
    %v2887 = vadd.f32 %v2886, %v2562
    %v2888 = vadd.f32 %v2887, %v2565
    %v2889 = vadd.f32 %v2888, %v2567
    %v2890 = vrot.slane %v2889, 4
    %v2891 = vadd.f32 %v2889, %v2890
    %v2892 = vrot.slane %v2891, 2
    %v2893 = vadd.f32 %v2891, %v2892
    %v2894 = vrot.slane %v2893, 1
    %v2895 = vadd.f32 %v2893, %v2894
    %v2896 = vadd.f32 %v2648, %v2650
    %v2897 = vadd.f32 %v2896, %v2653
    %v2898 = vadd.f32 %v2897, %v2655
    %v2899 = vadd.f32 %v2898, %v2658
    %v2900 = vadd.f32 %v2899, %v2660
    %v2901 = vadd.f32 %v2900, %v2663
    %v2902 = vadd.f32 %v2901, %v2665
    %v2903 = vrot.slane %v2902, 4
    %v2904 = vadd.f32 %v2902, %v2903
    %v2905 = vrot.slane %v2904, 2
    %v2906 = vadd.f32 %v2904, %v2905
    %v2907 = vrot.slane %v2906, 1
    %v2908 = vadd.f32 %v2906, %v2907
    %v2909 = vadd.f32 %v2746, %v2748
    %v2910 = vadd.f32 %v2909, %v2751
    %v2911 = vadd.f32 %v2910, %v2753
    %v2912 = vadd.f32 %v2911, %v2756
    %v2913 = vadd.f32 %v2912, %v2758
    %v2914 = vadd.f32 %v2913, %v2761
    %v2915 = vadd.f32 %v2914, %v2763
    %v2916 = vrot.slane %v2915, 4
    %v2917 = vadd.f32 %v2915, %v2916
    %v2918 = vrot.slane %v2917, 2
    %v2919 = vadd.f32 %v2917, %v2918
    %v2920 = vrot.slane %v2919, 1
    %v2921 = vadd.f32 %v2919, %v2920
    %v2922 = vadd.f32 %v2844, %v2846
    %v2923 = vadd.f32 %v2922, %v2849
    %v2924 = vadd.f32 %v2923, %v2851
    %v2925 = vadd.f32 %v2924, %v2854
    %v2926 = vadd.f32 %v2925, %v2856
    %v2927 = vadd.f32 %v2926, %v2859
    %v2928 = vadd.f32 %v2927, %v2861
    %v2929 = vrot.slane %v2928, 4
    %v2930 = vadd.f32 %v2928, %v2929
    %v2931 = vrot.slane %v2930, 2
    %v2932 = vadd.f32 %v2930, %v2931
    %v2933 = vrot.slane %v2932, 1
    %v2934 = vadd.f32 %v2932, %v2933
    %v2935 = vadd.f32 %v2570, %v2572
    %v2936 = vadd.f32 %v2935, %v2575
    %v2937 = vadd.f32 %v2936, %v2577
    %v2938 = vadd.f32 %v2937, %v2580
    %v2939 = vadd.f32 %v2938, %v2582
    %v2940 = vadd.f32 %v2939, %v2585
    %v2941 = vadd.f32 %v2940, %v2587
    %v2942 = vrot.slane %v2941, 4
    %v2943 = vadd.f32 %v2941, %v2942
    %v2944 = vrot.slane %v2943, 2
    %v2945 = vadd.f32 %v2943, %v2944
    %v2946 = vrot.slane %v2945, 1
    %v2947 = vadd.f32 %v2945, %v2946
    %v2948 = vadd.f32 %v2668, %v2670
    %v2949 = vadd.f32 %v2948, %v2673
    %v2950 = vadd.f32 %v2949, %v2675
    %v2951 = vadd.f32 %v2950, %v2678
    %v2952 = vadd.f32 %v2951, %v2680
    %v2953 = vadd.f32 %v2952, %v2683
    %v2954 = vadd.f32 %v2953, %v2685
    %v2955 = vrot.slane %v2954, 4
    %v2956 = vadd.f32 %v2954, %v2955
    %v2957 = vrot.slane %v2956, 2
    %v2958 = vadd.f32 %v2956, %v2957
    %v2959 = vrot.slane %v2958, 1
    %v2960 = vadd.f32 %v2958, %v2959
    %v2961 = vadd.f32 %v2766, %v2768
    %v2962 = vadd.f32 %v2961, %v2771
    %v2963 = vadd.f32 %v2962, %v2773
    %v2964 = vadd.f32 %v2963, %v2776
    %v2965 = vadd.f32 %v2964, %v2778
    %v2966 = vadd.f32 %v2965, %v2781
    %v2967 = vadd.f32 %v2966, %v2783
    %v2968 = vrot.slane %v2967, 4
    %v2969 = vadd.f32 %v2967, %v2968
    %v2970 = vrot.slane %v2969, 2
    %v2971 = vadd.f32 %v2969, %v2970
    %v2972 = vrot.slane %v2971, 1
    %v2973 = vadd.f32 %v2971, %v2972
    %v2974 = vadd.f32 %v2864, %v2866
    %v2975 = vadd.f32 %v2974, %v2869
    %v2976 = vadd.f32 %v2975, %v2871
    %v2977 = vadd.f32 %v2976, %v2874
    %v2978 = vadd.f32 %v2977, %v2876
    %v2979 = vadd.f32 %v2978, %v2879
    %v2980 = vadd.f32 %v2979, %v2881
    %v2981 = vrot.slane %v2980, 4
    %v2982 = vadd.f32 %v2980, %v2981
    %v2983 = vrot.slane %v2982, 2
    %v2984 = vadd.f32 %v2982, %v2983
    %v2985 = vrot.slane %v2984, 1
    %v2986 = vadd.f32 %v2984, %v2985
    %v2987 = vmul.f32 %v2550, %v2550
    %v2988 = vmul.f32 %v2648, %v2648
    %v2989 = vmul.f32 %v2746, %v2746
    %v2990 = vmul.f32 %v2844, %v2844
    %v2991 = vmul.f32 %v2552, %v2552
    %v2992 = vmul.f32 %v2650, %v2650
    %v2993 = vmul.f32 %v2748, %v2748
    %v2994 = vmul.f32 %v2846, %v2846
    %v2995 = vmul.f32 %v2555, %v2555
    %v2996 = vmul.f32 %v2653, %v2653
    %v2997 = vmul.f32 %v2751, %v2751
    %v2998 = vmul.f32 %v2849, %v2849
    %v2999 = vmul.f32 %v2557, %v2557
    %v3000 = vmul.f32 %v2655, %v2655
    %v3001 = vmul.f32 %v2753, %v2753
    %v3002 = vmul.f32 %v2851, %v2851
    %v3003 = vmul.f32 %v2560, %v2560
    %v3004 = vmul.f32 %v2658, %v2658
    %v3005 = vmul.f32 %v2756, %v2756
    %v3006 = vmul.f32 %v2854, %v2854
    %v3007 = vmul.f32 %v2562, %v2562
    %v3008 = vmul.f32 %v2660, %v2660
    %v3009 = vmul.f32 %v2758, %v2758
    %v3010 = vmul.f32 %v2856, %v2856
    %v3011 = vmul.f32 %v2565, %v2565
    %v3012 = vmul.f32 %v2663, %v2663
    %v3013 = vmul.f32 %v2761, %v2761
    %v3014 = vmul.f32 %v2859, %v2859
    %v3015 = vmul.f32 %v2567, %v2567
    %v3016 = vmul.f32 %v2665, %v2665
    %v3017 = vmul.f32 %v2763, %v2763
    %v3018 = vmul.f32 %v2861, %v2861
    %v3019 = vmul.f32 %v2570, %v2570
    %v3020 = vmul.f32 %v2668, %v2668
    %v3021 = vmul.f32 %v2766, %v2766
    %v3022 = vmul.f32 %v2864, %v2864
    %v3023 = vmul.f32 %v2572, %v2572
    %v3024 = vmul.f32 %v2670, %v2670
    %v3025 = vmul.f32 %v2768, %v2768
    %v3026 = vmul.f32 %v2866, %v2866
    %v3027 = vmul.f32 %v2575, %v2575
    %v3028 = vmul.f32 %v2673, %v2673
    %v3029 = vmul.f32 %v2771, %v2771
    %v3030 = vmul.f32 %v2869, %v2869
    %v3031 = vmul.f32 %v2577, %v2577
    %v3032 = vmul.f32 %v2675, %v2675
    %v3033 = vmul.f32 %v2773, %v2773
    %v3034 = vmul.f32 %v2871, %v2871
    %v3035 = vmul.f32 %v2580, %v2580
    %v3036 = vmul.f32 %v2678, %v2678
    %v3037 = vmul.f32 %v2776, %v2776
    %v3038 = vmul.f32 %v2874, %v2874
    %v3039 = vmul.f32 %v2582, %v2582
    %v3040 = vmul.f32 %v2680, %v2680
    %v3041 = vmul.f32 %v2778, %v2778
    %v3042 = vmul.f32 %v2876, %v2876
    %v3043 = vmul.f32 %v2585, %v2585
    %v3044 = vmul.f32 %v2683, %v2683
    %v3045 = vmul.f32 %v2781, %v2781
    %v3046 = vmul.f32 %v2879, %v2879
    %v3047 = vmul.f32 %v2587, %v2587
    %v3048 = vmul.f32 %v2685, %v2685
    %v3049 = vmul.f32 %v2783, %v2783
    %v3050 = vmul.f32 %v2881, %v2881
    %v3051 = vadd.f32 %v2987, %v2991
    %v3052 = vadd.f32 %v3051, %v2995
    %v3053 = vadd.f32 %v3052, %v2999
    %v3054 = vadd.f32 %v3053, %v3003
    %v3055 = vadd.f32 %v3054, %v3007
    %v3056 = vadd.f32 %v3055, %v3011
    %v3057 = vadd.f32 %v3056, %v3015
    %v3058 = vrot.slane %v3057, 4
    %v3059 = vadd.f32 %v3057, %v3058
    %v3060 = vrot.slane %v3059, 2
    %v3061 = vadd.f32 %v3059, %v3060
    %v3062 = vrot.slane %v3061, 1
    %v3063 = vadd.f32 %v3061, %v3062
    %v3064 = vadd.f32 %v2988, %v2992
    %v3065 = vadd.f32 %v3064, %v2996
    %v3066 = vadd.f32 %v3065, %v3000
    %v3067 = vadd.f32 %v3066, %v3004
    %v3068 = vadd.f32 %v3067, %v3008
    %v3069 = vadd.f32 %v3068, %v3012
    %v3070 = vadd.f32 %v3069, %v3016
    %v3071 = vrot.slane %v3070, 4
    %v3072 = vadd.f32 %v3070, %v3071
    %v3073 = vrot.slane %v3072, 2
    %v3074 = vadd.f32 %v3072, %v3073
    %v3075 = vrot.slane %v3074, 1
    %v3076 = vadd.f32 %v3074, %v3075
    %v3077 = vadd.f32 %v2989, %v2993
    %v3078 = vadd.f32 %v3077, %v2997
    %v3079 = vadd.f32 %v3078, %v3001
    %v3080 = vadd.f32 %v3079, %v3005
    %v3081 = vadd.f32 %v3080, %v3009
    %v3082 = vadd.f32 %v3081, %v3013
    %v3083 = vadd.f32 %v3082, %v3017
    %v3084 = vrot.slane %v3083, 4
    %v3085 = vadd.f32 %v3083, %v3084
    %v3086 = vrot.slane %v3085, 2
    %v3087 = vadd.f32 %v3085, %v3086
    %v3088 = vrot.slane %v3087, 1
    %v3089 = vadd.f32 %v3087, %v3088
    %v3090 = vadd.f32 %v2990, %v2994
    %v3091 = vadd.f32 %v3090, %v2998
    %v3092 = vadd.f32 %v3091, %v3002
    %v3093 = vadd.f32 %v3092, %v3006
    %v3094 = vadd.f32 %v3093, %v3010
    %v3095 = vadd.f32 %v3094, %v3014
    %v3096 = vadd.f32 %v3095, %v3018
    %v3097 = vrot.slane %v3096, 4
    %v3098 = vadd.f32 %v3096, %v3097
    %v3099 = vrot.slane %v3098, 2
    %v3100 = vadd.f32 %v3098, %v3099
    %v3101 = vrot.slane %v3100, 1
    %v3102 = vadd.f32 %v3100, %v3101
    %v3103 = vadd.f32 %v3019, %v3023
    %v3104 = vadd.f32 %v3103, %v3027
    %v3105 = vadd.f32 %v3104, %v3031
    %v3106 = vadd.f32 %v3105, %v3035
    %v3107 = vadd.f32 %v3106, %v3039
    %v3108 = vadd.f32 %v3107, %v3043
    %v3109 = vadd.f32 %v3108, %v3047
    %v3110 = vrot.slane %v3109, 4
    %v3111 = vadd.f32 %v3109, %v3110
    %v3112 = vrot.slane %v3111, 2
    %v3113 = vadd.f32 %v3111, %v3112
    %v3114 = vrot.slane %v3113, 1
    %v3115 = vadd.f32 %v3113, %v3114
    %v3116 = vadd.f32 %v3020, %v3024
    %v3117 = vadd.f32 %v3116, %v3028
    %v3118 = vadd.f32 %v3117, %v3032
    %v3119 = vadd.f32 %v3118, %v3036
    %v3120 = vadd.f32 %v3119, %v3040
    %v3121 = vadd.f32 %v3120, %v3044
    %v3122 = vadd.f32 %v3121, %v3048
    %v3123 = vrot.slane %v3122, 4
    %v3124 = vadd.f32 %v3122, %v3123
    %v3125 = vrot.slane %v3124, 2
    %v3126 = vadd.f32 %v3124, %v3125
    %v3127 = vrot.slane %v3126, 1
    %v3128 = vadd.f32 %v3126, %v3127
    %v3129 = vadd.f32 %v3021, %v3025
    %v3130 = vadd.f32 %v3129, %v3029
    %v3131 = vadd.f32 %v3130, %v3033
    %v3132 = vadd.f32 %v3131, %v3037
    %v3133 = vadd.f32 %v3132, %v3041
    %v3134 = vadd.f32 %v3133, %v3045
    %v3135 = vadd.f32 %v3134, %v3049
    %v3136 = vrot.slane %v3135, 4
    %v3137 = vadd.f32 %v3135, %v3136
    %v3138 = vrot.slane %v3137, 2
    %v3139 = vadd.f32 %v3137, %v3138
    %v3140 = vrot.slane %v3139, 1
    %v3141 = vadd.f32 %v3139, %v3140
    %v3142 = vadd.f32 %v3022, %v3026
    %v3143 = vadd.f32 %v3142, %v3030
    %v3144 = vadd.f32 %v3143, %v3034
    %v3145 = vadd.f32 %v3144, %v3038
    %v3146 = vadd.f32 %v3145, %v3042
    %v3147 = vadd.f32 %v3146, %v3046
    %v3148 = vadd.f32 %v3147, %v3050
    %v3149 = vrot.slane %v3148, 4
    %v3150 = vadd.f32 %v3148, %v3149
    %v3151 = vrot.slane %v3150, 2
    %v3152 = vadd.f32 %v3150, %v3151
    %v3153 = vrot.slane %v3152, 1
    %v3154 = vadd.f32 %v3152, %v3153
    %v3155 = vmul.f32 %v2895, 0.015625
    %v3156 = vmul.f32 %v2908, 0.015625
    %v3157 = vmul.f32 %v2921, 0.015625
    %v3158 = vmul.f32 %v2934, 0.015625
    %v3159 = vmul.f32 %v2947, 0.015625
    %v3160 = vmul.f32 %v2960, 0.015625
    %v3161 = vmul.f32 %v2973, 0.015625
    %v3162 = vmul.f32 %v2986, 0.015625
    %v3163 = vmul.f32 %v3063, 0.015625
    %v3164 = vmul.f32 %v3076, 0.015625
    %v3165 = vmul.f32 %v3089, 0.015625
    %v3166 = vmul.f32 %v3102, 0.015625
    %v3167 = vmul.f32 %v3115, 0.015625
    %v3168 = vmul.f32 %v3128, 0.015625
    %v3169 = vmul.f32 %v3141, 0.015625
    %v3170 = vmul.f32 %v3154, 0.015625
    %v3171 = vmul.f32 %v3155, %v3155
    %v3172 = vmul.f32 %v3156, %v3156
    %v3173 = vmul.f32 %v3157, %v3157
    %v3174 = vmul.f32 %v3158, %v3158
    %v3175 = vmul.f32 %v3159, %v3159
    %v3176 = vmul.f32 %v3160, %v3160
    %v3177 = vmul.f32 %v3161, %v3161
    %v3178 = vmul.f32 %v3162, %v3162
    %v3179 = vsub.f32 %v3163, %v3171
    %v3180 = vsub.f32 %v3164, %v3172
    %v3181 = vsub.f32 %v3165, %v3173
    %v3182 = vsub.f32 %v3166, %v3174
    %v3183 = vsub.f32 %v3167, %v3175
    %v3184 = vsub.f32 %v3168, %v3176
    %v3185 = vsub.f32 %v3169, %v3177
    %v3186 = vsub.f32 %v3170, %v3178
    %v3187 = vmax.f32 %v3179, 0.0
    %v3188 = vmax.f32 %v3180, 0.0
    %v3189 = vmax.f32 %v3181, 0.0
    %v3190 = vmax.f32 %v3182, 0.0
    %v3191 = vmax.f32 %v3183, 0.0
    %v3192 = vmax.f32 %v3184, 0.0
    %v3193 = vmax.f32 %v3185, 0.0
    %v3194 = vmax.f32 %v3186, 0.0
    %v3195 = vadd.f32 %v3187, 1e-05
    %v3196 = vadd.f32 %v3188, 1e-05
    %v3197 = vadd.f32 %v3189, 1e-05
    %v3198 = vadd.f32 %v3190, 1e-05
    %v3199 = vadd.f32 %v3191, 1e-05
    %v3200 = vadd.f32 %v3192, 1e-05
    %v3201 = vadd.f32 %v3193, 1e-05
    %v3202 = vadd.f32 %v3194, 1e-05
    %v3203 = vrsqrt.pop %v3195
    %v3204 = vmul.f32 %v3203, %v3195
    %v3205 = vmul.f32 %v3204, %v3203
    %v3206 = vmul.f32 0.5, %v3205
    %v3207 = vsub.f32 1.5, %v3206
    %v3208 = vmul.f32 %v3203, %v3207
    %vm3209 = vweird.f32 %v3195
    %vm3210 = vweird.f32 %v3203
    %vm3211 = vmor %vm3209, %vm3210
    %v3212 = vsel %vm3211, %v3203, %v3208
    %v3213 = vrsqrt.pop %v3196
    %v3214 = vmul.f32 %v3213, %v3196
    %v3215 = vmul.f32 %v3214, %v3213
    %v3216 = vmul.f32 0.5, %v3215
    %v3217 = vsub.f32 1.5, %v3216
    %v3218 = vmul.f32 %v3213, %v3217
    %vm3219 = vweird.f32 %v3196
    %vm3220 = vweird.f32 %v3213
    %vm3221 = vmor %vm3219, %vm3220
    %v3222 = vsel %vm3221, %v3213, %v3218
    %v3223 = vrsqrt.pop %v3197
    %v3224 = vmul.f32 %v3223, %v3197
    %v3225 = vmul.f32 %v3224, %v3223
    %v3226 = vmul.f32 0.5, %v3225
    %v3227 = vsub.f32 1.5, %v3226
    %v3228 = vmul.f32 %v3223, %v3227
    %vm3229 = vweird.f32 %v3197
    %vm3230 = vweird.f32 %v3223
    %vm3231 = vmor %vm3229, %vm3230
    %v3232 = vsel %vm3231, %v3223, %v3228
    %v3233 = vrsqrt.pop %v3198
    %v3234 = vmul.f32 %v3233, %v3198
    %v3235 = vmul.f32 %v3234, %v3233
    %v3236 = vmul.f32 0.5, %v3235
    %v3237 = vsub.f32 1.5, %v3236
    %v3238 = vmul.f32 %v3233, %v3237
    %vm3239 = vweird.f32 %v3198
    %vm3240 = vweird.f32 %v3233
    %vm3241 = vmor %vm3239, %vm3240
    %v3242 = vsel %vm3241, %v3233, %v3238
    %v3243 = vrsqrt.pop %v3199
    %v3244 = vmul.f32 %v3243, %v3199
    %v3245 = vmul.f32 %v3244, %v3243
    %v3246 = vmul.f32 0.5, %v3245
    %v3247 = vsub.f32 1.5, %v3246
    %v3248 = vmul.f32 %v3243, %v3247
    %vm3249 = vweird.f32 %v3199
    %vm3250 = vweird.f32 %v3243
    %vm3251 = vmor %vm3249, %vm3250
    %v3252 = vsel %vm3251, %v3243, %v3248
    %v3253 = vrsqrt.pop %v3200
    %v3254 = vmul.f32 %v3253, %v3200
    %v3255 = vmul.f32 %v3254, %v3253
    %v3256 = vmul.f32 0.5, %v3255
    %v3257 = vsub.f32 1.5, %v3256
    %v3258 = vmul.f32 %v3253, %v3257
    %vm3259 = vweird.f32 %v3200
    %vm3260 = vweird.f32 %v3253
    %vm3261 = vmor %vm3259, %vm3260
    %v3262 = vsel %vm3261, %v3253, %v3258
    %v3263 = vrsqrt.pop %v3201
    %v3264 = vmul.f32 %v3263, %v3201
    %v3265 = vmul.f32 %v3264, %v3263
    %v3266 = vmul.f32 0.5, %v3265
    %v3267 = vsub.f32 1.5, %v3266
    %v3268 = vmul.f32 %v3263, %v3267
    %vm3269 = vweird.f32 %v3201
    %vm3270 = vweird.f32 %v3263
    %vm3271 = vmor %vm3269, %vm3270
    %v3272 = vsel %vm3271, %v3263, %v3268
    %v3273 = vrsqrt.pop %v3202
    %v3274 = vmul.f32 %v3273, %v3202
    %v3275 = vmul.f32 %v3274, %v3273
    %v3276 = vmul.f32 0.5, %v3275
    %v3277 = vsub.f32 1.5, %v3276
    %v3278 = vmul.f32 %v3273, %v3277
    %vm3279 = vweird.f32 %v3202
    %vm3280 = vweird.f32 %v3273
    %vm3281 = vmor %vm3279, %vm3280
    %v3282 = vsel %vm3281, %v3273, %v3278
    %v3283 = vsub.f32 0.0, %v3155
    %v3284 = vsub.f32 0.0, %v3156
    %v3285 = vsub.f32 0.0, %v3157
    %v3286 = vsub.f32 0.0, %v3158
    %v3287 = vsub.f32 0.0, %v3159
    %v3288 = vsub.f32 0.0, %v3160
    %v3289 = vsub.f32 0.0, %v3161
    %v3290 = vsub.f32 0.0, %v3162
    %v3291 = vmul.f32 %v3283, %v3212
    %v3292 = vmul.f32 %v3284, %v3222
    %v3293 = vmul.f32 %v3285, %v3232
    %v3294 = vmul.f32 %v3286, %v3242
    %v3295 = vmul.f32 %v3287, %v3252
    %v3296 = vmul.f32 %v3288, %v3262
    %v3297 = vmul.f32 %v3289, %v3272
    %v3298 = vmul.f32 %v3290, %v3282
    %v3299 = vmul.f32 %v2550, %v3212
    %v3300 = vmul.f32 %v2648, %v3222
    %v3301 = vmul.f32 %v2746, %v3232
    %v3302 = vmul.f32 %v2844, %v3242
    %v3303 = vmul.f32 %v2552, %v3212
    %v3304 = vmul.f32 %v2650, %v3222
    %v3305 = vmul.f32 %v2748, %v3232
    %v3306 = vmul.f32 %v2846, %v3242
    %v3307 = vmul.f32 %v2555, %v3212
    %v3308 = vmul.f32 %v2653, %v3222
    %v3309 = vmul.f32 %v2751, %v3232
    %v3310 = vmul.f32 %v2849, %v3242
    %v3311 = vmul.f32 %v2557, %v3212
    %v3312 = vmul.f32 %v2655, %v3222
    %v3313 = vmul.f32 %v2753, %v3232
    %v3314 = vmul.f32 %v2851, %v3242
    %v3315 = vmul.f32 %v2560, %v3212
    %v3316 = vmul.f32 %v2658, %v3222
    %v3317 = vmul.f32 %v2756, %v3232
    %v3318 = vmul.f32 %v2854, %v3242
    %v3319 = vmul.f32 %v2562, %v3212
    %v3320 = vmul.f32 %v2660, %v3222
    %v3321 = vmul.f32 %v2758, %v3232
    %v3322 = vmul.f32 %v2856, %v3242
    %v3323 = vmul.f32 %v2565, %v3212
    %v3324 = vmul.f32 %v2663, %v3222
    %v3325 = vmul.f32 %v2761, %v3232
    %v3326 = vmul.f32 %v2859, %v3242
    %v3327 = vmul.f32 %v2567, %v3212
    %v3328 = vmul.f32 %v2665, %v3222
    %v3329 = vmul.f32 %v2763, %v3232
    %v3330 = vmul.f32 %v2861, %v3242
    %v3331 = vmul.f32 %v2570, %v3252
    %v3332 = vmul.f32 %v2668, %v3262
    %v3333 = vmul.f32 %v2766, %v3272
    %v3334 = vmul.f32 %v2864, %v3282
    %v3335 = vmul.f32 %v2572, %v3252
    %v3336 = vmul.f32 %v2670, %v3262
    %v3337 = vmul.f32 %v2768, %v3272
    %v3338 = vmul.f32 %v2866, %v3282
    %v3339 = vmul.f32 %v2575, %v3252
    %v3340 = vmul.f32 %v2673, %v3262
    %v3341 = vmul.f32 %v2771, %v3272
    %v3342 = vmul.f32 %v2869, %v3282
    %v3343 = vmul.f32 %v2577, %v3252
    %v3344 = vmul.f32 %v2675, %v3262
    %v3345 = vmul.f32 %v2773, %v3272
    %v3346 = vmul.f32 %v2871, %v3282
    %v3347 = vmul.f32 %v2580, %v3252
    %v3348 = vmul.f32 %v2678, %v3262
    %v3349 = vmul.f32 %v2776, %v3272
    %v3350 = vmul.f32 %v2874, %v3282
    %v3351 = vmul.f32 %v2582, %v3252
    %v3352 = vmul.f32 %v2680, %v3262
    %v3353 = vmul.f32 %v2778, %v3272
    %v3354 = vmul.f32 %v2876, %v3282
    %v3355 = vmul.f32 %v2585, %v3252
    %v3356 = vmul.f32 %v2683, %v3262
    %v3357 = vmul.f32 %v2781, %v3272
    %v3358 = vmul.f32 %v2879, %v3282
    %v3359 = vmul.f32 %v2587, %v3252
    %v3360 = vmul.f32 %v2685, %v3262
    %v3361 = vmul.f32 %v2783, %v3272
    %v3362 = vmul.f32 %v2881, %v3282
    %v3363 = vadd.f32 %v3299, %v3291
    %v3364 = vadd.f32 %v3300, %v3292
    %v3365 = vadd.f32 %v3301, %v3293
    %v3366 = vadd.f32 %v3302, %v3294
    %v3367 = vadd.f32 %v3303, %v3291
    %v3368 = vadd.f32 %v3304, %v3292
    %v3369 = vadd.f32 %v3305, %v3293
    %v3370 = vadd.f32 %v3306, %v3294
    %v3371 = vadd.f32 %v3307, %v3291
    %v3372 = vadd.f32 %v3308, %v3292
    %v3373 = vadd.f32 %v3309, %v3293
    %v3374 = vadd.f32 %v3310, %v3294
    %v3375 = vadd.f32 %v3311, %v3291
    %v3376 = vadd.f32 %v3312, %v3292
    %v3377 = vadd.f32 %v3313, %v3293
    %v3378 = vadd.f32 %v3314, %v3294
    %v3379 = vadd.f32 %v3315, %v3291
    %v3380 = vadd.f32 %v3316, %v3292
    %v3381 = vadd.f32 %v3317, %v3293
    %v3382 = vadd.f32 %v3318, %v3294
    %v3383 = vadd.f32 %v3319, %v3291
    %v3384 = vadd.f32 %v3320, %v3292
    %v3385 = vadd.f32 %v3321, %v3293
    %v3386 = vadd.f32 %v3322, %v3294
    %v3387 = vadd.f32 %v3323, %v3291
    %v3388 = vadd.f32 %v3324, %v3292
    %v3389 = vadd.f32 %v3325, %v3293
    %v3390 = vadd.f32 %v3326, %v3294
    %v3391 = vadd.f32 %v3327, %v3291
    %v3392 = vadd.f32 %v3328, %v3292
    %v3393 = vadd.f32 %v3329, %v3293
    %v3394 = vadd.f32 %v3330, %v3294
    %v3395 = vadd.f32 %v3331, %v3295
    %v3396 = vadd.f32 %v3332, %v3296
    %v3397 = vadd.f32 %v3333, %v3297
    %v3398 = vadd.f32 %v3334, %v3298
    %v3399 = vadd.f32 %v3335, %v3295
    %v3400 = vadd.f32 %v3336, %v3296
    %v3401 = vadd.f32 %v3337, %v3297
    %v3402 = vadd.f32 %v3338, %v3298
    %v3403 = vadd.f32 %v3339, %v3295
    %v3404 = vadd.f32 %v3340, %v3296
    %v3405 = vadd.f32 %v3341, %v3297
    %v3406 = vadd.f32 %v3342, %v3298
    %v3407 = vadd.f32 %v3343, %v3295
    %v3408 = vadd.f32 %v3344, %v3296
    %v3409 = vadd.f32 %v3345, %v3297
    %v3410 = vadd.f32 %v3346, %v3298
    %v3411 = vadd.f32 %v3347, %v3295
    %v3412 = vadd.f32 %v3348, %v3296
    %v3413 = vadd.f32 %v3349, %v3297
    %v3414 = vadd.f32 %v3350, %v3298
    %v3415 = vadd.f32 %v3351, %v3295
    %v3416 = vadd.f32 %v3352, %v3296
    %v3417 = vadd.f32 %v3353, %v3297
    %v3418 = vadd.f32 %v3354, %v3298
    %v3419 = vadd.f32 %v3355, %v3295
    %v3420 = vadd.f32 %v3356, %v3296
    %v3421 = vadd.f32 %v3357, %v3297
    %v3422 = vadd.f32 %v3358, %v3298
    %v3423 = vadd.f32 %v3359, %v3295
    %v3424 = vadd.f32 %v3360, %v3296
    %v3425 = vadd.f32 %v3361, %v3297
    %v3426 = vadd.f32 %v3362, %v3298
    %v3427 = vmax.f32 %v3363, 0.0
    %v3428 = vmax.f32 %v3364, 0.0
    %v3429 = vmax.f32 %v3365, 0.0
    %v3430 = vmax.f32 %v3366, 0.0
    %v3431 = vmax.f32 %v3367, 0.0
    %v3432 = vmax.f32 %v3368, 0.0
    %v3433 = vmax.f32 %v3369, 0.0
    %v3434 = vmax.f32 %v3370, 0.0
    %v3435 = vmax.f32 %v3371, 0.0
    %v3436 = vmax.f32 %v3372, 0.0
    %v3437 = vmax.f32 %v3373, 0.0
    %v3438 = vmax.f32 %v3374, 0.0
    %v3439 = vmax.f32 %v3375, 0.0
    %v3440 = vmax.f32 %v3376, 0.0
    %v3441 = vmax.f32 %v3377, 0.0
    %v3442 = vmax.f32 %v3378, 0.0
    %v3443 = vmax.f32 %v3379, 0.0
    %v3444 = vmax.f32 %v3380, 0.0
    %v3445 = vmax.f32 %v3381, 0.0
    %v3446 = vmax.f32 %v3382, 0.0
    %v3447 = vmax.f32 %v3383, 0.0
    %v3448 = vmax.f32 %v3384, 0.0
    %v3449 = vmax.f32 %v3385, 0.0
    %v3450 = vmax.f32 %v3386, 0.0
    %v3451 = vmax.f32 %v3387, 0.0
    %v3452 = vmax.f32 %v3388, 0.0
    %v3453 = vmax.f32 %v3389, 0.0
    %v3454 = vmax.f32 %v3390, 0.0
    %v3455 = vmax.f32 %v3391, 0.0
    %v3456 = vmax.f32 %v3392, 0.0
    %v3457 = vmax.f32 %v3393, 0.0
    %v3458 = vmax.f32 %v3394, 0.0
    %v3459 = vmax.f32 %v3395, 0.0
    %v3460 = vmax.f32 %v3396, 0.0
    %v3461 = vmax.f32 %v3397, 0.0
    %v3462 = vmax.f32 %v3398, 0.0
    %v3463 = vmax.f32 %v3399, 0.0
    %v3464 = vmax.f32 %v3400, 0.0
    %v3465 = vmax.f32 %v3401, 0.0
    %v3466 = vmax.f32 %v3402, 0.0
    %v3467 = vmax.f32 %v3403, 0.0
    %v3468 = vmax.f32 %v3404, 0.0
    %v3469 = vmax.f32 %v3405, 0.0
    %v3470 = vmax.f32 %v3406, 0.0
    %v3471 = vmax.f32 %v3407, 0.0
    %v3472 = vmax.f32 %v3408, 0.0
    %v3473 = vmax.f32 %v3409, 0.0
    %v3474 = vmax.f32 %v3410, 0.0
    %v3475 = vmax.f32 %v3411, 0.0
    %v3476 = vmax.f32 %v3412, 0.0
    %v3477 = vmax.f32 %v3413, 0.0
    %v3478 = vmax.f32 %v3414, 0.0
    %v3479 = vmax.f32 %v3415, 0.0
    %v3480 = vmax.f32 %v3416, 0.0
    %v3481 = vmax.f32 %v3417, 0.0
    %v3482 = vmax.f32 %v3418, 0.0
    %v3483 = vmax.f32 %v3419, 0.0
    %v3484 = vmax.f32 %v3420, 0.0
    %v3485 = vmax.f32 %v3421, 0.0
    %v3486 = vmax.f32 %v3422, 0.0
    %v3487 = vmax.f32 %v3423, 0.0
    %v3488 = vmax.f32 %v3424, 0.0
    %v3489 = vmax.f32 %v3425, 0.0
    %v3490 = vmax.f32 %v3426, 0.0
    %v3491 = vpack.c.bf16 %v3431, %v3427
    %v3492 = vpack.c.bf16 %v3432, %v3428
    %v3493 = vpack.c.bf16 %v3433, %v3429
    %v3494 = vpack.c.bf16 %v3434, %v3430
    %v3495 = vpack.c.bf16 %v3439, %v3435
    %v3496 = vpack.c.bf16 %v3440, %v3436
    %v3497 = vpack.c.bf16 %v3441, %v3437
    %v3498 = vpack.c.bf16 %v3442, %v3438
    %v3499 = vpack.c.bf16 %v3447, %v3443
    %v3500 = vpack.c.bf16 %v3448, %v3444
    %v3501 = vpack.c.bf16 %v3449, %v3445
    %v3502 = vpack.c.bf16 %v3450, %v3446
    %v3503 = vpack.c.bf16 %v3455, %v3451
    %v3504 = vpack.c.bf16 %v3456, %v3452
    %v3505 = vpack.c.bf16 %v3457, %v3453
    %v3506 = vpack.c.bf16 %v3458, %v3454
    %v3507 = vpack.c.bf16 %v3463, %v3459
    %v3508 = vpack.c.bf16 %v3464, %v3460
    %v3509 = vpack.c.bf16 %v3465, %v3461
    %v3510 = vpack.c.bf16 %v3466, %v3462
    %v3511 = vpack.c.bf16 %v3471, %v3467
    %v3512 = vpack.c.bf16 %v3472, %v3468
    %v3513 = vpack.c.bf16 %v3473, %v3469
    %v3514 = vpack.c.bf16 %v3474, %v3470
    %v3515 = vpack.c.bf16 %v3479, %v3475
    %v3516 = vpack.c.bf16 %v3480, %v3476
    %v3517 = vpack.c.bf16 %v3481, %v3477
    %v3518 = vpack.c.bf16 %v3482, %v3478
    %v3519 = vpack.c.bf16 %v3487, %v3483
    %v3520 = vpack.c.bf16 %v3488, %v3484
    %v3521 = vpack.c.bf16 %v3489, %v3485
    %v3522 = vpack.c.bf16 %v3490, %v3486
    %v3523 = vunpack.c.l.bf16 %v3491
    %v3524 = vunpack.c.l.bf16 %v3492
    %v3525 = vunpack.c.l.bf16 %v3493
    %v3526 = vunpack.c.l.bf16 %v3494
    %v3527 = vunpack.c.h.bf16 %v3491
    %v3528 = vunpack.c.h.bf16 %v3492
    %v3529 = vunpack.c.h.bf16 %v3493
    %v3530 = vunpack.c.h.bf16 %v3494
    %v3531 = vunpack.c.l.bf16 %v3495
    %v3532 = vunpack.c.l.bf16 %v3496
    %v3533 = vunpack.c.l.bf16 %v3497
    %v3534 = vunpack.c.l.bf16 %v3498
    %v3535 = vunpack.c.h.bf16 %v3495
    %v3536 = vunpack.c.h.bf16 %v3496
    %v3537 = vunpack.c.h.bf16 %v3497
    %v3538 = vunpack.c.h.bf16 %v3498
    %v3539 = vunpack.c.l.bf16 %v3499
    %v3540 = vunpack.c.l.bf16 %v3500
    %v3541 = vunpack.c.l.bf16 %v3501
    %v3542 = vunpack.c.l.bf16 %v3502
    %v3543 = vunpack.c.h.bf16 %v3499
    %v3544 = vunpack.c.h.bf16 %v3500
    %v3545 = vunpack.c.h.bf16 %v3501
    %v3546 = vunpack.c.h.bf16 %v3502
    %v3547 = vunpack.c.l.bf16 %v3503
    %v3548 = vunpack.c.l.bf16 %v3504
    %v3549 = vunpack.c.l.bf16 %v3505
    %v3550 = vunpack.c.l.bf16 %v3506
    %v3551 = vunpack.c.h.bf16 %v3503
    %v3552 = vunpack.c.h.bf16 %v3504
    %v3553 = vunpack.c.h.bf16 %v3505
    %v3554 = vunpack.c.h.bf16 %v3506
    %v3555 = vunpack.c.l.bf16 %v3507
    %v3556 = vunpack.c.l.bf16 %v3508
    %v3557 = vunpack.c.l.bf16 %v3509
    %v3558 = vunpack.c.l.bf16 %v3510
    %v3559 = vunpack.c.h.bf16 %v3507
    %v3560 = vunpack.c.h.bf16 %v3508
    %v3561 = vunpack.c.h.bf16 %v3509
    %v3562 = vunpack.c.h.bf16 %v3510
    %v3563 = vunpack.c.l.bf16 %v3511
    %v3564 = vunpack.c.l.bf16 %v3512
    %v3565 = vunpack.c.l.bf16 %v3513
    %v3566 = vunpack.c.l.bf16 %v3514
    %v3567 = vunpack.c.h.bf16 %v3511
    %v3568 = vunpack.c.h.bf16 %v3512
    %v3569 = vunpack.c.h.bf16 %v3513
    %v3570 = vunpack.c.h.bf16 %v3514
    %v3571 = vunpack.c.l.bf16 %v3515
    %v3572 = vunpack.c.l.bf16 %v3516
    %v3573 = vunpack.c.l.bf16 %v3517
    %v3574 = vunpack.c.l.bf16 %v3518
    %v3575 = vunpack.c.h.bf16 %v3515
    %v3576 = vunpack.c.h.bf16 %v3516
    %v3577 = vunpack.c.h.bf16 %v3517
    %v3578 = vunpack.c.h.bf16 %v3518
    %v3579 = vunpack.c.l.bf16 %v3519
    %v3580 = vunpack.c.l.bf16 %v3520
    %v3581 = vunpack.c.l.bf16 %v3521
    %v3582 = vunpack.c.l.bf16 %v3522
    %v3583 = vunpack.c.h.bf16 %v3519
    %v3584 = vunpack.c.h.bf16 %v3520
    %v3585 = vunpack.c.h.bf16 %v3521
    %v3586 = vunpack.c.h.bf16 %v3522
    %v3587 = vmax.f32 %v3523, %v3527
    %v3588 = vmax.f32 %v3587, %v3531
    %v3589 = vmax.f32 %v3588, %v3535
    %v3590 = vmax.f32 %v3589, %v3539
    %v3591 = vmax.f32 %v3590, %v3543
    %v3592 = vmax.f32 %v3591, %v3547
    %v3593 = vmax.f32 %v3592, %v3551
    %v3594 = vrot.slane %v3593, 4
    %v3595 = vmax.f32 %v3593, %v3594
    %v3596 = vrot.slane %v3595, 2
    %v3597 = vmax.f32 %v3595, %v3596
    %v3598 = vrot.slane %v3597, 1
    %v3599 = vmax.f32 %v3597, %v3598
    %v3600 = vmax.f32 %v3524, %v3528
    %v3601 = vmax.f32 %v3600, %v3532
    %v3602 = vmax.f32 %v3601, %v3536
    %v3603 = vmax.f32 %v3602, %v3540
    %v3604 = vmax.f32 %v3603, %v3544
    %v3605 = vmax.f32 %v3604, %v3548
    %v3606 = vmax.f32 %v3605, %v3552
    %v3607 = vrot.slane %v3606, 4
    %v3608 = vmax.f32 %v3606, %v3607
    %v3609 = vrot.slane %v3608, 2
    %v3610 = vmax.f32 %v3608, %v3609
    %v3611 = vrot.slane %v3610, 1
    %v3612 = vmax.f32 %v3610, %v3611
    %v3613 = vmax.f32 %v3525, %v3529
    %v3614 = vmax.f32 %v3613, %v3533
    %v3615 = vmax.f32 %v3614, %v3537
    %v3616 = vmax.f32 %v3615, %v3541
    %v3617 = vmax.f32 %v3616, %v3545
    %v3618 = vmax.f32 %v3617, %v3549
    %v3619 = vmax.f32 %v3618, %v3553
    %v3620 = vrot.slane %v3619, 4
    %v3621 = vmax.f32 %v3619, %v3620
    %v3622 = vrot.slane %v3621, 2
    %v3623 = vmax.f32 %v3621, %v3622
    %v3624 = vrot.slane %v3623, 1
    %v3625 = vmax.f32 %v3623, %v3624
    %v3626 = vmax.f32 %v3526, %v3530
    %v3627 = vmax.f32 %v3626, %v3534
    %v3628 = vmax.f32 %v3627, %v3538
    %v3629 = vmax.f32 %v3628, %v3542
    %v3630 = vmax.f32 %v3629, %v3546
    %v3631 = vmax.f32 %v3630, %v3550
    %v3632 = vmax.f32 %v3631, %v3554
    %v3633 = vrot.slane %v3632, 4
    %v3634 = vmax.f32 %v3632, %v3633
    %v3635 = vrot.slane %v3634, 2
    %v3636 = vmax.f32 %v3634, %v3635
    %v3637 = vrot.slane %v3636, 1
    %v3638 = vmax.f32 %v3636, %v3637
    %v3639 = vmax.f32 %v3555, %v3559
    %v3640 = vmax.f32 %v3639, %v3563
    %v3641 = vmax.f32 %v3640, %v3567
    %v3642 = vmax.f32 %v3641, %v3571
    %v3643 = vmax.f32 %v3642, %v3575
    %v3644 = vmax.f32 %v3643, %v3579
    %v3645 = vmax.f32 %v3644, %v3583
    %v3646 = vrot.slane %v3645, 4
    %v3647 = vmax.f32 %v3645, %v3646
    %v3648 = vrot.slane %v3647, 2
    %v3649 = vmax.f32 %v3647, %v3648
    %v3650 = vrot.slane %v3649, 1
    %v3651 = vmax.f32 %v3649, %v3650
    %v3652 = vmax.f32 %v3556, %v3560
    %v3653 = vmax.f32 %v3652, %v3564
    %v3654 = vmax.f32 %v3653, %v3568
    %v3655 = vmax.f32 %v3654, %v3572
    %v3656 = vmax.f32 %v3655, %v3576
    %v3657 = vmax.f32 %v3656, %v3580
    %v3658 = vmax.f32 %v3657, %v3584
    %v3659 = vrot.slane %v3658, 4
    %v3660 = vmax.f32 %v3658, %v3659
    %v3661 = vrot.slane %v3660, 2
    %v3662 = vmax.f32 %v3660, %v3661
    %v3663 = vrot.slane %v3662, 1
    %v3664 = vmax.f32 %v3662, %v3663
    %v3665 = vmax.f32 %v3557, %v3561
    %v3666 = vmax.f32 %v3665, %v3565
    %v3667 = vmax.f32 %v3666, %v3569
    %v3668 = vmax.f32 %v3667, %v3573
    %v3669 = vmax.f32 %v3668, %v3577
    %v3670 = vmax.f32 %v3669, %v3581
    %v3671 = vmax.f32 %v3670, %v3585
    %v3672 = vrot.slane %v3671, 4
    %v3673 = vmax.f32 %v3671, %v3672
    %v3674 = vrot.slane %v3673, 2
    %v3675 = vmax.f32 %v3673, %v3674
    %v3676 = vrot.slane %v3675, 1
    %v3677 = vmax.f32 %v3675, %v3676
    %v3678 = vmax.f32 %v3558, %v3562
    %v3679 = vmax.f32 %v3678, %v3566
    %v3680 = vmax.f32 %v3679, %v3570
    %v3681 = vmax.f32 %v3680, %v3574
    %v3682 = vmax.f32 %v3681, %v3578
    %v3683 = vmax.f32 %v3682, %v3582
    %v3684 = vmax.f32 %v3683, %v3586
    %v3685 = vrot.slane %v3684, 4
    %v3686 = vmax.f32 %v3684, %v3685
    %v3687 = vrot.slane %v3686, 2
    %v3688 = vmax.f32 %v3686, %v3687
    %v3689 = vrot.slane %v3688, 1
    %v3690 = vmax.f32 %v3688, %v3689
    %v3691 = vpack.c.bf16 %v3612, %v3599
    %v3692 = vpack.c.bf16 %v3638, %v3625
    %v3693 = vpack.c.bf16 %v3664, %v3651
    %v3694 = vpack.c.bf16 %v3690, %v3677
    %v3695 = vunpack.c.l.bf16 %v3691
    %v3696 = vunpack.c.h.bf16 %v3691
    %v3697 = vunpack.c.l.bf16 %v3692
    %v3698 = vunpack.c.h.bf16 %v3692
    %v3699 = vunpack.c.l.bf16 %v3693
    %v3700 = vunpack.c.h.bf16 %v3693
    %v3701 = vunpack.c.l.bf16 %v3694
    %v3702 = vunpack.c.h.bf16 %v3694
    %v3711 = vrot.slane %v3696, 6
    %v3712 = vrot.slane %v3697, 4
    %v3713 = vrot.slane %v3698, 2
    %v3714 = vrot.slane %v3700, 6
    %v3715 = vrot.slane %v3701, 4
    %v3716 = vrot.slane %v3702, 2
    %v3717 = vsel %vm206, %v3695, %v3711
    %vm3718 = vcmask 1045508
    %v3719 = vsel %vm3718, %v3712, %v3713
    %vm3720 = vcmask 1043456
    %v3721 = vsel %vm3720, %v3717, %v3719
    %v3722 = vsel %vm206, %v3699, %v3714
    %v3723 = vsel %vm3718, %v3715, %v3716
    %v3724 = vsel %vm3720, %v3722, %v3723
    %vm3725 = vcmask 1044484
    %v3726 = vsel %vm3725, %v3721, %v3721
    %vm3727 = vcmask 1046534
    %v3728 = vsel %vm3727, %v3721, %v3726
    %v3729 = vrot.slane %v3724, 7
    %vm3730 = vcmask 1041409
    %v3731 = vsel %vm3730, %v3729, %v3728
    %vm3732 = vcmask 1043459
    %v3733 = vsel %vm3732, %v3729, %v3731
    %vm3734 = vcmask 1045509
    %v3735 = vsel %vm3734, %v3729, %v3733
    %vm3736 = vcmask 1047559
    %v3737 = vsel %vm3736, %v3729, %v3735
    %3739 = vst [vmem:[%s7] sm:$0xff] %v3737
    // Predicated region
    $region50: #{_lambda_.2} parent=1 // pred_check
      _
    $region51: #{_lambda_.2} parent=1 // pred_check_branch
      %3741 = sbr.rel (0) target = $region53
    $region52: #{_lambda_.2} parent=1 // pred_region
      _
    $region53: #{_lambda_.2} parent=1 // pred_fallthru
      _
    // Predicated region
    $region54: #{_lambda_.2} parent=1 // pred_check
      _
    $region55: #{_lambda_.2} parent=1 // pred_check_branch
      %3743 = sbr.rel (0) target = $region57
    $region56: #{_lambda_.2} parent=1 // pred_region
      _
    $region57: #{_lambda_.2} parent=1 // pred_fallthru
      _
    %3744 = vsyncpa [#allocation3], 1
    %3745 = vsyncpa [#allocation5], 1
    %3746 = vsyncpa [#allocation8], 1

// kernel: _lambda_.3
$region0: #{_lambda_.3}
  #allocation0 [shape = 'u32[]', space=smem, size = 0x4, offset = 0x4, fixed_abs, tag = 'smem constant byte address 0x4 - core index']
  #allocation1 [shape = 'u32[72,128]{1,0:T(1,128)}', space=vmem, size = 0x9000, scoped, tag = 'internal scratch']
  %s0 = inlined_call_operand.vmem [shape: f32[2,512], index: 0, kind: input, shape index: {}]
  %s1 = inlined_call_operand.hbm [shape: bf16[512,1024], index: 1, kind: input, shape index: {}]
  %s2 = inlined_call_operand.hbm [shape: bf16[1024,256], index: 2, kind: input, shape index: {}]
  %s3 = inlined_call_operand.vmem [shape: f32[1,256], index: 3, kind: input, shape index: {}]
  %s4 = inlined_call_operand.hbm [shape: f32[2,256], index: 4, kind: output, shape index: {}]
  %s5 = sld [smem:[#allocation0]]
  $region34: #{_lambda_.3} parent=0
    _
  %s7 = ssub.s32 1, %s5
  %s8 = scalar_select 0, %s7, %s5
  $region1: #{_lambda_.3} parent=0
    #allocation2 [shape = 'u8[1048576]{0}', space=vmem, size = 0x100000, scoped, tag = 'input window, operand 1, single buffered']
    #allocation3 [shape = 's32[1]{0}', space=sflag, size = 0x4, scoped, tag = 'scoped memory for _lambda_.3']
    #allocation4 [shape = 's32[1]{0}', space=sflag, size = 0x4, scoped, tag = 'scoped memory for _lambda_.3']
    #allocation5 [shape = 'u8[524288]{0}', space=vmem, size = 0x80000, scoped, tag = 'input window, operand 2, single buffered']
    #allocation6 [shape = 's32[1]{0}', space=sflag, size = 0x4, scoped, tag = 'scoped memory for _lambda_.3']
    #allocation7 [shape = 'u8[2048]{0}', space=vmem, size = 0x800, scoped, tag = 'output window, operand 0, single buffered']
    %9 = vsyncpa [#allocation3], 0
    %10 = vsyncpa [#allocation6], 0
    %11 = vsyncpa [#allocation4], 0
    // Predicated region
    $region2: #{_lambda_.3} parent=1 // pred_check
      _
    $region3: #{_lambda_.3} parent=1 // pred_check_branch
      %13 = sbr.rel (0) target = $region5
    $region4: #{_lambda_.3} parent=1 // pred_region
      _
    $region5: #{_lambda_.3} parent=1 // pred_fallthru
      _
    // Predicated region
    $region6: #{_lambda_.3} parent=1 // pred_check
      _
    $region7: #{_lambda_.3} parent=1 // pred_check_branch
      %15 = sbr.rel (0) target = $region9
    $region8: #{_lambda_.3} parent=1 // pred_region
      %17 = vsyncadd [#allocation3], 0
      %s18 = sshll.u32 %s1, 4
      %s19 = int_to_ptr.hbm [resolvable:$true] %s18
      %s20 = sshll.u32 [#allocation2], 4
      %s21 = int_to_ptr.vmem [resolvable:$true] %s20
      %26 = dma.hbm_to_vmem [thread:$0]  %s19, 32768, %s21, [#allocation3], 512, 512, 32
    $region9: #{_lambda_.3} parent=1 // pred_fallthru
      _
    // Predicated region
    $region10: #{_lambda_.3} parent=1 // pred_check
      _
    $region11: #{_lambda_.3} parent=1 // pred_check_branch
      %28 = sbr.rel (0) target = $region13
    $region12: #{_lambda_.3} parent=1 // pred_region
      %30 = vsyncadd [#allocation6], 0
      %s31 = sshll.u32 %s2, 4
      %s32 = int_to_ptr.hbm [resolvable:$true] %s31
      %s33 = sshll.u32 [#allocation5], 4
      %s34 = int_to_ptr.vmem [resolvable:$true] %s33
      %39 = dma.hbm_to_vmem [thread:$0]  %s32, 16384, %s34, [#allocation6], 128, 128, 8
    $region13: #{_lambda_.3} parent=1 // pred_fallthru
      _
    // Predicated region
    $region14: #{_lambda_.3} parent=1 // pred_check
      _
    $region15: #{_lambda_.3} parent=1 // pred_check_branch
      %41 = sbr.rel (0) target = $region17
    $region16: #{_lambda_.3} parent=1 // pred_region
      _
    $region17: #{_lambda_.3} parent=1 // pred_fallthru
      _
    // Predicated region
    $region18: #{_lambda_.3} parent=1 // pred_check
      _
    $region19: #{_lambda_.3} parent=1 // pred_check_branch
      %43 = sbr.rel (0) target = $region21
    $region20: #{_lambda_.3} parent=1 // pred_region
      %45 = dma.done [#allocation3], 32768
    $region21: #{_lambda_.3} parent=1 // pred_fallthru
      _
    // Predicated region
    $region22: #{_lambda_.3} parent=1 // pred_check
      _
    $region23: #{_lambda_.3} parent=1 // pred_check_branch
      %47 = sbr.rel (0) target = $region25
    $region24: #{_lambda_.3} parent=1 // pred_region
      %49 = dma.done [#allocation6], 16384
    $region25: #{_lambda_.3} parent=1 // pred_fallthru
      _
    %v50 = vld [vmem:[%s0] sm:$0xff]
    %52 = vst [vmem:[#allocation1] ss:$4 sm:$0xff] %v50
    %v53 = vld.sshfl [vmem:[#allocation1] sm:$0xff pattern:$0x73625140]
    %v54 = vld.sshfl [vmem:[#allocation1 + $0x8] sm:$0xff pattern:$0x73625140]
    %v55 = vld.sshfl [vmem:[#allocation1 + $0x10] sm:$0xff pattern:$0x73625140]
    %v56 = vld.sshfl [vmem:[#allocation1 + $0x18] sm:$0xff pattern:$0x73625140]
    %v61 = vpack.c.bf16 %v53, %v53
    %v62 = vpack.c.bf16 %v54, %v54
    %v63 = vpack.c.bf16 %v55, %v55
    %v64 = vpack.c.bf16 %v56, %v56
    %v65 = vld [vmem:[#allocation2] sm:$0xff]
    %v66 = vld [vmem:[#allocation2 + $0x8] sm:$0xff]
    %v67 = vld [vmem:[#allocation2 + $0x10] sm:$0xff]
    %v68 = vld [vmem:[#allocation2 + $0x18] sm:$0xff]
    %v69 = vld [vmem:[#allocation2 + $0x20] sm:$0xff]
    %v70 = vld [vmem:[#allocation2 + $0x28] sm:$0xff]
    %v71 = vld [vmem:[#allocation2 + $0x30] sm:$0xff]
    %v72 = vld [vmem:[#allocation2 + $0x38] sm:$0xff]
    %v73 = vld [vmem:[#allocation2 + $0x40] sm:$0xff]
    %v74 = vld [vmem:[#allocation2 + $0x48] sm:$0xff]
    %v75 = vld [vmem:[#allocation2 + $0x50] sm:$0xff]
    %v76 = vld [vmem:[#allocation2 + $0x58] sm:$0xff]
    %v77 = vld [vmem:[#allocation2 + $0x60] sm:$0xff]
    %v78 = vld [vmem:[#allocation2 + $0x68] sm:$0xff]
    %v79 = vld [vmem:[#allocation2 + $0x70] sm:$0xff]
    %v80 = vld [vmem:[#allocation2 + $0x78] sm:$0xff]
    %v81 = vld [vmem:[#allocation2 + $0x80] sm:$0xff]
    %v82 = vld [vmem:[#allocation2 + $0x88] sm:$0xff]
    %v83 = vld [vmem:[#allocation2 + $0x90] sm:$0xff]
    %v84 = vld [vmem:[#allocation2 + $0x98] sm:$0xff]
    %v85 = vld [vmem:[#allocation2 + $0xa0] sm:$0xff]
    %v86 = vld [vmem:[#allocation2 + $0xa8] sm:$0xff]
    %v87 = vld [vmem:[#allocation2 + $0xb0] sm:$0xff]
    %v88 = vld [vmem:[#allocation2 + $0xb8] sm:$0xff]
    %v89 = vld [vmem:[#allocation2 + $0xc0] sm:$0xff]
    %v90 = vld [vmem:[#allocation2 + $0xc8] sm:$0xff]
    %v91 = vld [vmem:[#allocation2 + $0xd0] sm:$0xff]
    %v92 = vld [vmem:[#allocation2 + $0xd8] sm:$0xff]
    %v93 = vld [vmem:[#allocation2 + $0xe0] sm:$0xff]
    %v94 = vld [vmem:[#allocation2 + $0xe8] sm:$0xff]
    %v95 = vld [vmem:[#allocation2 + $0xf0] sm:$0xff]
    %v96 = vld [vmem:[#allocation2 + $0xf8] sm:$0xff]
    %v97 = vld [vmem:[#allocation2 + $0x100] sm:$0xff]
    %v98 = vld [vmem:[#allocation2 + $0x108] sm:$0xff]
    %v99 = vld [vmem:[#allocation2 + $0x110] sm:$0xff]
    %v100 = vld [vmem:[#allocation2 + $0x118] sm:$0xff]
    %v101 = vld [vmem:[#allocation2 + $0x120] sm:$0xff]
    %v102 = vld [vmem:[#allocation2 + $0x128] sm:$0xff]
    %v103 = vld [vmem:[#allocation2 + $0x130] sm:$0xff]
    %v104 = vld [vmem:[#allocation2 + $0x138] sm:$0xff]
    %v105 = vld [vmem:[#allocation2 + $0x140] sm:$0xff]
    %v106 = vld [vmem:[#allocation2 + $0x148] sm:$0xff]
    %v107 = vld [vmem:[#allocation2 + $0x150] sm:$0xff]
    %v108 = vld [vmem:[#allocation2 + $0x158] sm:$0xff]
    %v109 = vld [vmem:[#allocation2 + $0x160] sm:$0xff]
    %v110 = vld [vmem:[#allocation2 + $0x168] sm:$0xff]
    %v111 = vld [vmem:[#allocation2 + $0x170] sm:$0xff]
    %v112 = vld [vmem:[#allocation2 + $0x178] sm:$0xff]
    %v113 = vld [vmem:[#allocation2 + $0x180] sm:$0xff]
    %v114 = vld [vmem:[#allocation2 + $0x188] sm:$0xff]
    %v115 = vld [vmem:[#allocation2 + $0x190] sm:$0xff]
    %v116 = vld [vmem:[#allocation2 + $0x198] sm:$0xff]
    %v117 = vld [vmem:[#allocation2 + $0x1a0] sm:$0xff]
    %v118 = vld [vmem:[#allocation2 + $0x1a8] sm:$0xff]
    %v119 = vld [vmem:[#allocation2 + $0x1b0] sm:$0xff]
    %v120 = vld [vmem:[#allocation2 + $0x1b8] sm:$0xff]
    %v121 = vld [vmem:[#allocation2 + $0x1c0] sm:$0xff]
    %v122 = vld [vmem:[#allocation2 + $0x1c8] sm:$0xff]
    %v123 = vld [vmem:[#allocation2 + $0x1d0] sm:$0xff]
    %v124 = vld [vmem:[#allocation2 + $0x1d8] sm:$0xff]
    %v125 = vld [vmem:[#allocation2 + $0x1e0] sm:$0xff]
    %v126 = vld [vmem:[#allocation2 + $0x1e8] sm:$0xff]
    %v127 = vld [vmem:[#allocation2 + $0x1f0] sm:$0xff]
    %v128 = vld [vmem:[#allocation2 + $0x1f8] sm:$0xff]
    %v129 = vld [vmem:[#allocation2 + $0x200] sm:$0xff]
    %v130 = vld [vmem:[#allocation2 + $0x208] sm:$0xff]
    %v131 = vld [vmem:[#allocation2 + $0x210] sm:$0xff]
    %v132 = vld [vmem:[#allocation2 + $0x218] sm:$0xff]
    %v133 = vld [vmem:[#allocation2 + $0x220] sm:$0xff]
    %v134 = vld [vmem:[#allocation2 + $0x228] sm:$0xff]
    %v135 = vld [vmem:[#allocation2 + $0x230] sm:$0xff]
    %v136 = vld [vmem:[#allocation2 + $0x238] sm:$0xff]
    %v137 = vld [vmem:[#allocation2 + $0x240] sm:$0xff]
    %v138 = vld [vmem:[#allocation2 + $0x248] sm:$0xff]
    %v139 = vld [vmem:[#allocation2 + $0x250] sm:$0xff]
    %v140 = vld [vmem:[#allocation2 + $0x258] sm:$0xff]
    %v141 = vld [vmem:[#allocation2 + $0x260] sm:$0xff]
    %v142 = vld [vmem:[#allocation2 + $0x268] sm:$0xff]
    %v143 = vld [vmem:[#allocation2 + $0x270] sm:$0xff]
    %v144 = vld [vmem:[#allocation2 + $0x278] sm:$0xff]
    %v145 = vld [vmem:[#allocation2 + $0x280] sm:$0xff]
    %v146 = vld [vmem:[#allocation2 + $0x288] sm:$0xff]
    %v147 = vld [vmem:[#allocation2 + $0x290] sm:$0xff]
    %v148 = vld [vmem:[#allocation2 + $0x298] sm:$0xff]
    %v149 = vld [vmem:[#allocation2 + $0x2a0] sm:$0xff]
    %v150 = vld [vmem:[#allocation2 + $0x2a8] sm:$0xff]
    %v151 = vld [vmem:[#allocation2 + $0x2b0] sm:$0xff]
    %v152 = vld [vmem:[#allocation2 + $0x2b8] sm:$0xff]
    %v153 = vld [vmem:[#allocation2 + $0x2c0] sm:$0xff]
    %v154 = vld [vmem:[#allocation2 + $0x2c8] sm:$0xff]
    %v155 = vld [vmem:[#allocation2 + $0x2d0] sm:$0xff]
    %v156 = vld [vmem:[#allocation2 + $0x2d8] sm:$0xff]
    %v157 = vld [vmem:[#allocation2 + $0x2e0] sm:$0xff]
    %v158 = vld [vmem:[#allocation2 + $0x2e8] sm:$0xff]
    %v159 = vld [vmem:[#allocation2 + $0x2f0] sm:$0xff]
    %v160 = vld [vmem:[#allocation2 + $0x2f8] sm:$0xff]
    %v161 = vld [vmem:[#allocation2 + $0x300] sm:$0xff]
    %v162 = vld [vmem:[#allocation2 + $0x308] sm:$0xff]
    %v163 = vld [vmem:[#allocation2 + $0x310] sm:$0xff]
    %v164 = vld [vmem:[#allocation2 + $0x318] sm:$0xff]
    %v165 = vld [vmem:[#allocation2 + $0x320] sm:$0xff]
    %v166 = vld [vmem:[#allocation2 + $0x328] sm:$0xff]
    %v167 = vld [vmem:[#allocation2 + $0x330] sm:$0xff]
    %v168 = vld [vmem:[#allocation2 + $0x338] sm:$0xff]
    %v169 = vld [vmem:[#allocation2 + $0x340] sm:$0xff]
    %v170 = vld [vmem:[#allocation2 + $0x348] sm:$0xff]
    %v171 = vld [vmem:[#allocation2 + $0x350] sm:$0xff]
    %v172 = vld [vmem:[#allocation2 + $0x358] sm:$0xff]
    %v173 = vld [vmem:[#allocation2 + $0x360] sm:$0xff]
    %v174 = vld [vmem:[#allocation2 + $0x368] sm:$0xff]
    %v175 = vld [vmem:[#allocation2 + $0x370] sm:$0xff]
    %v176 = vld [vmem:[#allocation2 + $0x378] sm:$0xff]
    %v177 = vld [vmem:[#allocation2 + $0x380] sm:$0xff]
    %v178 = vld [vmem:[#allocation2 + $0x388] sm:$0xff]
    %v179 = vld [vmem:[#allocation2 + $0x390] sm:$0xff]
    %v180 = vld [vmem:[#allocation2 + $0x398] sm:$0xff]
    %v181 = vld [vmem:[#allocation2 + $0x3a0] sm:$0xff]
    %v182 = vld [vmem:[#allocation2 + $0x3a8] sm:$0xff]
    %v183 = vld [vmem:[#allocation2 + $0x3b0] sm:$0xff]
    %v184 = vld [vmem:[#allocation2 + $0x3b8] sm:$0xff]
    %v185 = vld [vmem:[#allocation2 + $0x3c0] sm:$0xff]
    %v186 = vld [vmem:[#allocation2 + $0x3c8] sm:$0xff]
    %v187 = vld [vmem:[#allocation2 + $0x3d0] sm:$0xff]
    %v188 = vld [vmem:[#allocation2 + $0x3d8] sm:$0xff]
    %v189 = vld [vmem:[#allocation2 + $0x3e0] sm:$0xff]
    %v190 = vld [vmem:[#allocation2 + $0x3e8] sm:$0xff]
    %v191 = vld [vmem:[#allocation2 + $0x3f0] sm:$0xff]
    %v192 = vld [vmem:[#allocation2 + $0x3f8] sm:$0xff]
    %v193 = vld [vmem:[#allocation2 + $0x400] sm:$0xff]
    %v194 = vld [vmem:[#allocation2 + $0x408] sm:$0xff]
    %v195 = vld [vmem:[#allocation2 + $0x410] sm:$0xff]
    %v196 = vld [vmem:[#allocation2 + $0x418] sm:$0xff]
    %v197 = vld [vmem:[#allocation2 + $0x420] sm:$0xff]
    %v198 = vld [vmem:[#allocation2 + $0x428] sm:$0xff]
    %v199 = vld [vmem:[#allocation2 + $0x430] sm:$0xff]
    %v200 = vld [vmem:[#allocation2 + $0x438] sm:$0xff]
    %v201 = vld [vmem:[#allocation2 + $0x440] sm:$0xff]
    %v202 = vld [vmem:[#allocation2 + $0x448] sm:$0xff]
    %v203 = vld [vmem:[#allocation2 + $0x450] sm:$0xff]
    %v204 = vld [vmem:[#allocation2 + $0x458] sm:$0xff]
    %v205 = vld [vmem:[#allocation2 + $0x460] sm:$0xff]
    %v206 = vld [vmem:[#allocation2 + $0x468] sm:$0xff]
    %v207 = vld [vmem:[#allocation2 + $0x470] sm:$0xff]
    %v208 = vld [vmem:[#allocation2 + $0x478] sm:$0xff]
    %v209 = vld [vmem:[#allocation2 + $0x480] sm:$0xff]
    %v210 = vld [vmem:[#allocation2 + $0x488] sm:$0xff]
    %v211 = vld [vmem:[#allocation2 + $0x490] sm:$0xff]
    %v212 = vld [vmem:[#allocation2 + $0x498] sm:$0xff]
    %v213 = vld [vmem:[#allocation2 + $0x4a0] sm:$0xff]
    %v214 = vld [vmem:[#allocation2 + $0x4a8] sm:$0xff]
    %v215 = vld [vmem:[#allocation2 + $0x4b0] sm:$0xff]
    %v216 = vld [vmem:[#allocation2 + $0x4b8] sm:$0xff]
    %v217 = vld [vmem:[#allocation2 + $0x4c0] sm:$0xff]
    %v218 = vld [vmem:[#allocation2 + $0x4c8] sm:$0xff]
    %v219 = vld [vmem:[#allocation2 + $0x4d0] sm:$0xff]
    %v220 = vld [vmem:[#allocation2 + $0x4d8] sm:$0xff]
    %v221 = vld [vmem:[#allocation2 + $0x4e0] sm:$0xff]
    %v222 = vld [vmem:[#allocation2 + $0x4e8] sm:$0xff]
    %v223 = vld [vmem:[#allocation2 + $0x4f0] sm:$0xff]
    %v224 = vld [vmem:[#allocation2 + $0x4f8] sm:$0xff]
    %v225 = vld [vmem:[#allocation2 + $0x500] sm:$0xff]
    %v226 = vld [vmem:[#allocation2 + $0x508] sm:$0xff]
    %v227 = vld [vmem:[#allocation2 + $0x510] sm:$0xff]
    %v228 = vld [vmem:[#allocation2 + $0x518] sm:$0xff]
    %v229 = vld [vmem:[#allocation2 + $0x520] sm:$0xff]
    %v230 = vld [vmem:[#allocation2 + $0x528] sm:$0xff]
    %v231 = vld [vmem:[#allocation2 + $0x530] sm:$0xff]
    %v232 = vld [vmem:[#allocation2 + $0x538] sm:$0xff]
    %v233 = vld [vmem:[#allocation2 + $0x540] sm:$0xff]
    %v234 = vld [vmem:[#allocation2 + $0x548] sm:$0xff]
    %v235 = vld [vmem:[#allocation2 + $0x550] sm:$0xff]
    %v236 = vld [vmem:[#allocation2 + $0x558] sm:$0xff]
    %v237 = vld [vmem:[#allocation2 + $0x560] sm:$0xff]
    %v238 = vld [vmem:[#allocation2 + $0x568] sm:$0xff]
    %v239 = vld [vmem:[#allocation2 + $0x570] sm:$0xff]
    %v240 = vld [vmem:[#allocation2 + $0x578] sm:$0xff]
    %v241 = vld [vmem:[#allocation2 + $0x580] sm:$0xff]
    %v242 = vld [vmem:[#allocation2 + $0x588] sm:$0xff]
    %v243 = vld [vmem:[#allocation2 + $0x590] sm:$0xff]
    %v244 = vld [vmem:[#allocation2 + $0x598] sm:$0xff]
    %v245 = vld [vmem:[#allocation2 + $0x5a0] sm:$0xff]
    %v246 = vld [vmem:[#allocation2 + $0x5a8] sm:$0xff]
    %v247 = vld [vmem:[#allocation2 + $0x5b0] sm:$0xff]
    %v248 = vld [vmem:[#allocation2 + $0x5b8] sm:$0xff]
    %v249 = vld [vmem:[#allocation2 + $0x5c0] sm:$0xff]
    %v250 = vld [vmem:[#allocation2 + $0x5c8] sm:$0xff]
    %v251 = vld [vmem:[#allocation2 + $0x5d0] sm:$0xff]
    %v252 = vld [vmem:[#allocation2 + $0x5d8] sm:$0xff]
    %v253 = vld [vmem:[#allocation2 + $0x5e0] sm:$0xff]
    %v254 = vld [vmem:[#allocation2 + $0x5e8] sm:$0xff]
    %v255 = vld [vmem:[#allocation2 + $0x5f0] sm:$0xff]
    %v256 = vld [vmem:[#allocation2 + $0x5f8] sm:$0xff]
    %v257 = vld [vmem:[#allocation2 + $0x600] sm:$0xff]
    %v258 = vld [vmem:[#allocation2 + $0x608] sm:$0xff]
    %v259 = vld [vmem:[#allocation2 + $0x610] sm:$0xff]
    %v260 = vld [vmem:[#allocation2 + $0x618] sm:$0xff]
    %v261 = vld [vmem:[#allocation2 + $0x620] sm:$0xff]
    %v262 = vld [vmem:[#allocation2 + $0x628] sm:$0xff]
    %v263 = vld [vmem:[#allocation2 + $0x630] sm:$0xff]
    %v264 = vld [vmem:[#allocation2 + $0x638] sm:$0xff]
    %v265 = vld [vmem:[#allocation2 + $0x640] sm:$0xff]
    %v266 = vld [vmem:[#allocation2 + $0x648] sm:$0xff]
    %v267 = vld [vmem:[#allocation2 + $0x650] sm:$0xff]
    %v268 = vld [vmem:[#allocation2 + $0x658] sm:$0xff]
    %v269 = vld [vmem:[#allocation2 + $0x660] sm:$0xff]
    %v270 = vld [vmem:[#allocation2 + $0x668] sm:$0xff]
    %v271 = vld [vmem:[#allocation2 + $0x670] sm:$0xff]
    %v272 = vld [vmem:[#allocation2 + $0x678] sm:$0xff]
    %v273 = vld [vmem:[#allocation2 + $0x680] sm:$0xff]
    %v274 = vld [vmem:[#allocation2 + $0x688] sm:$0xff]
    %v275 = vld [vmem:[#allocation2 + $0x690] sm:$0xff]
    %v276 = vld [vmem:[#allocation2 + $0x698] sm:$0xff]
    %v277 = vld [vmem:[#allocation2 + $0x6a0] sm:$0xff]
    %v278 = vld [vmem:[#allocation2 + $0x6a8] sm:$0xff]
    %v279 = vld [vmem:[#allocation2 + $0x6b0] sm:$0xff]
    %v280 = vld [vmem:[#allocation2 + $0x6b8] sm:$0xff]
    %v281 = vld [vmem:[#allocation2 + $0x6c0] sm:$0xff]
    %v282 = vld [vmem:[#allocation2 + $0x6c8] sm:$0xff]
    %v283 = vld [vmem:[#allocation2 + $0x6d0] sm:$0xff]
    %v284 = vld [vmem:[#allocation2 + $0x6d8] sm:$0xff]
    %v285 = vld [vmem:[#allocation2 + $0x6e0] sm:$0xff]
    %v286 = vld [vmem:[#allocation2 + $0x6e8] sm:$0xff]
    %v287 = vld [vmem:[#allocation2 + $0x6f0] sm:$0xff]
    %v288 = vld [vmem:[#allocation2 + $0x6f8] sm:$0xff]
    %v289 = vld [vmem:[#allocation2 + $0x700] sm:$0xff]
    %v290 = vld [vmem:[#allocation2 + $0x708] sm:$0xff]
    %v291 = vld [vmem:[#allocation2 + $0x710] sm:$0xff]
    %v292 = vld [vmem:[#allocation2 + $0x718] sm:$0xff]
    %v293 = vld [vmem:[#allocation2 + $0x720] sm:$0xff]
    %v294 = vld [vmem:[#allocation2 + $0x728] sm:$0xff]
    %v295 = vld [vmem:[#allocation2 + $0x730] sm:$0xff]
    %v296 = vld [vmem:[#allocation2 + $0x738] sm:$0xff]
    %v297 = vld [vmem:[#allocation2 + $0x740] sm:$0xff]
    %v298 = vld [vmem:[#allocation2 + $0x748] sm:$0xff]
    %v299 = vld [vmem:[#allocation2 + $0x750] sm:$0xff]
    %v300 = vld [vmem:[#allocation2 + $0x758] sm:$0xff]
    %v301 = vld [vmem:[#allocation2 + $0x760] sm:$0xff]
    %v302 = vld [vmem:[#allocation2 + $0x768] sm:$0xff]
    %v303 = vld [vmem:[#allocation2 + $0x770] sm:$0xff]
    %v304 = vld [vmem:[#allocation2 + $0x778] sm:$0xff]
    %v305 = vld [vmem:[#allocation2 + $0x780] sm:$0xff]
    %v306 = vld [vmem:[#allocation2 + $0x788] sm:$0xff]
    %v307 = vld [vmem:[#allocation2 + $0x790] sm:$0xff]
    %v308 = vld [vmem:[#allocation2 + $0x798] sm:$0xff]
    %v309 = vld [vmem:[#allocation2 + $0x7a0] sm:$0xff]
    %v310 = vld [vmem:[#allocation2 + $0x7a8] sm:$0xff]
    %v311 = vld [vmem:[#allocation2 + $0x7b0] sm:$0xff]
    %v312 = vld [vmem:[#allocation2 + $0x7b8] sm:$0xff]
    %v313 = vld [vmem:[#allocation2 + $0x7c0] sm:$0xff]
    %v314 = vld [vmem:[#allocation2 + $0x7c8] sm:$0xff]
    %v315 = vld [vmem:[#allocation2 + $0x7d0] sm:$0xff]
    %v316 = vld [vmem:[#allocation2 + $0x7d8] sm:$0xff]
    %v317 = vld [vmem:[#allocation2 + $0x7e0] sm:$0xff]
    %v318 = vld [vmem:[#allocation2 + $0x7e8] sm:$0xff]
    %v319 = vld [vmem:[#allocation2 + $0x7f0] sm:$0xff]
    %v320 = vld [vmem:[#allocation2 + $0x7f8] sm:$0xff]
    %v577 = vunpack.c.l.b16 %v65
    %v578 = vunpack.c.h.b16 %v65
    %v579 = vunpack.c.l.b16 %v66
    %v580 = vunpack.c.h.b16 %v66
    %v581 = vunpack.c.l.b16 %v67
    %v582 = vunpack.c.h.b16 %v67
    %v583 = vunpack.c.l.b16 %v68
    %v584 = vunpack.c.h.b16 %v68
    %v585 = vunpack.c.l.b16 %v69
    %v586 = vunpack.c.h.b16 %v69
    %v587 = vunpack.c.l.b16 %v70
    %v588 = vunpack.c.h.b16 %v70
    %v589 = vunpack.c.l.b16 %v71
    %v590 = vunpack.c.h.b16 %v71
    %v591 = vunpack.c.l.b16 %v72
    %v592 = vunpack.c.h.b16 %v72
    %v593 = vunpack.c.l.b16 %v73
    %v594 = vunpack.c.h.b16 %v73
    %v595 = vunpack.c.l.b16 %v74
    %v596 = vunpack.c.h.b16 %v74
    %v597 = vunpack.c.l.b16 %v75
    %v598 = vunpack.c.h.b16 %v75
    %v599 = vunpack.c.l.b16 %v76
    %v600 = vunpack.c.h.b16 %v76
    %v601 = vunpack.c.l.b16 %v77
    %v602 = vunpack.c.h.b16 %v77
    %v603 = vunpack.c.l.b16 %v78
    %v604 = vunpack.c.h.b16 %v78
    %v605 = vunpack.c.l.b16 %v79
    %v606 = vunpack.c.h.b16 %v79
    %v607 = vunpack.c.l.b16 %v80
    %v608 = vunpack.c.h.b16 %v80
    %v609 = vunpack.c.l.b16 %v81
    %v610 = vunpack.c.h.b16 %v81
    %v611 = vunpack.c.l.b16 %v82
    %v612 = vunpack.c.h.b16 %v82
    %v613 = vunpack.c.l.b16 %v83
    %v614 = vunpack.c.h.b16 %v83
    %v615 = vunpack.c.l.b16 %v84
    %v616 = vunpack.c.h.b16 %v84
    %v617 = vunpack.c.l.b16 %v85
    %v618 = vunpack.c.h.b16 %v85
    %v619 = vunpack.c.l.b16 %v86
    %v620 = vunpack.c.h.b16 %v86
    %v621 = vunpack.c.l.b16 %v87
    %v622 = vunpack.c.h.b16 %v87
    %v623 = vunpack.c.l.b16 %v88
    %v624 = vunpack.c.h.b16 %v88
    %v625 = vunpack.c.l.b16 %v89
    %v626 = vunpack.c.h.b16 %v89
    %v627 = vunpack.c.l.b16 %v90
    %v628 = vunpack.c.h.b16 %v90
    %v629 = vunpack.c.l.b16 %v91
    %v630 = vunpack.c.h.b16 %v91
    %v631 = vunpack.c.l.b16 %v92
    %v632 = vunpack.c.h.b16 %v92
    %v633 = vunpack.c.l.b16 %v93
    %v634 = vunpack.c.h.b16 %v93
    %v635 = vunpack.c.l.b16 %v94
    %v636 = vunpack.c.h.b16 %v94
    %v637 = vunpack.c.l.b16 %v95
    %v638 = vunpack.c.h.b16 %v95
    %v639 = vunpack.c.l.b16 %v96
    %v640 = vunpack.c.h.b16 %v96
    %v641 = vunpack.c.l.b16 %v97
    %v642 = vunpack.c.h.b16 %v97
    %v643 = vunpack.c.l.b16 %v98
    %v644 = vunpack.c.h.b16 %v98
    %v645 = vunpack.c.l.b16 %v99
    %v646 = vunpack.c.h.b16 %v99
    %v647 = vunpack.c.l.b16 %v100
    %v648 = vunpack.c.h.b16 %v100
    %v649 = vunpack.c.l.b16 %v101
    %v650 = vunpack.c.h.b16 %v101
    %v651 = vunpack.c.l.b16 %v102
    %v652 = vunpack.c.h.b16 %v102
    %v653 = vunpack.c.l.b16 %v103
    %v654 = vunpack.c.h.b16 %v103
    %v655 = vunpack.c.l.b16 %v104
    %v656 = vunpack.c.h.b16 %v104
    %v657 = vunpack.c.l.b16 %v105
    %v658 = vunpack.c.h.b16 %v105
    %v659 = vunpack.c.l.b16 %v106
    %v660 = vunpack.c.h.b16 %v106
    %v661 = vunpack.c.l.b16 %v107
    %v662 = vunpack.c.h.b16 %v107
    %v663 = vunpack.c.l.b16 %v108
    %v664 = vunpack.c.h.b16 %v108
    %v665 = vunpack.c.l.b16 %v109
    %v666 = vunpack.c.h.b16 %v109
    %v667 = vunpack.c.l.b16 %v110
    %v668 = vunpack.c.h.b16 %v110
    %v669 = vunpack.c.l.b16 %v111
    %v670 = vunpack.c.h.b16 %v111
    %v671 = vunpack.c.l.b16 %v112
    %v672 = vunpack.c.h.b16 %v112
    %v673 = vunpack.c.l.b16 %v113
    %v674 = vunpack.c.h.b16 %v113
    %v675 = vunpack.c.l.b16 %v114
    %v676 = vunpack.c.h.b16 %v114
    %v677 = vunpack.c.l.b16 %v115
    %v678 = vunpack.c.h.b16 %v115
    %v679 = vunpack.c.l.b16 %v116
    %v680 = vunpack.c.h.b16 %v116
    %v681 = vunpack.c.l.b16 %v117
    %v682 = vunpack.c.h.b16 %v117
    %v683 = vunpack.c.l.b16 %v118
    %v684 = vunpack.c.h.b16 %v118
    %v685 = vunpack.c.l.b16 %v119
    %v686 = vunpack.c.h.b16 %v119
    %v687 = vunpack.c.l.b16 %v120
    %v688 = vunpack.c.h.b16 %v120
    %v689 = vunpack.c.l.b16 %v121
    %v690 = vunpack.c.h.b16 %v121
    %v691 = vunpack.c.l.b16 %v122
    %v692 = vunpack.c.h.b16 %v122
    %v693 = vunpack.c.l.b16 %v123
    %v694 = vunpack.c.h.b16 %v123
    %v695 = vunpack.c.l.b16 %v124
    %v696 = vunpack.c.h.b16 %v124
    %v697 = vunpack.c.l.b16 %v125
    %v698 = vunpack.c.h.b16 %v125
    %v699 = vunpack.c.l.b16 %v126
    %v700 = vunpack.c.h.b16 %v126
    %v701 = vunpack.c.l.b16 %v127
    %v702 = vunpack.c.h.b16 %v127
    %v703 = vunpack.c.l.b16 %v128
    %v704 = vunpack.c.h.b16 %v128
    %v705 = vunpack.c.l.b16 %v129
    %v706 = vunpack.c.h.b16 %v129
    %v707 = vunpack.c.l.b16 %v130
    %v708 = vunpack.c.h.b16 %v130
    %v709 = vunpack.c.l.b16 %v131
    %v710 = vunpack.c.h.b16 %v131
    %v711 = vunpack.c.l.b16 %v132
    %v712 = vunpack.c.h.b16 %v132
    %v713 = vunpack.c.l.b16 %v133
    %v714 = vunpack.c.h.b16 %v133
    %v715 = vunpack.c.l.b16 %v134
    %v716 = vunpack.c.h.b16 %v134
    %v717 = vunpack.c.l.b16 %v135
    %v718 = vunpack.c.h.b16 %v135
    %v719 = vunpack.c.l.b16 %v136
    %v720 = vunpack.c.h.b16 %v136
    %v721 = vunpack.c.l.b16 %v137
    %v722 = vunpack.c.h.b16 %v137
    %v723 = vunpack.c.l.b16 %v138
    %v724 = vunpack.c.h.b16 %v138
    %v725 = vunpack.c.l.b16 %v139
    %v726 = vunpack.c.h.b16 %v139
    %v727 = vunpack.c.l.b16 %v140
    %v728 = vunpack.c.h.b16 %v140
    %v729 = vunpack.c.l.b16 %v141
    %v730 = vunpack.c.h.b16 %v141
    %v731 = vunpack.c.l.b16 %v142
    %v732 = vunpack.c.h.b16 %v142
    %v733 = vunpack.c.l.b16 %v143
    %v734 = vunpack.c.h.b16 %v143
    %v735 = vunpack.c.l.b16 %v144
    %v736 = vunpack.c.h.b16 %v144
    %v737 = vunpack.c.l.b16 %v145
    %v738 = vunpack.c.h.b16 %v145
    %v739 = vunpack.c.l.b16 %v146
    %v740 = vunpack.c.h.b16 %v146
    %v741 = vunpack.c.l.b16 %v147
    %v742 = vunpack.c.h.b16 %v147
    %v743 = vunpack.c.l.b16 %v148
    %v744 = vunpack.c.h.b16 %v148
    %v745 = vunpack.c.l.b16 %v149
    %v746 = vunpack.c.h.b16 %v149
    %v747 = vunpack.c.l.b16 %v150
    %v748 = vunpack.c.h.b16 %v150
    %v749 = vunpack.c.l.b16 %v151
    %v750 = vunpack.c.h.b16 %v151
    %v751 = vunpack.c.l.b16 %v152
    %v752 = vunpack.c.h.b16 %v152
    %v753 = vunpack.c.l.b16 %v153
    %v754 = vunpack.c.h.b16 %v153
    %v755 = vunpack.c.l.b16 %v154
    %v756 = vunpack.c.h.b16 %v154
    %v757 = vunpack.c.l.b16 %v155
    %v758 = vunpack.c.h.b16 %v155
    %v759 = vunpack.c.l.b16 %v156
    %v760 = vunpack.c.h.b16 %v156
    %v761 = vunpack.c.l.b16 %v157
    %v762 = vunpack.c.h.b16 %v157
    %v763 = vunpack.c.l.b16 %v158
    %v764 = vunpack.c.h.b16 %v158
    %v765 = vunpack.c.l.b16 %v159
    %v766 = vunpack.c.h.b16 %v159
    %v767 = vunpack.c.l.b16 %v160
    %v768 = vunpack.c.h.b16 %v160
    %v769 = vunpack.c.l.b16 %v161
    %v770 = vunpack.c.h.b16 %v161
    %v771 = vunpack.c.l.b16 %v162
    %v772 = vunpack.c.h.b16 %v162
    %v773 = vunpack.c.l.b16 %v163
    %v774 = vunpack.c.h.b16 %v163
    %v775 = vunpack.c.l.b16 %v164
    %v776 = vunpack.c.h.b16 %v164
    %v777 = vunpack.c.l.b16 %v165
    %v778 = vunpack.c.h.b16 %v165
    %v779 = vunpack.c.l.b16 %v166
    %v780 = vunpack.c.h.b16 %v166
    %v781 = vunpack.c.l.b16 %v167
    %v782 = vunpack.c.h.b16 %v167
    %v783 = vunpack.c.l.b16 %v168
    %v784 = vunpack.c.h.b16 %v168
    %v785 = vunpack.c.l.b16 %v169
    %v786 = vunpack.c.h.b16 %v169
    %v787 = vunpack.c.l.b16 %v170
    %v788 = vunpack.c.h.b16 %v170
    %v789 = vunpack.c.l.b16 %v171
    %v790 = vunpack.c.h.b16 %v171
    %v791 = vunpack.c.l.b16 %v172
    %v792 = vunpack.c.h.b16 %v172
    %v793 = vunpack.c.l.b16 %v173
    %v794 = vunpack.c.h.b16 %v173
    %v795 = vunpack.c.l.b16 %v174
    %v796 = vunpack.c.h.b16 %v174
    %v797 = vunpack.c.l.b16 %v175
    %v798 = vunpack.c.h.b16 %v175
    %v799 = vunpack.c.l.b16 %v176
    %v800 = vunpack.c.h.b16 %v176
    %v801 = vunpack.c.l.b16 %v177
    %v802 = vunpack.c.h.b16 %v177
    %v803 = vunpack.c.l.b16 %v178
    %v804 = vunpack.c.h.b16 %v178
    %v805 = vunpack.c.l.b16 %v179
    %v806 = vunpack.c.h.b16 %v179
    %v807 = vunpack.c.l.b16 %v180
    %v808 = vunpack.c.h.b16 %v180
    %v809 = vunpack.c.l.b16 %v181
    %v810 = vunpack.c.h.b16 %v181
    %v811 = vunpack.c.l.b16 %v182
    %v812 = vunpack.c.h.b16 %v182
    %v813 = vunpack.c.l.b16 %v183
    %v814 = vunpack.c.h.b16 %v183
    %v815 = vunpack.c.l.b16 %v184
    %v816 = vunpack.c.h.b16 %v184
    %v817 = vunpack.c.l.b16 %v185
    %v818 = vunpack.c.h.b16 %v185
    %v819 = vunpack.c.l.b16 %v186
    %v820 = vunpack.c.h.b16 %v186
    %v821 = vunpack.c.l.b16 %v187
    %v822 = vunpack.c.h.b16 %v187
    %v823 = vunpack.c.l.b16 %v188
    %v824 = vunpack.c.h.b16 %v188
    %v825 = vunpack.c.l.b16 %v189
    %v826 = vunpack.c.h.b16 %v189
    %v827 = vunpack.c.l.b16 %v190
    %v828 = vunpack.c.h.b16 %v190
    %v829 = vunpack.c.l.b16 %v191
    %v830 = vunpack.c.h.b16 %v191
    %v831 = vunpack.c.l.b16 %v192
    %v832 = vunpack.c.h.b16 %v192
    %v833 = vunpack.c.l.b16 %v193
    %v834 = vunpack.c.h.b16 %v193
    %v835 = vunpack.c.l.b16 %v194
    %v836 = vunpack.c.h.b16 %v194
    %v837 = vunpack.c.l.b16 %v195
    %v838 = vunpack.c.h.b16 %v195
    %v839 = vunpack.c.l.b16 %v196
    %v840 = vunpack.c.h.b16 %v196
    %v841 = vunpack.c.l.b16 %v197
    %v842 = vunpack.c.h.b16 %v197
    %v843 = vunpack.c.l.b16 %v198
    %v844 = vunpack.c.h.b16 %v198
    %v845 = vunpack.c.l.b16 %v199
    %v846 = vunpack.c.h.b16 %v199
    %v847 = vunpack.c.l.b16 %v200
    %v848 = vunpack.c.h.b16 %v200
    %v849 = vunpack.c.l.b16 %v201
    %v850 = vunpack.c.h.b16 %v201
    %v851 = vunpack.c.l.b16 %v202
    %v852 = vunpack.c.h.b16 %v202
    %v853 = vunpack.c.l.b16 %v203
    %v854 = vunpack.c.h.b16 %v203
    %v855 = vunpack.c.l.b16 %v204
    %v856 = vunpack.c.h.b16 %v204
    %v857 = vunpack.c.l.b16 %v205
    %v858 = vunpack.c.h.b16 %v205
    %v859 = vunpack.c.l.b16 %v206
    %v860 = vunpack.c.h.b16 %v206
    %v861 = vunpack.c.l.b16 %v207
    %v862 = vunpack.c.h.b16 %v207
    %v863 = vunpack.c.l.b16 %v208
    %v864 = vunpack.c.h.b16 %v208
    %v865 = vunpack.c.l.b16 %v209
    %v866 = vunpack.c.h.b16 %v209
    %v867 = vunpack.c.l.b16 %v210
    %v868 = vunpack.c.h.b16 %v210
    %v869 = vunpack.c.l.b16 %v211
    %v870 = vunpack.c.h.b16 %v211
    %v871 = vunpack.c.l.b16 %v212
    %v872 = vunpack.c.h.b16 %v212
    %v873 = vunpack.c.l.b16 %v213
    %v874 = vunpack.c.h.b16 %v213
    %v875 = vunpack.c.l.b16 %v214
    %v876 = vunpack.c.h.b16 %v214
    %v877 = vunpack.c.l.b16 %v215
    %v878 = vunpack.c.h.b16 %v215
    %v879 = vunpack.c.l.b16 %v216
    %v880 = vunpack.c.h.b16 %v216
    %v881 = vunpack.c.l.b16 %v217
    %v882 = vunpack.c.h.b16 %v217
    %v883 = vunpack.c.l.b16 %v218
    %v884 = vunpack.c.h.b16 %v218
    %v885 = vunpack.c.l.b16 %v219
    %v886 = vunpack.c.h.b16 %v219
    %v887 = vunpack.c.l.b16 %v220
    %v888 = vunpack.c.h.b16 %v220
    %v889 = vunpack.c.l.b16 %v221
    %v890 = vunpack.c.h.b16 %v221
    %v891 = vunpack.c.l.b16 %v222
    %v892 = vunpack.c.h.b16 %v222
    %v893 = vunpack.c.l.b16 %v223
    %v894 = vunpack.c.h.b16 %v223
    %v895 = vunpack.c.l.b16 %v224
    %v896 = vunpack.c.h.b16 %v224
    %v897 = vunpack.c.l.b16 %v225
    %v898 = vunpack.c.h.b16 %v225
    %v899 = vunpack.c.l.b16 %v226
    %v900 = vunpack.c.h.b16 %v226
    %v901 = vunpack.c.l.b16 %v227
    %v902 = vunpack.c.h.b16 %v227
    %v903 = vunpack.c.l.b16 %v228
    %v904 = vunpack.c.h.b16 %v228
    %v905 = vunpack.c.l.b16 %v229
    %v906 = vunpack.c.h.b16 %v229
    %v907 = vunpack.c.l.b16 %v230
    %v908 = vunpack.c.h.b16 %v230
    %v909 = vunpack.c.l.b16 %v231
    %v910 = vunpack.c.h.b16 %v231
    %v911 = vunpack.c.l.b16 %v232
    %v912 = vunpack.c.h.b16 %v232
    %v913 = vunpack.c.l.b16 %v233
    %v914 = vunpack.c.h.b16 %v233
    %v915 = vunpack.c.l.b16 %v234
    %v916 = vunpack.c.h.b16 %v234
    %v917 = vunpack.c.l.b16 %v235
    %v918 = vunpack.c.h.b16 %v235
    %v919 = vunpack.c.l.b16 %v236
    %v920 = vunpack.c.h.b16 %v236
    %v921 = vunpack.c.l.b16 %v237
    %v922 = vunpack.c.h.b16 %v237
    %v923 = vunpack.c.l.b16 %v238
    %v924 = vunpack.c.h.b16 %v238
    %v925 = vunpack.c.l.b16 %v239
    %v926 = vunpack.c.h.b16 %v239
    %v927 = vunpack.c.l.b16 %v240
    %v928 = vunpack.c.h.b16 %v240
    %v929 = vunpack.c.l.b16 %v241
    %v930 = vunpack.c.h.b16 %v241
    %v931 = vunpack.c.l.b16 %v242
    %v932 = vunpack.c.h.b16 %v242
    %v933 = vunpack.c.l.b16 %v243
    %v934 = vunpack.c.h.b16 %v243
    %v935 = vunpack.c.l.b16 %v244
    %v936 = vunpack.c.h.b16 %v244
    %v937 = vunpack.c.l.b16 %v245
    %v938 = vunpack.c.h.b16 %v245
    %v939 = vunpack.c.l.b16 %v246
    %v940 = vunpack.c.h.b16 %v246
    %v941 = vunpack.c.l.b16 %v247
    %v942 = vunpack.c.h.b16 %v247
    %v943 = vunpack.c.l.b16 %v248
    %v944 = vunpack.c.h.b16 %v248
    %v945 = vunpack.c.l.b16 %v249
    %v946 = vunpack.c.h.b16 %v249
    %v947 = vunpack.c.l.b16 %v250
    %v948 = vunpack.c.h.b16 %v250
    %v949 = vunpack.c.l.b16 %v251
    %v950 = vunpack.c.h.b16 %v251
    %v951 = vunpack.c.l.b16 %v252
    %v952 = vunpack.c.h.b16 %v252
    %v953 = vunpack.c.l.b16 %v253
    %v954 = vunpack.c.h.b16 %v253
    %v955 = vunpack.c.l.b16 %v254
    %v956 = vunpack.c.h.b16 %v254
    %v957 = vunpack.c.l.b16 %v255
    %v958 = vunpack.c.h.b16 %v255
    %v959 = vunpack.c.l.b16 %v256
    %v960 = vunpack.c.h.b16 %v256
    %v961 = vunpack.c.l.b16 %v257
    %v962 = vunpack.c.h.b16 %v257
    %v963 = vunpack.c.l.b16 %v258
    %v964 = vunpack.c.h.b16 %v258
    %v965 = vunpack.c.l.b16 %v259
    %v966 = vunpack.c.h.b16 %v259
    %v967 = vunpack.c.l.b16 %v260
    %v968 = vunpack.c.h.b16 %v260
    %v969 = vunpack.c.l.b16 %v261
    %v970 = vunpack.c.h.b16 %v261
    %v971 = vunpack.c.l.b16 %v262
    %v972 = vunpack.c.h.b16 %v262
    %v973 = vunpack.c.l.b16 %v263
    %v974 = vunpack.c.h.b16 %v263
    %v975 = vunpack.c.l.b16 %v264
    %v976 = vunpack.c.h.b16 %v264
    %v977 = vunpack.c.l.b16 %v265
    %v978 = vunpack.c.h.b16 %v265
    %v979 = vunpack.c.l.b16 %v266
    %v980 = vunpack.c.h.b16 %v266
    %v981 = vunpack.c.l.b16 %v267
    %v982 = vunpack.c.h.b16 %v267
    %v983 = vunpack.c.l.b16 %v268
    %v984 = vunpack.c.h.b16 %v268
    %v985 = vunpack.c.l.b16 %v269
    %v986 = vunpack.c.h.b16 %v269
    %v987 = vunpack.c.l.b16 %v270
    %v988 = vunpack.c.h.b16 %v270
    %v989 = vunpack.c.l.b16 %v271
    %v990 = vunpack.c.h.b16 %v271
    %v991 = vunpack.c.l.b16 %v272
    %v992 = vunpack.c.h.b16 %v272
    %v993 = vunpack.c.l.b16 %v273
    %v994 = vunpack.c.h.b16 %v273
    %v995 = vunpack.c.l.b16 %v274
    %v996 = vunpack.c.h.b16 %v274
    %v997 = vunpack.c.l.b16 %v275
    %v998 = vunpack.c.h.b16 %v275
    %v999 = vunpack.c.l.b16 %v276
    %v1000 = vunpack.c.h.b16 %v276
    %v1001 = vunpack.c.l.b16 %v277
    %v1002 = vunpack.c.h.b16 %v277
    %v1003 = vunpack.c.l.b16 %v278
    %v1004 = vunpack.c.h.b16 %v278
    %v1005 = vunpack.c.l.b16 %v279
    %v1006 = vunpack.c.h.b16 %v279
    %v1007 = vunpack.c.l.b16 %v280
    %v1008 = vunpack.c.h.b16 %v280
    %v1009 = vunpack.c.l.b16 %v281
    %v1010 = vunpack.c.h.b16 %v281
    %v1011 = vunpack.c.l.b16 %v282
    %v1012 = vunpack.c.h.b16 %v282
    %v1013 = vunpack.c.l.b16 %v283
    %v1014 = vunpack.c.h.b16 %v283
    %v1015 = vunpack.c.l.b16 %v284
    %v1016 = vunpack.c.h.b16 %v284
    %v1017 = vunpack.c.l.b16 %v285
    %v1018 = vunpack.c.h.b16 %v285
    %v1019 = vunpack.c.l.b16 %v286
    %v1020 = vunpack.c.h.b16 %v286
    %v1021 = vunpack.c.l.b16 %v287
    %v1022 = vunpack.c.h.b16 %v287
    %v1023 = vunpack.c.l.b16 %v288
    %v1024 = vunpack.c.h.b16 %v288
    %v1025 = vunpack.c.l.b16 %v289
    %v1026 = vunpack.c.h.b16 %v289
    %v1027 = vunpack.c.l.b16 %v290
    %v1028 = vunpack.c.h.b16 %v290
    %v1029 = vunpack.c.l.b16 %v291
    %v1030 = vunpack.c.h.b16 %v291
    %v1031 = vunpack.c.l.b16 %v292
    %v1032 = vunpack.c.h.b16 %v292
    %v1033 = vunpack.c.l.b16 %v293
    %v1034 = vunpack.c.h.b16 %v293
    %v1035 = vunpack.c.l.b16 %v294
    %v1036 = vunpack.c.h.b16 %v294
    %v1037 = vunpack.c.l.b16 %v295
    %v1038 = vunpack.c.h.b16 %v295
    %v1039 = vunpack.c.l.b16 %v296
    %v1040 = vunpack.c.h.b16 %v296
    %v1041 = vunpack.c.l.b16 %v297
    %v1042 = vunpack.c.h.b16 %v297
    %v1043 = vunpack.c.l.b16 %v298
    %v1044 = vunpack.c.h.b16 %v298
    %v1045 = vunpack.c.l.b16 %v299
    %v1046 = vunpack.c.h.b16 %v299
    %v1047 = vunpack.c.l.b16 %v300
    %v1048 = vunpack.c.h.b16 %v300
    %v1049 = vunpack.c.l.b16 %v301
    %v1050 = vunpack.c.h.b16 %v301
    %v1051 = vunpack.c.l.b16 %v302
    %v1052 = vunpack.c.h.b16 %v302
    %v1053 = vunpack.c.l.b16 %v303
    %v1054 = vunpack.c.h.b16 %v303
    %v1055 = vunpack.c.l.b16 %v304
    %v1056 = vunpack.c.h.b16 %v304
    %v1057 = vunpack.c.l.b16 %v305
    %v1058 = vunpack.c.h.b16 %v305
    %v1059 = vunpack.c.l.b16 %v306
    %v1060 = vunpack.c.h.b16 %v306
    %v1061 = vunpack.c.l.b16 %v307
    %v1062 = vunpack.c.h.b16 %v307
    %v1063 = vunpack.c.l.b16 %v308
    %v1064 = vunpack.c.h.b16 %v308
    %v1065 = vunpack.c.l.b16 %v309
    %v1066 = vunpack.c.h.b16 %v309
    %v1067 = vunpack.c.l.b16 %v310
    %v1068 = vunpack.c.h.b16 %v310
    %v1069 = vunpack.c.l.b16 %v311
    %v1070 = vunpack.c.h.b16 %v311
    %v1071 = vunpack.c.l.b16 %v312
    %v1072 = vunpack.c.h.b16 %v312
    %v1073 = vunpack.c.l.b16 %v313
    %v1074 = vunpack.c.h.b16 %v313
    %v1075 = vunpack.c.l.b16 %v314
    %v1076 = vunpack.c.h.b16 %v314
    %v1077 = vunpack.c.l.b16 %v315
    %v1078 = vunpack.c.h.b16 %v315
    %v1079 = vunpack.c.l.b16 %v316
    %v1080 = vunpack.c.h.b16 %v316
    %v1081 = vunpack.c.l.b16 %v317
    %v1082 = vunpack.c.h.b16 %v317
    %v1083 = vunpack.c.l.b16 %v318
    %v1084 = vunpack.c.h.b16 %v318
    %v1085 = vunpack.c.l.b16 %v319
    %v1086 = vunpack.c.h.b16 %v319
    %v1087 = vunpack.c.l.b16 %v320
    %v1088 = vunpack.c.h.b16 %v320
    %v1089 = vpack.c.b16 %v585, %v577
    %v1090 = vpack.c.b16 %v586, %v578
    %v1091 = vpack.c.b16 %v587, %v579
    %v1092 = vpack.c.b16 %v588, %v580
    %v1093 = vpack.c.b16 %v589, %v581
    %v1094 = vpack.c.b16 %v590, %v582
    %v1095 = vpack.c.b16 %v591, %v583
    %v1096 = vpack.c.b16 %v592, %v584
    %v1097 = vpack.c.b16 %v601, %v593
    %v1098 = vpack.c.b16 %v602, %v594
    %v1099 = vpack.c.b16 %v603, %v595
    %v1100 = vpack.c.b16 %v604, %v596
    %v1101 = vpack.c.b16 %v605, %v597
    %v1102 = vpack.c.b16 %v606, %v598
    %v1103 = vpack.c.b16 %v607, %v599
    %v1104 = vpack.c.b16 %v608, %v600
    %v1105 = vpack.c.b16 %v617, %v609
    %v1106 = vpack.c.b16 %v618, %v610
    %v1107 = vpack.c.b16 %v619, %v611
    %v1108 = vpack.c.b16 %v620, %v612
    %v1109 = vpack.c.b16 %v621, %v613
    %v1110 = vpack.c.b16 %v622, %v614
    %v1111 = vpack.c.b16 %v623, %v615
    %v1112 = vpack.c.b16 %v624, %v616
    %v1113 = vpack.c.b16 %v633, %v625
    %v1114 = vpack.c.b16 %v634, %v626
    %v1115 = vpack.c.b16 %v635, %v627
    %v1116 = vpack.c.b16 %v636, %v628
    %v1117 = vpack.c.b16 %v637, %v629
    %v1118 = vpack.c.b16 %v638, %v630
    %v1119 = vpack.c.b16 %v639, %v631
    %v1120 = vpack.c.b16 %v640, %v632
    %v1121 = vpack.c.b16 %v649, %v641
    %v1122 = vpack.c.b16 %v650, %v642
    %v1123 = vpack.c.b16 %v651, %v643
    %v1124 = vpack.c.b16 %v652, %v644
    %v1125 = vpack.c.b16 %v653, %v645
    %v1126 = vpack.c.b16 %v654, %v646
    %v1127 = vpack.c.b16 %v655, %v647
    %v1128 = vpack.c.b16 %v656, %v648
    %v1129 = vpack.c.b16 %v665, %v657
    %v1130 = vpack.c.b16 %v666, %v658
    %v1131 = vpack.c.b16 %v667, %v659
    %v1132 = vpack.c.b16 %v668, %v660
    %v1133 = vpack.c.b16 %v669, %v661
    %v1134 = vpack.c.b16 %v670, %v662
    %v1135 = vpack.c.b16 %v671, %v663
    %v1136 = vpack.c.b16 %v672, %v664
    %v1137 = vpack.c.b16 %v681, %v673
    %v1138 = vpack.c.b16 %v682, %v674
    %v1139 = vpack.c.b16 %v683, %v675
    %v1140 = vpack.c.b16 %v684, %v676
    %v1141 = vpack.c.b16 %v685, %v677
    %v1142 = vpack.c.b16 %v686, %v678
    %v1143 = vpack.c.b16 %v687, %v679
    %v1144 = vpack.c.b16 %v688, %v680
    %v1145 = vpack.c.b16 %v697, %v689
    %v1146 = vpack.c.b16 %v698, %v690
    %v1147 = vpack.c.b16 %v699, %v691
    %v1148 = vpack.c.b16 %v700, %v692
    %v1149 = vpack.c.b16 %v701, %v693
    %v1150 = vpack.c.b16 %v702, %v694
    %v1151 = vpack.c.b16 %v703, %v695
    %v1152 = vpack.c.b16 %v704, %v696
    %v1153 = vpack.c.b16 %v713, %v705
    %v1154 = vpack.c.b16 %v714, %v706
    %v1155 = vpack.c.b16 %v715, %v707
    %v1156 = vpack.c.b16 %v716, %v708
    %v1157 = vpack.c.b16 %v717, %v709
    %v1158 = vpack.c.b16 %v718, %v710
    %v1159 = vpack.c.b16 %v719, %v711
    %v1160 = vpack.c.b16 %v720, %v712
    %v1161 = vpack.c.b16 %v729, %v721
    %v1162 = vpack.c.b16 %v730, %v722
    %v1163 = vpack.c.b16 %v731, %v723
    %v1164 = vpack.c.b16 %v732, %v724
    %v1165 = vpack.c.b16 %v733, %v725
    %v1166 = vpack.c.b16 %v734, %v726
    %v1167 = vpack.c.b16 %v735, %v727
    %v1168 = vpack.c.b16 %v736, %v728
    %v1169 = vpack.c.b16 %v745, %v737
    %v1170 = vpack.c.b16 %v746, %v738
    %v1171 = vpack.c.b16 %v747, %v739
    %v1172 = vpack.c.b16 %v748, %v740
    %v1173 = vpack.c.b16 %v749, %v741
    %v1174 = vpack.c.b16 %v750, %v742
    %v1175 = vpack.c.b16 %v751, %v743
    %v1176 = vpack.c.b16 %v752, %v744
    %v1177 = vpack.c.b16 %v761, %v753
    %v1178 = vpack.c.b16 %v762, %v754
    %v1179 = vpack.c.b16 %v763, %v755
    %v1180 = vpack.c.b16 %v764, %v756
    %v1181 = vpack.c.b16 %v765, %v757
    %v1182 = vpack.c.b16 %v766, %v758
    %v1183 = vpack.c.b16 %v767, %v759
    %v1184 = vpack.c.b16 %v768, %v760
    %v1185 = vpack.c.b16 %v777, %v769
    %v1186 = vpack.c.b16 %v778, %v770
    %v1187 = vpack.c.b16 %v779, %v771
    %v1188 = vpack.c.b16 %v780, %v772
    %v1189 = vpack.c.b16 %v781, %v773
    %v1190 = vpack.c.b16 %v782, %v774
    %v1191 = vpack.c.b16 %v783, %v775
    %v1192 = vpack.c.b16 %v784, %v776
    %v1193 = vpack.c.b16 %v793, %v785
    %v1194 = vpack.c.b16 %v794, %v786
    %v1195 = vpack.c.b16 %v795, %v787
    %v1196 = vpack.c.b16 %v796, %v788
    %v1197 = vpack.c.b16 %v797, %v789
    %v1198 = vpack.c.b16 %v798, %v790
    %v1199 = vpack.c.b16 %v799, %v791
    %v1200 = vpack.c.b16 %v800, %v792
    %v1201 = vpack.c.b16 %v809, %v801
    %v1202 = vpack.c.b16 %v810, %v802
    %v1203 = vpack.c.b16 %v811, %v803
    %v1204 = vpack.c.b16 %v812, %v804
    %v1205 = vpack.c.b16 %v813, %v805
    %v1206 = vpack.c.b16 %v814, %v806
    %v1207 = vpack.c.b16 %v815, %v807
    %v1208 = vpack.c.b16 %v816, %v808
    %v1209 = vpack.c.b16 %v825, %v817
    %v1210 = vpack.c.b16 %v826, %v818
    %v1211 = vpack.c.b16 %v827, %v819
    %v1212 = vpack.c.b16 %v828, %v820
    %v1213 = vpack.c.b16 %v829, %v821
    %v1214 = vpack.c.b16 %v830, %v822
    %v1215 = vpack.c.b16 %v831, %v823
    %v1216 = vpack.c.b16 %v832, %v824
    %v1217 = vpack.c.b16 %v841, %v833
    %v1218 = vpack.c.b16 %v842, %v834
    %v1219 = vpack.c.b16 %v843, %v835
    %v1220 = vpack.c.b16 %v844, %v836
    %v1221 = vpack.c.b16 %v845, %v837
    %v1222 = vpack.c.b16 %v846, %v838
    %v1223 = vpack.c.b16 %v847, %v839
    %v1224 = vpack.c.b16 %v848, %v840
    %v1225 = vpack.c.b16 %v857, %v849
    %v1226 = vpack.c.b16 %v858, %v850
    %v1227 = vpack.c.b16 %v859, %v851
    %v1228 = vpack.c.b16 %v860, %v852
    %v1229 = vpack.c.b16 %v861, %v853
    %v1230 = vpack.c.b16 %v862, %v854
    %v1231 = vpack.c.b16 %v863, %v855
    %v1232 = vpack.c.b16 %v864, %v856
    %v1233 = vpack.c.b16 %v873, %v865
    %v1234 = vpack.c.b16 %v874, %v866
    %v1235 = vpack.c.b16 %v875, %v867
    %v1236 = vpack.c.b16 %v876, %v868
    %v1237 = vpack.c.b16 %v877, %v869
    %v1238 = vpack.c.b16 %v878, %v870
    %v1239 = vpack.c.b16 %v879, %v871
    %v1240 = vpack.c.b16 %v880, %v872
    %v1241 = vpack.c.b16 %v889, %v881
    %v1242 = vpack.c.b16 %v890, %v882
    %v1243 = vpack.c.b16 %v891, %v883
    %v1244 = vpack.c.b16 %v892, %v884
    %v1245 = vpack.c.b16 %v893, %v885
    %v1246 = vpack.c.b16 %v894, %v886
    %v1247 = vpack.c.b16 %v895, %v887
    %v1248 = vpack.c.b16 %v896, %v888
    %v1249 = vpack.c.b16 %v905, %v897
    %v1250 = vpack.c.b16 %v906, %v898
    %v1251 = vpack.c.b16 %v907, %v899
    %v1252 = vpack.c.b16 %v908, %v900
    %v1253 = vpack.c.b16 %v909, %v901
    %v1254 = vpack.c.b16 %v910, %v902
    %v1255 = vpack.c.b16 %v911, %v903
    %v1256 = vpack.c.b16 %v912, %v904
    %v1257 = vpack.c.b16 %v921, %v913
    %v1258 = vpack.c.b16 %v922, %v914
    %v1259 = vpack.c.b16 %v923, %v915
    %v1260 = vpack.c.b16 %v924, %v916
    %v1261 = vpack.c.b16 %v925, %v917
    %v1262 = vpack.c.b16 %v926, %v918
    %v1263 = vpack.c.b16 %v927, %v919
    %v1264 = vpack.c.b16 %v928, %v920
    %v1265 = vpack.c.b16 %v937, %v929
    %v1266 = vpack.c.b16 %v938, %v930
    %v1267 = vpack.c.b16 %v939, %v931
    %v1268 = vpack.c.b16 %v940, %v932
    %v1269 = vpack.c.b16 %v941, %v933
    %v1270 = vpack.c.b16 %v942, %v934
    %v1271 = vpack.c.b16 %v943, %v935
    %v1272 = vpack.c.b16 %v944, %v936
    %v1273 = vpack.c.b16 %v953, %v945
    %v1274 = vpack.c.b16 %v954, %v946
    %v1275 = vpack.c.b16 %v955, %v947
    %v1276 = vpack.c.b16 %v956, %v948
    %v1277 = vpack.c.b16 %v957, %v949
    %v1278 = vpack.c.b16 %v958, %v950
    %v1279 = vpack.c.b16 %v959, %v951
    %v1280 = vpack.c.b16 %v960, %v952
    %v1281 = vpack.c.b16 %v969, %v961
    %v1282 = vpack.c.b16 %v970, %v962
    %v1283 = vpack.c.b16 %v971, %v963
    %v1284 = vpack.c.b16 %v972, %v964
    %v1285 = vpack.c.b16 %v973, %v965
    %v1286 = vpack.c.b16 %v974, %v966
    %v1287 = vpack.c.b16 %v975, %v967
    %v1288 = vpack.c.b16 %v976, %v968
    %v1289 = vpack.c.b16 %v985, %v977
    %v1290 = vpack.c.b16 %v986, %v978
    %v1291 = vpack.c.b16 %v987, %v979
    %v1292 = vpack.c.b16 %v988, %v980
    %v1293 = vpack.c.b16 %v989, %v981
    %v1294 = vpack.c.b16 %v990, %v982
    %v1295 = vpack.c.b16 %v991, %v983
    %v1296 = vpack.c.b16 %v992, %v984
    %v1297 = vpack.c.b16 %v1001, %v993
    %v1298 = vpack.c.b16 %v1002, %v994
    %v1299 = vpack.c.b16 %v1003, %v995
    %v1300 = vpack.c.b16 %v1004, %v996
    %v1301 = vpack.c.b16 %v1005, %v997
    %v1302 = vpack.c.b16 %v1006, %v998
    %v1303 = vpack.c.b16 %v1007, %v999
    %v1304 = vpack.c.b16 %v1008, %v1000
    %v1305 = vpack.c.b16 %v1017, %v1009
    %v1306 = vpack.c.b16 %v1018, %v1010
    %v1307 = vpack.c.b16 %v1019, %v1011
    %v1308 = vpack.c.b16 %v1020, %v1012
    %v1309 = vpack.c.b16 %v1021, %v1013
    %v1310 = vpack.c.b16 %v1022, %v1014
    %v1311 = vpack.c.b16 %v1023, %v1015
    %v1312 = vpack.c.b16 %v1024, %v1016
    %v1313 = vpack.c.b16 %v1033, %v1025
    %v1314 = vpack.c.b16 %v1034, %v1026
    %v1315 = vpack.c.b16 %v1035, %v1027
    %v1316 = vpack.c.b16 %v1036, %v1028
    %v1317 = vpack.c.b16 %v1037, %v1029
    %v1318 = vpack.c.b16 %v1038, %v1030
    %v1319 = vpack.c.b16 %v1039, %v1031
    %v1320 = vpack.c.b16 %v1040, %v1032
    %v1321 = vpack.c.b16 %v1049, %v1041
    %v1322 = vpack.c.b16 %v1050, %v1042
    %v1323 = vpack.c.b16 %v1051, %v1043
    %v1324 = vpack.c.b16 %v1052, %v1044
    %v1325 = vpack.c.b16 %v1053, %v1045
    %v1326 = vpack.c.b16 %v1054, %v1046
    %v1327 = vpack.c.b16 %v1055, %v1047
    %v1328 = vpack.c.b16 %v1056, %v1048
    %v1329 = vpack.c.b16 %v1065, %v1057
    %v1330 = vpack.c.b16 %v1066, %v1058
    %v1331 = vpack.c.b16 %v1067, %v1059
    %v1332 = vpack.c.b16 %v1068, %v1060
    %v1333 = vpack.c.b16 %v1069, %v1061
    %v1334 = vpack.c.b16 %v1070, %v1062
    %v1335 = vpack.c.b16 %v1071, %v1063
    %v1336 = vpack.c.b16 %v1072, %v1064
    %v1337 = vpack.c.b16 %v1081, %v1073
    %v1338 = vpack.c.b16 %v1082, %v1074
    %v1339 = vpack.c.b16 %v1083, %v1075
    %v1340 = vpack.c.b16 %v1084, %v1076
    %v1341 = vpack.c.b16 %v1085, %v1077
    %v1342 = vpack.c.b16 %v1086, %v1078
    %v1343 = vpack.c.b16 %v1087, %v1079
    %v1344 = vpack.c.b16 %v1088, %v1080
    %1601 = vmatpush.bf16.msra.mxu0 %v1145
    %1602 = vmatpush.bf16.msra.mxu0 %v1137
    %1603 = vmatpush.bf16.msra.mxu0 %v1129
    %1604 = vmatpush.bf16.msra.mxu0 %v1121
    %1605 = vmatpush.bf16.msra.mxu0 %v1113
    %1606 = vmatpush.bf16.msra.mxu0 %v1105
    %1607 = vmatpush.bf16.msra.mxu0 %v1097
    %1608 = vmatpush.bf16.msra.mxu0 %v1089
    %1609 = vmatmul.bf16.gmra.mxu0 %v61
    %v1610 = vpop.f32.mrf.mxu0
    %v1611 = vadd.f32 0.0, %v1610
    %v1612 = vpop.f32.mrf.mxu0
    %1613 = vdwg.mxu0
    %1614 = vmatpush.bf16.msra.mxu0 %v1209
    %1615 = vmatpush.bf16.msra.mxu0 %v1201
    %1616 = vmatpush.bf16.msra.mxu0 %v1193
    %1617 = vmatpush.bf16.msra.mxu0 %v1185
    %1618 = vmatpush.bf16.msra.mxu0 %v1177
    %1619 = vmatpush.bf16.msra.mxu0 %v1169
    %1620 = vmatpush.bf16.msra.mxu0 %v1161
    %1621 = vmatpush.bf16.msra.mxu0 %v1153
    %1622 = vmatmul.bf16.gmra.mxu0 %v62
    %v1623 = vpop.f32.mrf.mxu0
    %v1624 = vadd.f32 %v1611, %v1623
    %v1625 = vpop.f32.mrf.mxu0
    %1626 = vdwg.mxu0
    %1627 = vmatpush.bf16.msra.mxu0 %v1273
    %1628 = vmatpush.bf16.msra.mxu0 %v1265
    %1629 = vmatpush.bf16.msra.mxu0 %v1257
    %1630 = vmatpush.bf16.msra.mxu0 %v1249
    %1631 = vmatpush.bf16.msra.mxu0 %v1241
    %1632 = vmatpush.bf16.msra.mxu0 %v1233
    %1633 = vmatpush.bf16.msra.mxu0 %v1225
    %1634 = vmatpush.bf16.msra.mxu0 %v1217
    %1635 = vmatmul.bf16.gmra.mxu0 %v63
    %v1636 = vpop.f32.mrf.mxu0
    %v1637 = vadd.f32 %v1624, %v1636
    %v1638 = vpop.f32.mrf.mxu0
    %1639 = vdwg.mxu0
    %1640 = vmatpush.bf16.msra.mxu0 %v1337
    %1641 = vmatpush.bf16.msra.mxu0 %v1329
    %1642 = vmatpush.bf16.msra.mxu0 %v1321
    %1643 = vmatpush.bf16.msra.mxu0 %v1313
    %1644 = vmatpush.bf16.msra.mxu0 %v1305
    %1645 = vmatpush.bf16.msra.mxu0 %v1297
    %1646 = vmatpush.bf16.msra.mxu0 %v1289
    %1647 = vmatpush.bf16.msra.mxu0 %v1281
    %1648 = vmatmul.bf16.gmra.mxu0 %v64
    %v1649 = vpop.f32.mrf.mxu0
    %v1650 = vadd.f32 %v1637, %v1649
    %v1651 = vpop.f32.mrf.mxu0
    %1652 = vdwg.mxu0
    %1653 = vmatpush.bf16.msra.mxu0 %v1146
    %1654 = vmatpush.bf16.msra.mxu0 %v1138
    %1655 = vmatpush.bf16.msra.mxu0 %v1130
    %1656 = vmatpush.bf16.msra.mxu0 %v1122
    %1657 = vmatpush.bf16.msra.mxu0 %v1114
    %1658 = vmatpush.bf16.msra.mxu0 %v1106
    %1659 = vmatpush.bf16.msra.mxu0 %v1098
    %1660 = vmatpush.bf16.msra.mxu0 %v1090
    %1661 = vmatmul.bf16.gmra.mxu0 %v61
    %v1662 = vpop.f32.mrf.mxu0
    %v1663 = vadd.f32 0.0, %v1662
    %v1664 = vpop.f32.mrf.mxu0
    %1665 = vdwg.mxu0
    %1666 = vmatpush.bf16.msra.mxu0 %v1210
    %1667 = vmatpush.bf16.msra.mxu0 %v1202
    %1668 = vmatpush.bf16.msra.mxu0 %v1194
    %1669 = vmatpush.bf16.msra.mxu0 %v1186
    %1670 = vmatpush.bf16.msra.mxu0 %v1178
    %1671 = vmatpush.bf16.msra.mxu0 %v1170
    %1672 = vmatpush.bf16.msra.mxu0 %v1162
    %1673 = vmatpush.bf16.msra.mxu0 %v1154
    %1674 = vmatmul.bf16.gmra.mxu0 %v62
    %v1675 = vpop.f32.mrf.mxu0
    %v1676 = vadd.f32 %v1663, %v1675
    %v1677 = vpop.f32.mrf.mxu0
    %1678 = vdwg.mxu0
    %1679 = vmatpush.bf16.msra.mxu0 %v1274
    %1680 = vmatpush.bf16.msra.mxu0 %v1266
    %1681 = vmatpush.bf16.msra.mxu0 %v1258
    %1682 = vmatpush.bf16.msra.mxu0 %v1250
    %1683 = vmatpush.bf16.msra.mxu0 %v1242
    %1684 = vmatpush.bf16.msra.mxu0 %v1234
    %1685 = vmatpush.bf16.msra.mxu0 %v1226
    %1686 = vmatpush.bf16.msra.mxu0 %v1218
    %1687 = vmatmul.bf16.gmra.mxu0 %v63
    %v1688 = vpop.f32.mrf.mxu0
    %v1689 = vadd.f32 %v1676, %v1688
    %v1690 = vpop.f32.mrf.mxu0
    %1691 = vdwg.mxu0
    %1692 = vmatpush.bf16.msra.mxu0 %v1338
    %1693 = vmatpush.bf16.msra.mxu0 %v1330
    %1694 = vmatpush.bf16.msra.mxu0 %v1322
    %1695 = vmatpush.bf16.msra.mxu0 %v1314
    %1696 = vmatpush.bf16.msra.mxu0 %v1306
    %1697 = vmatpush.bf16.msra.mxu0 %v1298
    %1698 = vmatpush.bf16.msra.mxu0 %v1290
    %1699 = vmatpush.bf16.msra.mxu0 %v1282
    %1700 = vmatmul.bf16.gmra.mxu0 %v64
    %v1701 = vpop.f32.mrf.mxu0
    %v1702 = vadd.f32 %v1689, %v1701
    %v1703 = vpop.f32.mrf.mxu0
    %1704 = vdwg.mxu0
    %1705 = vmatpush.bf16.msra.mxu0 %v1147
    %1706 = vmatpush.bf16.msra.mxu0 %v1139
    %1707 = vmatpush.bf16.msra.mxu0 %v1131
    %1708 = vmatpush.bf16.msra.mxu0 %v1123
    %1709 = vmatpush.bf16.msra.mxu0 %v1115
    %1710 = vmatpush.bf16.msra.mxu0 %v1107
    %1711 = vmatpush.bf16.msra.mxu0 %v1099
    %1712 = vmatpush.bf16.msra.mxu0 %v1091
    %1713 = vmatmul.bf16.gmra.mxu0 %v61
    %v1714 = vpop.f32.mrf.mxu0
    %v1715 = vadd.f32 0.0, %v1714
    %v1716 = vpop.f32.mrf.mxu0
    %1717 = vdwg.mxu0
    %1718 = vmatpush.bf16.msra.mxu0 %v1211
    %1719 = vmatpush.bf16.msra.mxu0 %v1203
    %1720 = vmatpush.bf16.msra.mxu0 %v1195
    %1721 = vmatpush.bf16.msra.mxu0 %v1187
    %1722 = vmatpush.bf16.msra.mxu0 %v1179
    %1723 = vmatpush.bf16.msra.mxu0 %v1171
    %1724 = vmatpush.bf16.msra.mxu0 %v1163
    %1725 = vmatpush.bf16.msra.mxu0 %v1155
    %1726 = vmatmul.bf16.gmra.mxu0 %v62
    %v1727 = vpop.f32.mrf.mxu0
    %v1728 = vadd.f32 %v1715, %v1727
    %v1729 = vpop.f32.mrf.mxu0
    %1730 = vdwg.mxu0
    %1731 = vmatpush.bf16.msra.mxu0 %v1275
    %1732 = vmatpush.bf16.msra.mxu0 %v1267
    %1733 = vmatpush.bf16.msra.mxu0 %v1259
    %1734 = vmatpush.bf16.msra.mxu0 %v1251
    %1735 = vmatpush.bf16.msra.mxu0 %v1243
    %1736 = vmatpush.bf16.msra.mxu0 %v1235
    %1737 = vmatpush.bf16.msra.mxu0 %v1227
    %1738 = vmatpush.bf16.msra.mxu0 %v1219
    %1739 = vmatmul.bf16.gmra.mxu0 %v63
    %v1740 = vpop.f32.mrf.mxu0
    %v1741 = vadd.f32 %v1728, %v1740
    %v1742 = vpop.f32.mrf.mxu0
    %1743 = vdwg.mxu0
    %1744 = vmatpush.bf16.msra.mxu0 %v1339
    %1745 = vmatpush.bf16.msra.mxu0 %v1331
    %1746 = vmatpush.bf16.msra.mxu0 %v1323
    %1747 = vmatpush.bf16.msra.mxu0 %v1315
    %1748 = vmatpush.bf16.msra.mxu0 %v1307
    %1749 = vmatpush.bf16.msra.mxu0 %v1299
    %1750 = vmatpush.bf16.msra.mxu0 %v1291
    %1751 = vmatpush.bf16.msra.mxu0 %v1283
    %1752 = vmatmul.bf16.gmra.mxu0 %v64
    %v1753 = vpop.f32.mrf.mxu0
    %v1754 = vadd.f32 %v1741, %v1753
    %v1755 = vpop.f32.mrf.mxu0
    %1756 = vdwg.mxu0
    %1757 = vmatpush.bf16.msra.mxu0 %v1148
    %1758 = vmatpush.bf16.msra.mxu0 %v1140
    %1759 = vmatpush.bf16.msra.mxu0 %v1132
    %1760 = vmatpush.bf16.msra.mxu0 %v1124
    %1761 = vmatpush.bf16.msra.mxu0 %v1116
    %1762 = vmatpush.bf16.msra.mxu0 %v1108
    %1763 = vmatpush.bf16.msra.mxu0 %v1100
    %1764 = vmatpush.bf16.msra.mxu0 %v1092
    %1765 = vmatmul.bf16.gmra.mxu0 %v61
    %v1766 = vpop.f32.mrf.mxu0
    %v1767 = vadd.f32 0.0, %v1766
    %v1768 = vpop.f32.mrf.mxu0
    %1769 = vdwg.mxu0
    %1770 = vmatpush.bf16.msra.mxu0 %v1212
    %1771 = vmatpush.bf16.msra.mxu0 %v1204
    %1772 = vmatpush.bf16.msra.mxu0 %v1196
    %1773 = vmatpush.bf16.msra.mxu0 %v1188
    %1774 = vmatpush.bf16.msra.mxu0 %v1180
    %1775 = vmatpush.bf16.msra.mxu0 %v1172
    %1776 = vmatpush.bf16.msra.mxu0 %v1164
    %1777 = vmatpush.bf16.msra.mxu0 %v1156
    %1778 = vmatmul.bf16.gmra.mxu0 %v62
    %v1779 = vpop.f32.mrf.mxu0
    %v1780 = vadd.f32 %v1767, %v1779
    %v1781 = vpop.f32.mrf.mxu0
    %1782 = vdwg.mxu0
    %1783 = vmatpush.bf16.msra.mxu0 %v1276
    %1784 = vmatpush.bf16.msra.mxu0 %v1268
    %1785 = vmatpush.bf16.msra.mxu0 %v1260
    %1786 = vmatpush.bf16.msra.mxu0 %v1252
    %1787 = vmatpush.bf16.msra.mxu0 %v1244
    %1788 = vmatpush.bf16.msra.mxu0 %v1236
    %1789 = vmatpush.bf16.msra.mxu0 %v1228
    %1790 = vmatpush.bf16.msra.mxu0 %v1220
    %1791 = vmatmul.bf16.gmra.mxu0 %v63
    %v1792 = vpop.f32.mrf.mxu0
    %v1793 = vadd.f32 %v1780, %v1792
    %v1794 = vpop.f32.mrf.mxu0
    %1795 = vdwg.mxu0
    %1796 = vmatpush.bf16.msra.mxu0 %v1340
    %1797 = vmatpush.bf16.msra.mxu0 %v1332
    %1798 = vmatpush.bf16.msra.mxu0 %v1324
    %1799 = vmatpush.bf16.msra.mxu0 %v1316
    %1800 = vmatpush.bf16.msra.mxu0 %v1308
    %1801 = vmatpush.bf16.msra.mxu0 %v1300
    %1802 = vmatpush.bf16.msra.mxu0 %v1292
    %1803 = vmatpush.bf16.msra.mxu0 %v1284
    %1804 = vmatmul.bf16.gmra.mxu0 %v64
    %v1805 = vpop.f32.mrf.mxu0
    %v1806 = vadd.f32 %v1793, %v1805
    %v1807 = vpop.f32.mrf.mxu0
    %1808 = vdwg.mxu0
    %1809 = vmatpush.bf16.msra.mxu0 %v1149
    %1810 = vmatpush.bf16.msra.mxu0 %v1141
    %1811 = vmatpush.bf16.msra.mxu0 %v1133
    %1812 = vmatpush.bf16.msra.mxu0 %v1125
    %1813 = vmatpush.bf16.msra.mxu0 %v1117
    %1814 = vmatpush.bf16.msra.mxu0 %v1109
    %1815 = vmatpush.bf16.msra.mxu0 %v1101
    %1816 = vmatpush.bf16.msra.mxu0 %v1093
    %1817 = vmatmul.bf16.gmra.mxu0 %v61
    %v1818 = vpop.f32.mrf.mxu0
    %v1819 = vadd.f32 0.0, %v1818
    %v1820 = vpop.f32.mrf.mxu0
    %1821 = vdwg.mxu0
    %1822 = vmatpush.bf16.msra.mxu0 %v1213
    %1823 = vmatpush.bf16.msra.mxu0 %v1205
    %1824 = vmatpush.bf16.msra.mxu0 %v1197
    %1825 = vmatpush.bf16.msra.mxu0 %v1189
    %1826 = vmatpush.bf16.msra.mxu0 %v1181
    %1827 = vmatpush.bf16.msra.mxu0 %v1173
    %1828 = vmatpush.bf16.msra.mxu0 %v1165
    %1829 = vmatpush.bf16.msra.mxu0 %v1157
    %1830 = vmatmul.bf16.gmra.mxu0 %v62
    %v1831 = vpop.f32.mrf.mxu0
    %v1832 = vadd.f32 %v1819, %v1831
    %v1833 = vpop.f32.mrf.mxu0
    %1834 = vdwg.mxu0
    %1835 = vmatpush.bf16.msra.mxu0 %v1277
    %1836 = vmatpush.bf16.msra.mxu0 %v1269
    %1837 = vmatpush.bf16.msra.mxu0 %v1261
    %1838 = vmatpush.bf16.msra.mxu0 %v1253
    %1839 = vmatpush.bf16.msra.mxu0 %v1245
    %1840 = vmatpush.bf16.msra.mxu0 %v1237
    %1841 = vmatpush.bf16.msra.mxu0 %v1229
    %1842 = vmatpush.bf16.msra.mxu0 %v1221
    %1843 = vmatmul.bf16.gmra.mxu0 %v63
    %v1844 = vpop.f32.mrf.mxu0
    %v1845 = vadd.f32 %v1832, %v1844
    %v1846 = vpop.f32.mrf.mxu0
    %1847 = vdwg.mxu0
    %1848 = vmatpush.bf16.msra.mxu0 %v1341
    %1849 = vmatpush.bf16.msra.mxu0 %v1333
    %1850 = vmatpush.bf16.msra.mxu0 %v1325
    %1851 = vmatpush.bf16.msra.mxu0 %v1317
    %1852 = vmatpush.bf16.msra.mxu0 %v1309
    %1853 = vmatpush.bf16.msra.mxu0 %v1301
    %1854 = vmatpush.bf16.msra.mxu0 %v1293
    %1855 = vmatpush.bf16.msra.mxu0 %v1285
    %1856 = vmatmul.bf16.gmra.mxu0 %v64
    %v1857 = vpop.f32.mrf.mxu0
    %v1858 = vadd.f32 %v1845, %v1857
    %v1859 = vpop.f32.mrf.mxu0
    %1860 = vdwg.mxu0
    %1861 = vmatpush.bf16.msra.mxu0 %v1150
    %1862 = vmatpush.bf16.msra.mxu0 %v1142
    %1863 = vmatpush.bf16.msra.mxu0 %v1134
    %1864 = vmatpush.bf16.msra.mxu0 %v1126
    %1865 = vmatpush.bf16.msra.mxu0 %v1118
    %1866 = vmatpush.bf16.msra.mxu0 %v1110
    %1867 = vmatpush.bf16.msra.mxu0 %v1102
    %1868 = vmatpush.bf16.msra.mxu0 %v1094
    %1869 = vmatmul.bf16.gmra.mxu0 %v61
    %v1870 = vpop.f32.mrf.mxu0
    %v1871 = vadd.f32 0.0, %v1870
    %v1872 = vpop.f32.mrf.mxu0
    %1873 = vdwg.mxu0
    %1874 = vmatpush.bf16.msra.mxu0 %v1214
    %1875 = vmatpush.bf16.msra.mxu0 %v1206
    %1876 = vmatpush.bf16.msra.mxu0 %v1198
    %1877 = vmatpush.bf16.msra.mxu0 %v1190
    %1878 = vmatpush.bf16.msra.mxu0 %v1182
    %1879 = vmatpush.bf16.msra.mxu0 %v1174
    %1880 = vmatpush.bf16.msra.mxu0 %v1166
    %1881 = vmatpush.bf16.msra.mxu0 %v1158
    %1882 = vmatmul.bf16.gmra.mxu0 %v62
    %v1883 = vpop.f32.mrf.mxu0
    %v1884 = vadd.f32 %v1871, %v1883
    %v1885 = vpop.f32.mrf.mxu0
    %1886 = vdwg.mxu0
    %1887 = vmatpush.bf16.msra.mxu0 %v1278
    %1888 = vmatpush.bf16.msra.mxu0 %v1270
    %1889 = vmatpush.bf16.msra.mxu0 %v1262
    %1890 = vmatpush.bf16.msra.mxu0 %v1254
    %1891 = vmatpush.bf16.msra.mxu0 %v1246
    %1892 = vmatpush.bf16.msra.mxu0 %v1238
    %1893 = vmatpush.bf16.msra.mxu0 %v1230
    %1894 = vmatpush.bf16.msra.mxu0 %v1222
    %1895 = vmatmul.bf16.gmra.mxu0 %v63
    %v1896 = vpop.f32.mrf.mxu0
    %v1897 = vadd.f32 %v1884, %v1896
    %v1898 = vpop.f32.mrf.mxu0
    %1899 = vdwg.mxu0
    %1900 = vmatpush.bf16.msra.mxu0 %v1342
    %1901 = vmatpush.bf16.msra.mxu0 %v1334
    %1902 = vmatpush.bf16.msra.mxu0 %v1326
    %1903 = vmatpush.bf16.msra.mxu0 %v1318
    %1904 = vmatpush.bf16.msra.mxu0 %v1310
    %1905 = vmatpush.bf16.msra.mxu0 %v1302
    %1906 = vmatpush.bf16.msra.mxu0 %v1294
    %1907 = vmatpush.bf16.msra.mxu0 %v1286
    %1908 = vmatmul.bf16.gmra.mxu0 %v64
    %v1909 = vpop.f32.mrf.mxu0
    %v1910 = vadd.f32 %v1897, %v1909
    %v1911 = vpop.f32.mrf.mxu0
    %1912 = vdwg.mxu0
    %1913 = vmatpush.bf16.msra.mxu0 %v1151
    %1914 = vmatpush.bf16.msra.mxu0 %v1143
    %1915 = vmatpush.bf16.msra.mxu0 %v1135
    %1916 = vmatpush.bf16.msra.mxu0 %v1127
    %1917 = vmatpush.bf16.msra.mxu0 %v1119
    %1918 = vmatpush.bf16.msra.mxu0 %v1111
    %1919 = vmatpush.bf16.msra.mxu0 %v1103
    %1920 = vmatpush.bf16.msra.mxu0 %v1095
    %1921 = vmatmul.bf16.gmra.mxu0 %v61
    %v1922 = vpop.f32.mrf.mxu0
    %v1923 = vadd.f32 0.0, %v1922
    %v1924 = vpop.f32.mrf.mxu0
    %1925 = vdwg.mxu0
    %1926 = vmatpush.bf16.msra.mxu0 %v1215
    %1927 = vmatpush.bf16.msra.mxu0 %v1207
    %1928 = vmatpush.bf16.msra.mxu0 %v1199
    %1929 = vmatpush.bf16.msra.mxu0 %v1191
    %1930 = vmatpush.bf16.msra.mxu0 %v1183
    %1931 = vmatpush.bf16.msra.mxu0 %v1175
    %1932 = vmatpush.bf16.msra.mxu0 %v1167
    %1933 = vmatpush.bf16.msra.mxu0 %v1159
    %1934 = vmatmul.bf16.gmra.mxu0 %v62
    %v1935 = vpop.f32.mrf.mxu0
    %v1936 = vadd.f32 %v1923, %v1935
    %v1937 = vpop.f32.mrf.mxu0
    %1938 = vdwg.mxu0
    %1939 = vmatpush.bf16.msra.mxu0 %v1279
    %1940 = vmatpush.bf16.msra.mxu0 %v1271
    %1941 = vmatpush.bf16.msra.mxu0 %v1263
    %1942 = vmatpush.bf16.msra.mxu0 %v1255
    %1943 = vmatpush.bf16.msra.mxu0 %v1247
    %1944 = vmatpush.bf16.msra.mxu0 %v1239
    %1945 = vmatpush.bf16.msra.mxu0 %v1231
    %1946 = vmatpush.bf16.msra.mxu0 %v1223
    %1947 = vmatmul.bf16.gmra.mxu0 %v63
    %v1948 = vpop.f32.mrf.mxu0
    %v1949 = vadd.f32 %v1936, %v1948
    %v1950 = vpop.f32.mrf.mxu0
    %1951 = vdwg.mxu0
    %1952 = vmatpush.bf16.msra.mxu0 %v1343
    %1953 = vmatpush.bf16.msra.mxu0 %v1335
    %1954 = vmatpush.bf16.msra.mxu0 %v1327
    %1955 = vmatpush.bf16.msra.mxu0 %v1319
    %1956 = vmatpush.bf16.msra.mxu0 %v1311
    %1957 = vmatpush.bf16.msra.mxu0 %v1303
    %1958 = vmatpush.bf16.msra.mxu0 %v1295
    %1959 = vmatpush.bf16.msra.mxu0 %v1287
    %1960 = vmatmul.bf16.gmra.mxu0 %v64
    %v1961 = vpop.f32.mrf.mxu0
    %v1962 = vadd.f32 %v1949, %v1961
    %v1963 = vpop.f32.mrf.mxu0
    %1964 = vdwg.mxu0
    %1965 = vmatpush.bf16.msra.mxu0 %v1152
    %1966 = vmatpush.bf16.msra.mxu0 %v1144
    %1967 = vmatpush.bf16.msra.mxu0 %v1136
    %1968 = vmatpush.bf16.msra.mxu0 %v1128
    %1969 = vmatpush.bf16.msra.mxu0 %v1120
    %1970 = vmatpush.bf16.msra.mxu0 %v1112
    %1971 = vmatpush.bf16.msra.mxu0 %v1104
    %1972 = vmatpush.bf16.msra.mxu0 %v1096
    %1973 = vmatmul.bf16.gmra.mxu0 %v61
    %v1974 = vpop.f32.mrf.mxu0
    %v1975 = vadd.f32 0.0, %v1974
    %v1976 = vpop.f32.mrf.mxu0
    %1977 = vdwg.mxu0
    %1978 = vmatpush.bf16.msra.mxu0 %v1216
    %1979 = vmatpush.bf16.msra.mxu0 %v1208
    %1980 = vmatpush.bf16.msra.mxu0 %v1200
    %1981 = vmatpush.bf16.msra.mxu0 %v1192
    %1982 = vmatpush.bf16.msra.mxu0 %v1184
    %1983 = vmatpush.bf16.msra.mxu0 %v1176
    %1984 = vmatpush.bf16.msra.mxu0 %v1168
    %1985 = vmatpush.bf16.msra.mxu0 %v1160
    %1986 = vmatmul.bf16.gmra.mxu0 %v62
    %v1987 = vpop.f32.mrf.mxu0
    %v1988 = vadd.f32 %v1975, %v1987
    %v1989 = vpop.f32.mrf.mxu0
    %1990 = vdwg.mxu0
    %1991 = vmatpush.bf16.msra.mxu0 %v1280
    %1992 = vmatpush.bf16.msra.mxu0 %v1272
    %1993 = vmatpush.bf16.msra.mxu0 %v1264
    %1994 = vmatpush.bf16.msra.mxu0 %v1256
    %1995 = vmatpush.bf16.msra.mxu0 %v1248
    %1996 = vmatpush.bf16.msra.mxu0 %v1240
    %1997 = vmatpush.bf16.msra.mxu0 %v1232
    %1998 = vmatpush.bf16.msra.mxu0 %v1224
    %1999 = vmatmul.bf16.gmra.mxu0 %v63
    %v2000 = vpop.f32.mrf.mxu0
    %v2001 = vadd.f32 %v1988, %v2000
    %v2002 = vpop.f32.mrf.mxu0
    %2003 = vdwg.mxu0
    %2004 = vmatpush.bf16.msra.mxu0 %v1344
    %2005 = vmatpush.bf16.msra.mxu0 %v1336
    %2006 = vmatpush.bf16.msra.mxu0 %v1328
    %2007 = vmatpush.bf16.msra.mxu0 %v1320
    %2008 = vmatpush.bf16.msra.mxu0 %v1312
    %2009 = vmatpush.bf16.msra.mxu0 %v1304
    %2010 = vmatpush.bf16.msra.mxu0 %v1296
    %2011 = vmatpush.bf16.msra.mxu0 %v1288
    %2012 = vmatmul.bf16.gmra.mxu0 %v64
    %v2013 = vpop.f32.mrf.mxu0
    %v2014 = vadd.f32 %v2001, %v2013
    %v2015 = vpop.f32.mrf.mxu0
    %2016 = vdwg.mxu0
    %vm2017 = vcmask 1041408
    %v2018 = vsel %vm2017, %v1650, 0.0
    %v2019 = vsel %vm2017, %v1702, 0.0
    %v2020 = vadd.f32 %v2018, %v2019
    %v2021 = vsel %vm2017, %v1754, 0.0
    %v2022 = vadd.f32 %v2020, %v2021
    %v2023 = vsel %vm2017, %v1806, 0.0
    %v2024 = vadd.f32 %v2022, %v2023
    %v2025 = vsel %vm2017, %v1858, 0.0
    %v2026 = vadd.f32 %v2024, %v2025
    %v2027 = vsel %vm2017, %v1910, 0.0
    %v2028 = vadd.f32 %v2026, %v2027
    %v2029 = vsel %vm2017, %v1962, 0.0
    %v2030 = vadd.f32 %v2028, %v2029
    %v2031 = vsel %vm2017, %v2014, 0.0
    %v2032 = vadd.f32 %v2030, %v2031
    %2033 = vadd.xlane.f32.xlu0 %v2032
    %v2034 = vpop.xlane.xlu0 %2033
    %v2035 = vmul.f32 %v1650, %v1650
    %v2036 = vmul.f32 %v1702, %v1702
    %v2037 = vmul.f32 %v1754, %v1754
    %v2038 = vmul.f32 %v1806, %v1806
    %v2039 = vmul.f32 %v1858, %v1858
    %v2040 = vmul.f32 %v1910, %v1910
    %v2041 = vmul.f32 %v1962, %v1962
    %v2042 = vmul.f32 %v2014, %v2014
    %v2043 = vsel %vm2017, %v2035, 0.0
    %v2044 = vsel %vm2017, %v2036, 0.0
    %v2045 = vadd.f32 %v2043, %v2044
    %v2046 = vsel %vm2017, %v2037, 0.0
    %v2047 = vadd.f32 %v2045, %v2046
    %v2048 = vsel %vm2017, %v2038, 0.0
    %v2049 = vadd.f32 %v2047, %v2048
    %v2050 = vsel %vm2017, %v2039, 0.0
    %v2051 = vadd.f32 %v2049, %v2050
    %v2052 = vsel %vm2017, %v2040, 0.0
    %v2053 = vadd.f32 %v2051, %v2052
    %v2054 = vsel %vm2017, %v2041, 0.0
    %v2055 = vadd.f32 %v2053, %v2054
    %v2056 = vsel %vm2017, %v2042, 0.0
    %v2057 = vadd.f32 %v2055, %v2056
    %2058 = vadd.xlane.f32.xlu0 %v2057
    %v2059 = vpop.xlane.xlu0 %2058
    %v2060 = vmul.f32 %v2034, 0.0009765625
    %v2061 = vmul.f32 %v2059, 0.0009765625
    %v2062 = vmul.f32 %v2060, %v2060
    %v2063 = vsub.f32 %v2061, %v2062
    %v2064 = vmax.f32 %v2063, 0.0
    %v2065 = vsub.f32 %v1650, %v2060
    %v2066 = vsub.f32 %v1702, %v2060
    %v2067 = vsub.f32 %v1754, %v2060
    %v2068 = vsub.f32 %v1806, %v2060
    %v2069 = vsub.f32 %v1858, %v2060
    %v2070 = vsub.f32 %v1910, %v2060
    %v2071 = vsub.f32 %v1962, %v2060
    %v2072 = vsub.f32 %v2014, %v2060
    %v2073 = vadd.f32 %v2064, 1e-05
    %v2074 = vrsqrt.pop %v2073
    %v2075 = vmul.f32 %v2074, %v2073
    %v2076 = vmul.f32 %v2075, %v2074
    %v2077 = vmul.f32 0.5, %v2076
    %v2078 = vsub.f32 1.5, %v2077
    %v2079 = vmul.f32 %v2074, %v2078
    %vm2080 = vweird.f32 %v2073
    %vm2081 = vweird.f32 %v2074
    %vm2082 = vmor %vm2080, %vm2081
    %v2083 = vsel %vm2082, %v2074, %v2079
    %v2084 = vmul.f32 %v2065, %v2083
    %v2085 = vmul.f32 %v2066, %v2083
    %v2086 = vmul.f32 %v2067, %v2083
    %v2087 = vmul.f32 %v2068, %v2083
    %v2088 = vmul.f32 %v2069, %v2083
    %v2089 = vmul.f32 %v2070, %v2083
    %v2090 = vmul.f32 %v2071, %v2083
    %v2091 = vmul.f32 %v2072, %v2083
    %v2092 = vmax.f32 %v2084, 0.0
    %v2093 = vmax.f32 %v2085, 0.0
    %v2094 = vmax.f32 %v2086, 0.0
    %v2095 = vmax.f32 %v2087, 0.0
    %v2096 = vmax.f32 %v2088, 0.0
    %v2097 = vmax.f32 %v2089, 0.0
    %v2098 = vmax.f32 %v2090, 0.0
    %v2099 = vmax.f32 %v2091, 0.0
    %v2100 = vpack.c.bf16 %v2092, %v2092
    %v2101 = vpack.c.bf16 %v2093, %v2093
    %v2102 = vpack.c.bf16 %v2094, %v2094
    %v2103 = vpack.c.bf16 %v2095, %v2095
    %v2104 = vpack.c.bf16 %v2096, %v2096
    %v2105 = vpack.c.bf16 %v2097, %v2097
    %v2106 = vpack.c.bf16 %v2098, %v2098
    %v2107 = vpack.c.bf16 %v2099, %v2099
    %v2108 = vld [vmem:[#allocation5] sm:$0xff]
    %v2109 = vld [vmem:[#allocation5 + $0x8] sm:$0xff]
    %v2110 = vld [vmem:[#allocation5 + $0x10] sm:$0xff]
    %v2111 = vld [vmem:[#allocation5 + $0x18] sm:$0xff]
    %v2112 = vld [vmem:[#allocation5 + $0x20] sm:$0xff]
    %v2113 = vld [vmem:[#allocation5 + $0x28] sm:$0xff]
    %v2114 = vld [vmem:[#allocation5 + $0x30] sm:$0xff]
    %v2115 = vld [vmem:[#allocation5 + $0x38] sm:$0xff]
    %v2116 = vld [vmem:[#allocation5 + $0x40] sm:$0xff]
    %v2117 = vld [vmem:[#allocation5 + $0x48] sm:$0xff]
    %v2118 = vld [vmem:[#allocation5 + $0x50] sm:$0xff]
    %v2119 = vld [vmem:[#allocation5 + $0x58] sm:$0xff]
    %v2120 = vld [vmem:[#allocation5 + $0x60] sm:$0xff]
    %v2121 = vld [vmem:[#allocation5 + $0x68] sm:$0xff]
    %v2122 = vld [vmem:[#allocation5 + $0x70] sm:$0xff]
    %v2123 = vld [vmem:[#allocation5 + $0x78] sm:$0xff]
    %v2124 = vld [vmem:[#allocation5 + $0x80] sm:$0xff]
    %v2125 = vld [vmem:[#allocation5 + $0x88] sm:$0xff]
    %v2126 = vld [vmem:[#allocation5 + $0x90] sm:$0xff]
    %v2127 = vld [vmem:[#allocation5 + $0x98] sm:$0xff]
    %v2128 = vld [vmem:[#allocation5 + $0xa0] sm:$0xff]
    %v2129 = vld [vmem:[#allocation5 + $0xa8] sm:$0xff]
    %v2130 = vld [vmem:[#allocation5 + $0xb0] sm:$0xff]
    %v2131 = vld [vmem:[#allocation5 + $0xb8] sm:$0xff]
    %v2132 = vld [vmem:[#allocation5 + $0xc0] sm:$0xff]
    %v2133 = vld [vmem:[#allocation5 + $0xc8] sm:$0xff]
    %v2134 = vld [vmem:[#allocation5 + $0xd0] sm:$0xff]
    %v2135 = vld [vmem:[#allocation5 + $0xd8] sm:$0xff]
    %v2136 = vld [vmem:[#allocation5 + $0xe0] sm:$0xff]
    %v2137 = vld [vmem:[#allocation5 + $0xe8] sm:$0xff]
    %v2138 = vld [vmem:[#allocation5 + $0xf0] sm:$0xff]
    %v2139 = vld [vmem:[#allocation5 + $0xf8] sm:$0xff]
    %v2140 = vld [vmem:[#allocation5 + $0x100] sm:$0xff]
    %v2141 = vld [vmem:[#allocation5 + $0x108] sm:$0xff]
    %v2142 = vld [vmem:[#allocation5 + $0x110] sm:$0xff]
    %v2143 = vld [vmem:[#allocation5 + $0x118] sm:$0xff]
    %v2144 = vld [vmem:[#allocation5 + $0x120] sm:$0xff]
    %v2145 = vld [vmem:[#allocation5 + $0x128] sm:$0xff]
    %v2146 = vld [vmem:[#allocation5 + $0x130] sm:$0xff]
    %v2147 = vld [vmem:[#allocation5 + $0x138] sm:$0xff]
    %v2148 = vld [vmem:[#allocation5 + $0x140] sm:$0xff]
    %v2149 = vld [vmem:[#allocation5 + $0x148] sm:$0xff]
    %v2150 = vld [vmem:[#allocation5 + $0x150] sm:$0xff]
    %v2151 = vld [vmem:[#allocation5 + $0x158] sm:$0xff]
    %v2152 = vld [vmem:[#allocation5 + $0x160] sm:$0xff]
    %v2153 = vld [vmem:[#allocation5 + $0x168] sm:$0xff]
    %v2154 = vld [vmem:[#allocation5 + $0x170] sm:$0xff]
    %v2155 = vld [vmem:[#allocation5 + $0x178] sm:$0xff]
    %v2156 = vld [vmem:[#allocation5 + $0x180] sm:$0xff]
    %v2157 = vld [vmem:[#allocation5 + $0x188] sm:$0xff]
    %v2158 = vld [vmem:[#allocation5 + $0x190] sm:$0xff]
    %v2159 = vld [vmem:[#allocation5 + $0x198] sm:$0xff]
    %v2160 = vld [vmem:[#allocation5 + $0x1a0] sm:$0xff]
    %v2161 = vld [vmem:[#allocation5 + $0x1a8] sm:$0xff]
    %v2162 = vld [vmem:[#allocation5 + $0x1b0] sm:$0xff]
    %v2163 = vld [vmem:[#allocation5 + $0x1b8] sm:$0xff]
    %v2164 = vld [vmem:[#allocation5 + $0x1c0] sm:$0xff]
    %v2165 = vld [vmem:[#allocation5 + $0x1c8] sm:$0xff]
    %v2166 = vld [vmem:[#allocation5 + $0x1d0] sm:$0xff]
    %v2167 = vld [vmem:[#allocation5 + $0x1d8] sm:$0xff]
    %v2168 = vld [vmem:[#allocation5 + $0x1e0] sm:$0xff]
    %v2169 = vld [vmem:[#allocation5 + $0x1e8] sm:$0xff]
    %v2170 = vld [vmem:[#allocation5 + $0x1f0] sm:$0xff]
    %v2171 = vld [vmem:[#allocation5 + $0x1f8] sm:$0xff]
    %v2172 = vld [vmem:[#allocation5 + $0x200] sm:$0xff]
    %v2173 = vld [vmem:[#allocation5 + $0x208] sm:$0xff]
    %v2174 = vld [vmem:[#allocation5 + $0x210] sm:$0xff]
    %v2175 = vld [vmem:[#allocation5 + $0x218] sm:$0xff]
    %v2176 = vld [vmem:[#allocation5 + $0x220] sm:$0xff]
    %v2177 = vld [vmem:[#allocation5 + $0x228] sm:$0xff]
    %v2178 = vld [vmem:[#allocation5 + $0x230] sm:$0xff]
    %v2179 = vld [vmem:[#allocation5 + $0x238] sm:$0xff]
    %v2180 = vld [vmem:[#allocation5 + $0x240] sm:$0xff]
    %v2181 = vld [vmem:[#allocation5 + $0x248] sm:$0xff]
    %v2182 = vld [vmem:[#allocation5 + $0x250] sm:$0xff]
    %v2183 = vld [vmem:[#allocation5 + $0x258] sm:$0xff]
    %v2184 = vld [vmem:[#allocation5 + $0x260] sm:$0xff]
    %v2185 = vld [vmem:[#allocation5 + $0x268] sm:$0xff]
    %v2186 = vld [vmem:[#allocation5 + $0x270] sm:$0xff]
    %v2187 = vld [vmem:[#allocation5 + $0x278] sm:$0xff]
    %v2188 = vld [vmem:[#allocation5 + $0x280] sm:$0xff]
    %v2189 = vld [vmem:[#allocation5 + $0x288] sm:$0xff]
    %v2190 = vld [vmem:[#allocation5 + $0x290] sm:$0xff]
    %v2191 = vld [vmem:[#allocation5 + $0x298] sm:$0xff]
    %v2192 = vld [vmem:[#allocation5 + $0x2a0] sm:$0xff]
    %v2193 = vld [vmem:[#allocation5 + $0x2a8] sm:$0xff]
    %v2194 = vld [vmem:[#allocation5 + $0x2b0] sm:$0xff]
    %v2195 = vld [vmem:[#allocation5 + $0x2b8] sm:$0xff]
    %v2196 = vld [vmem:[#allocation5 + $0x2c0] sm:$0xff]
    %v2197 = vld [vmem:[#allocation5 + $0x2c8] sm:$0xff]
    %v2198 = vld [vmem:[#allocation5 + $0x2d0] sm:$0xff]
    %v2199 = vld [vmem:[#allocation5 + $0x2d8] sm:$0xff]
    %v2200 = vld [vmem:[#allocation5 + $0x2e0] sm:$0xff]
    %v2201 = vld [vmem:[#allocation5 + $0x2e8] sm:$0xff]
    %v2202 = vld [vmem:[#allocation5 + $0x2f0] sm:$0xff]
    %v2203 = vld [vmem:[#allocation5 + $0x2f8] sm:$0xff]
    %v2204 = vld [vmem:[#allocation5 + $0x300] sm:$0xff]
    %v2205 = vld [vmem:[#allocation5 + $0x308] sm:$0xff]
    %v2206 = vld [vmem:[#allocation5 + $0x310] sm:$0xff]
    %v2207 = vld [vmem:[#allocation5 + $0x318] sm:$0xff]
    %v2208 = vld [vmem:[#allocation5 + $0x320] sm:$0xff]
    %v2209 = vld [vmem:[#allocation5 + $0x328] sm:$0xff]
    %v2210 = vld [vmem:[#allocation5 + $0x330] sm:$0xff]
    %v2211 = vld [vmem:[#allocation5 + $0x338] sm:$0xff]
    %v2212 = vld [vmem:[#allocation5 + $0x340] sm:$0xff]
    %v2213 = vld [vmem:[#allocation5 + $0x348] sm:$0xff]
    %v2214 = vld [vmem:[#allocation5 + $0x350] sm:$0xff]
    %v2215 = vld [vmem:[#allocation5 + $0x358] sm:$0xff]
    %v2216 = vld [vmem:[#allocation5 + $0x360] sm:$0xff]
    %v2217 = vld [vmem:[#allocation5 + $0x368] sm:$0xff]
    %v2218 = vld [vmem:[#allocation5 + $0x370] sm:$0xff]
    %v2219 = vld [vmem:[#allocation5 + $0x378] sm:$0xff]
    %v2220 = vld [vmem:[#allocation5 + $0x380] sm:$0xff]
    %v2221 = vld [vmem:[#allocation5 + $0x388] sm:$0xff]
    %v2222 = vld [vmem:[#allocation5 + $0x390] sm:$0xff]
    %v2223 = vld [vmem:[#allocation5 + $0x398] sm:$0xff]
    %v2224 = vld [vmem:[#allocation5 + $0x3a0] sm:$0xff]
    %v2225 = vld [vmem:[#allocation5 + $0x3a8] sm:$0xff]
    %v2226 = vld [vmem:[#allocation5 + $0x3b0] sm:$0xff]
    %v2227 = vld [vmem:[#allocation5 + $0x3b8] sm:$0xff]
    %v2228 = vld [vmem:[#allocation5 + $0x3c0] sm:$0xff]
    %v2229 = vld [vmem:[#allocation5 + $0x3c8] sm:$0xff]
    %v2230 = vld [vmem:[#allocation5 + $0x3d0] sm:$0xff]
    %v2231 = vld [vmem:[#allocation5 + $0x3d8] sm:$0xff]
    %v2232 = vld [vmem:[#allocation5 + $0x3e0] sm:$0xff]
    %v2233 = vld [vmem:[#allocation5 + $0x3e8] sm:$0xff]
    %v2234 = vld [vmem:[#allocation5 + $0x3f0] sm:$0xff]
    %v2235 = vld [vmem:[#allocation5 + $0x3f8] sm:$0xff]
    %v2236 = vld [vmem:[%s3] sm:$0x3]
    %v2238 = vperm.slane %v2236, 0
    %v2239 = vperm.slane %v2236, 1
    %v2370 = vunpack.c.l.b16 %v2108
    %v2371 = vunpack.c.h.b16 %v2108
    %v2372 = vunpack.c.l.b16 %v2109
    %v2373 = vunpack.c.h.b16 %v2109
    %v2374 = vunpack.c.l.b16 %v2110
    %v2375 = vunpack.c.h.b16 %v2110
    %v2376 = vunpack.c.l.b16 %v2111
    %v2377 = vunpack.c.h.b16 %v2111
    %v2378 = vunpack.c.l.b16 %v2112
    %v2379 = vunpack.c.h.b16 %v2112
    %v2380 = vunpack.c.l.b16 %v2113
    %v2381 = vunpack.c.h.b16 %v2113
    %v2382 = vunpack.c.l.b16 %v2114
    %v2383 = vunpack.c.h.b16 %v2114
    %v2384 = vunpack.c.l.b16 %v2115
    %v2385 = vunpack.c.h.b16 %v2115
    %v2386 = vunpack.c.l.b16 %v2116
    %v2387 = vunpack.c.h.b16 %v2116
    %v2388 = vunpack.c.l.b16 %v2117
    %v2389 = vunpack.c.h.b16 %v2117
    %v2390 = vunpack.c.l.b16 %v2118
    %v2391 = vunpack.c.h.b16 %v2118
    %v2392 = vunpack.c.l.b16 %v2119
    %v2393 = vunpack.c.h.b16 %v2119
    %v2394 = vunpack.c.l.b16 %v2120
    %v2395 = vunpack.c.h.b16 %v2120
    %v2396 = vunpack.c.l.b16 %v2121
    %v2397 = vunpack.c.h.b16 %v2121
    %v2398 = vunpack.c.l.b16 %v2122
    %v2399 = vunpack.c.h.b16 %v2122
    %v2400 = vunpack.c.l.b16 %v2123
    %v2401 = vunpack.c.h.b16 %v2123
    %v2402 = vunpack.c.l.b16 %v2124
    %v2403 = vunpack.c.h.b16 %v2124
    %v2404 = vunpack.c.l.b16 %v2125
    %v2405 = vunpack.c.h.b16 %v2125
    %v2406 = vunpack.c.l.b16 %v2126
    %v2407 = vunpack.c.h.b16 %v2126
    %v2408 = vunpack.c.l.b16 %v2127
    %v2409 = vunpack.c.h.b16 %v2127
    %v2410 = vunpack.c.l.b16 %v2128
    %v2411 = vunpack.c.h.b16 %v2128
    %v2412 = vunpack.c.l.b16 %v2129
    %v2413 = vunpack.c.h.b16 %v2129
    %v2414 = vunpack.c.l.b16 %v2130
    %v2415 = vunpack.c.h.b16 %v2130
    %v2416 = vunpack.c.l.b16 %v2131
    %v2417 = vunpack.c.h.b16 %v2131
    %v2418 = vunpack.c.l.b16 %v2132
    %v2419 = vunpack.c.h.b16 %v2132
    %v2420 = vunpack.c.l.b16 %v2133
    %v2421 = vunpack.c.h.b16 %v2133
    %v2422 = vunpack.c.l.b16 %v2134
    %v2423 = vunpack.c.h.b16 %v2134
    %v2424 = vunpack.c.l.b16 %v2135
    %v2425 = vunpack.c.h.b16 %v2135
    %v2426 = vunpack.c.l.b16 %v2136
    %v2427 = vunpack.c.h.b16 %v2136
    %v2428 = vunpack.c.l.b16 %v2137
    %v2429 = vunpack.c.h.b16 %v2137
    %v2430 = vunpack.c.l.b16 %v2138
    %v2431 = vunpack.c.h.b16 %v2138
    %v2432 = vunpack.c.l.b16 %v2139
    %v2433 = vunpack.c.h.b16 %v2139
    %v2434 = vunpack.c.l.b16 %v2140
    %v2435 = vunpack.c.h.b16 %v2140
    %v2436 = vunpack.c.l.b16 %v2141
    %v2437 = vunpack.c.h.b16 %v2141
    %v2438 = vunpack.c.l.b16 %v2142
    %v2439 = vunpack.c.h.b16 %v2142
    %v2440 = vunpack.c.l.b16 %v2143
    %v2441 = vunpack.c.h.b16 %v2143
    %v2442 = vunpack.c.l.b16 %v2144
    %v2443 = vunpack.c.h.b16 %v2144
    %v2444 = vunpack.c.l.b16 %v2145
    %v2445 = vunpack.c.h.b16 %v2145
    %v2446 = vunpack.c.l.b16 %v2146
    %v2447 = vunpack.c.h.b16 %v2146
    %v2448 = vunpack.c.l.b16 %v2147
    %v2449 = vunpack.c.h.b16 %v2147
    %v2450 = vunpack.c.l.b16 %v2148
    %v2451 = vunpack.c.h.b16 %v2148
    %v2452 = vunpack.c.l.b16 %v2149
    %v2453 = vunpack.c.h.b16 %v2149
    %v2454 = vunpack.c.l.b16 %v2150
    %v2455 = vunpack.c.h.b16 %v2150
    %v2456 = vunpack.c.l.b16 %v2151
    %v2457 = vunpack.c.h.b16 %v2151
    %v2458 = vunpack.c.l.b16 %v2152
    %v2459 = vunpack.c.h.b16 %v2152
    %v2460 = vunpack.c.l.b16 %v2153
    %v2461 = vunpack.c.h.b16 %v2153
    %v2462 = vunpack.c.l.b16 %v2154
    %v2463 = vunpack.c.h.b16 %v2154
    %v2464 = vunpack.c.l.b16 %v2155
    %v2465 = vunpack.c.h.b16 %v2155
    %v2466 = vunpack.c.l.b16 %v2156
    %v2467 = vunpack.c.h.b16 %v2156
    %v2468 = vunpack.c.l.b16 %v2157
    %v2469 = vunpack.c.h.b16 %v2157
    %v2470 = vunpack.c.l.b16 %v2158
    %v2471 = vunpack.c.h.b16 %v2158
    %v2472 = vunpack.c.l.b16 %v2159
    %v2473 = vunpack.c.h.b16 %v2159
    %v2474 = vunpack.c.l.b16 %v2160
    %v2475 = vunpack.c.h.b16 %v2160
    %v2476 = vunpack.c.l.b16 %v2161
    %v2477 = vunpack.c.h.b16 %v2161
    %v2478 = vunpack.c.l.b16 %v2162
    %v2479 = vunpack.c.h.b16 %v2162
    %v2480 = vunpack.c.l.b16 %v2163
    %v2481 = vunpack.c.h.b16 %v2163
    %v2482 = vunpack.c.l.b16 %v2164
    %v2483 = vunpack.c.h.b16 %v2164
    %v2484 = vunpack.c.l.b16 %v2165
    %v2485 = vunpack.c.h.b16 %v2165
    %v2486 = vunpack.c.l.b16 %v2166
    %v2487 = vunpack.c.h.b16 %v2166
    %v2488 = vunpack.c.l.b16 %v2167
    %v2489 = vunpack.c.h.b16 %v2167
    %v2490 = vunpack.c.l.b16 %v2168
    %v2491 = vunpack.c.h.b16 %v2168
    %v2492 = vunpack.c.l.b16 %v2169
    %v2493 = vunpack.c.h.b16 %v2169
    %v2494 = vunpack.c.l.b16 %v2170
    %v2495 = vunpack.c.h.b16 %v2170
    %v2496 = vunpack.c.l.b16 %v2171
    %v2497 = vunpack.c.h.b16 %v2171
    %v2498 = vunpack.c.l.b16 %v2172
    %v2499 = vunpack.c.h.b16 %v2172
    %v2500 = vunpack.c.l.b16 %v2173
    %v2501 = vunpack.c.h.b16 %v2173
    %v2502 = vunpack.c.l.b16 %v2174
    %v2503 = vunpack.c.h.b16 %v2174
    %v2504 = vunpack.c.l.b16 %v2175
    %v2505 = vunpack.c.h.b16 %v2175
    %v2506 = vunpack.c.l.b16 %v2176
    %v2507 = vunpack.c.h.b16 %v2176
    %v2508 = vunpack.c.l.b16 %v2177
    %v2509 = vunpack.c.h.b16 %v2177
    %v2510 = vunpack.c.l.b16 %v2178
    %v2511 = vunpack.c.h.b16 %v2178
    %v2512 = vunpack.c.l.b16 %v2179
    %v2513 = vunpack.c.h.b16 %v2179
    %v2514 = vunpack.c.l.b16 %v2180
    %v2515 = vunpack.c.h.b16 %v2180
    %v2516 = vunpack.c.l.b16 %v2181
    %v2517 = vunpack.c.h.b16 %v2181
    %v2518 = vunpack.c.l.b16 %v2182
    %v2519 = vunpack.c.h.b16 %v2182
    %v2520 = vunpack.c.l.b16 %v2183
    %v2521 = vunpack.c.h.b16 %v2183
    %v2522 = vunpack.c.l.b16 %v2184
    %v2523 = vunpack.c.h.b16 %v2184
    %v2524 = vunpack.c.l.b16 %v2185
    %v2525 = vunpack.c.h.b16 %v2185
    %v2526 = vunpack.c.l.b16 %v2186
    %v2527 = vunpack.c.h.b16 %v2186
    %v2528 = vunpack.c.l.b16 %v2187
    %v2529 = vunpack.c.h.b16 %v2187
    %v2530 = vunpack.c.l.b16 %v2188
    %v2531 = vunpack.c.h.b16 %v2188
    %v2532 = vunpack.c.l.b16 %v2189
    %v2533 = vunpack.c.h.b16 %v2189
    %v2534 = vunpack.c.l.b16 %v2190
    %v2535 = vunpack.c.h.b16 %v2190
    %v2536 = vunpack.c.l.b16 %v2191
    %v2537 = vunpack.c.h.b16 %v2191
    %v2538 = vunpack.c.l.b16 %v2192
    %v2539 = vunpack.c.h.b16 %v2192
    %v2540 = vunpack.c.l.b16 %v2193
    %v2541 = vunpack.c.h.b16 %v2193
    %v2542 = vunpack.c.l.b16 %v2194
    %v2543 = vunpack.c.h.b16 %v2194
    %v2544 = vunpack.c.l.b16 %v2195
    %v2545 = vunpack.c.h.b16 %v2195
    %v2546 = vunpack.c.l.b16 %v2196
    %v2547 = vunpack.c.h.b16 %v2196
    %v2548 = vunpack.c.l.b16 %v2197
    %v2549 = vunpack.c.h.b16 %v2197
    %v2550 = vunpack.c.l.b16 %v2198
    %v2551 = vunpack.c.h.b16 %v2198
    %v2552 = vunpack.c.l.b16 %v2199
    %v2553 = vunpack.c.h.b16 %v2199
    %v2554 = vunpack.c.l.b16 %v2200
    %v2555 = vunpack.c.h.b16 %v2200
    %v2556 = vunpack.c.l.b16 %v2201
    %v2557 = vunpack.c.h.b16 %v2201
    %v2558 = vunpack.c.l.b16 %v2202
    %v2559 = vunpack.c.h.b16 %v2202
    %v2560 = vunpack.c.l.b16 %v2203
    %v2561 = vunpack.c.h.b16 %v2203
    %v2562 = vunpack.c.l.b16 %v2204
    %v2563 = vunpack.c.h.b16 %v2204
    %v2564 = vunpack.c.l.b16 %v2205
    %v2565 = vunpack.c.h.b16 %v2205
    %v2566 = vunpack.c.l.b16 %v2206
    %v2567 = vunpack.c.h.b16 %v2206
    %v2568 = vunpack.c.l.b16 %v2207
    %v2569 = vunpack.c.h.b16 %v2207
    %v2570 = vunpack.c.l.b16 %v2208
    %v2571 = vunpack.c.h.b16 %v2208
    %v2572 = vunpack.c.l.b16 %v2209
    %v2573 = vunpack.c.h.b16 %v2209
    %v2574 = vunpack.c.l.b16 %v2210
    %v2575 = vunpack.c.h.b16 %v2210
    %v2576 = vunpack.c.l.b16 %v2211
    %v2577 = vunpack.c.h.b16 %v2211
    %v2578 = vunpack.c.l.b16 %v2212
    %v2579 = vunpack.c.h.b16 %v2212
    %v2580 = vunpack.c.l.b16 %v2213
    %v2581 = vunpack.c.h.b16 %v2213
    %v2582 = vunpack.c.l.b16 %v2214
    %v2583 = vunpack.c.h.b16 %v2214
    %v2584 = vunpack.c.l.b16 %v2215
    %v2585 = vunpack.c.h.b16 %v2215
    %v2586 = vunpack.c.l.b16 %v2216
    %v2587 = vunpack.c.h.b16 %v2216
    %v2588 = vunpack.c.l.b16 %v2217
    %v2589 = vunpack.c.h.b16 %v2217
    %v2590 = vunpack.c.l.b16 %v2218
    %v2591 = vunpack.c.h.b16 %v2218
    %v2592 = vunpack.c.l.b16 %v2219
    %v2593 = vunpack.c.h.b16 %v2219
    %v2594 = vunpack.c.l.b16 %v2220
    %v2595 = vunpack.c.h.b16 %v2220
    %v2596 = vunpack.c.l.b16 %v2221
    %v2597 = vunpack.c.h.b16 %v2221
    %v2598 = vunpack.c.l.b16 %v2222
    %v2599 = vunpack.c.h.b16 %v2222
    %v2600 = vunpack.c.l.b16 %v2223
    %v2601 = vunpack.c.h.b16 %v2223
    %v2602 = vunpack.c.l.b16 %v2224
    %v2603 = vunpack.c.h.b16 %v2224
    %v2604 = vunpack.c.l.b16 %v2225
    %v2605 = vunpack.c.h.b16 %v2225
    %v2606 = vunpack.c.l.b16 %v2226
    %v2607 = vunpack.c.h.b16 %v2226
    %v2608 = vunpack.c.l.b16 %v2227
    %v2609 = vunpack.c.h.b16 %v2227
    %v2610 = vunpack.c.l.b16 %v2228
    %v2611 = vunpack.c.h.b16 %v2228
    %v2612 = vunpack.c.l.b16 %v2229
    %v2613 = vunpack.c.h.b16 %v2229
    %v2614 = vunpack.c.l.b16 %v2230
    %v2615 = vunpack.c.h.b16 %v2230
    %v2616 = vunpack.c.l.b16 %v2231
    %v2617 = vunpack.c.h.b16 %v2231
    %v2618 = vunpack.c.l.b16 %v2232
    %v2619 = vunpack.c.h.b16 %v2232
    %v2620 = vunpack.c.l.b16 %v2233
    %v2621 = vunpack.c.h.b16 %v2233
    %v2622 = vunpack.c.l.b16 %v2234
    %v2623 = vunpack.c.h.b16 %v2234
    %v2624 = vunpack.c.l.b16 %v2235
    %v2625 = vunpack.c.h.b16 %v2235
    %v2626 = vpack.c.b16 %v2372, %v2370
    %v2627 = vpack.c.b16 %v2373, %v2371
    %v2628 = vpack.c.b16 %v2376, %v2374
    %v2629 = vpack.c.b16 %v2377, %v2375
    %v2630 = vpack.c.b16 %v2380, %v2378
    %v2631 = vpack.c.b16 %v2381, %v2379
    %v2632 = vpack.c.b16 %v2384, %v2382
    %v2633 = vpack.c.b16 %v2385, %v2383
    %v2634 = vpack.c.b16 %v2388, %v2386
    %v2635 = vpack.c.b16 %v2389, %v2387
    %v2636 = vpack.c.b16 %v2392, %v2390
    %v2637 = vpack.c.b16 %v2393, %v2391
    %v2638 = vpack.c.b16 %v2396, %v2394
    %v2639 = vpack.c.b16 %v2397, %v2395
    %v2640 = vpack.c.b16 %v2400, %v2398
    %v2641 = vpack.c.b16 %v2401, %v2399
    %v2642 = vpack.c.b16 %v2404, %v2402
    %v2643 = vpack.c.b16 %v2405, %v2403
    %v2644 = vpack.c.b16 %v2408, %v2406
    %v2645 = vpack.c.b16 %v2409, %v2407
    %v2646 = vpack.c.b16 %v2412, %v2410
    %v2647 = vpack.c.b16 %v2413, %v2411
    %v2648 = vpack.c.b16 %v2416, %v2414
    %v2649 = vpack.c.b16 %v2417, %v2415
    %v2650 = vpack.c.b16 %v2420, %v2418
    %v2651 = vpack.c.b16 %v2421, %v2419
    %v2652 = vpack.c.b16 %v2424, %v2422
    %v2653 = vpack.c.b16 %v2425, %v2423
    %v2654 = vpack.c.b16 %v2428, %v2426
    %v2655 = vpack.c.b16 %v2429, %v2427
    %v2656 = vpack.c.b16 %v2432, %v2430
    %v2657 = vpack.c.b16 %v2433, %v2431
    %v2658 = vpack.c.b16 %v2436, %v2434
    %v2659 = vpack.c.b16 %v2437, %v2435
    %v2660 = vpack.c.b16 %v2440, %v2438
    %v2661 = vpack.c.b16 %v2441, %v2439
    %v2662 = vpack.c.b16 %v2444, %v2442
    %v2663 = vpack.c.b16 %v2445, %v2443
    %v2664 = vpack.c.b16 %v2448, %v2446
    %v2665 = vpack.c.b16 %v2449, %v2447
    %v2666 = vpack.c.b16 %v2452, %v2450
    %v2667 = vpack.c.b16 %v2453, %v2451
    %v2668 = vpack.c.b16 %v2456, %v2454
    %v2669 = vpack.c.b16 %v2457, %v2455
    %v2670 = vpack.c.b16 %v2460, %v2458
    %v2671 = vpack.c.b16 %v2461, %v2459
    %v2672 = vpack.c.b16 %v2464, %v2462
    %v2673 = vpack.c.b16 %v2465, %v2463
    %v2674 = vpack.c.b16 %v2468, %v2466
    %v2675 = vpack.c.b16 %v2469, %v2467
    %v2676 = vpack.c.b16 %v2472, %v2470
    %v2677 = vpack.c.b16 %v2473, %v2471
    %v2678 = vpack.c.b16 %v2476, %v2474
    %v2679 = vpack.c.b16 %v2477, %v2475
    %v2680 = vpack.c.b16 %v2480, %v2478
    %v2681 = vpack.c.b16 %v2481, %v2479
    %v2682 = vpack.c.b16 %v2484, %v2482
    %v2683 = vpack.c.b16 %v2485, %v2483
    %v2684 = vpack.c.b16 %v2488, %v2486
    %v2685 = vpack.c.b16 %v2489, %v2487
    %v2686 = vpack.c.b16 %v2492, %v2490
    %v2687 = vpack.c.b16 %v2493, %v2491
    %v2688 = vpack.c.b16 %v2496, %v2494
    %v2689 = vpack.c.b16 %v2497, %v2495
    %v2690 = vpack.c.b16 %v2500, %v2498
    %v2691 = vpack.c.b16 %v2501, %v2499
    %v2692 = vpack.c.b16 %v2504, %v2502
    %v2693 = vpack.c.b16 %v2505, %v2503
    %v2694 = vpack.c.b16 %v2508, %v2506
    %v2695 = vpack.c.b16 %v2509, %v2507
    %v2696 = vpack.c.b16 %v2512, %v2510
    %v2697 = vpack.c.b16 %v2513, %v2511
    %v2698 = vpack.c.b16 %v2516, %v2514
    %v2699 = vpack.c.b16 %v2517, %v2515
    %v2700 = vpack.c.b16 %v2520, %v2518
    %v2701 = vpack.c.b16 %v2521, %v2519
    %v2702 = vpack.c.b16 %v2524, %v2522
    %v2703 = vpack.c.b16 %v2525, %v2523
    %v2704 = vpack.c.b16 %v2528, %v2526
    %v2705 = vpack.c.b16 %v2529, %v2527
    %v2706 = vpack.c.b16 %v2532, %v2530
    %v2707 = vpack.c.b16 %v2533, %v2531
    %v2708 = vpack.c.b16 %v2536, %v2534
    %v2709 = vpack.c.b16 %v2537, %v2535
    %v2710 = vpack.c.b16 %v2540, %v2538
    %v2711 = vpack.c.b16 %v2541, %v2539
    %v2712 = vpack.c.b16 %v2544, %v2542
    %v2713 = vpack.c.b16 %v2545, %v2543
    %v2714 = vpack.c.b16 %v2548, %v2546
    %v2715 = vpack.c.b16 %v2549, %v2547
    %v2716 = vpack.c.b16 %v2552, %v2550
    %v2717 = vpack.c.b16 %v2553, %v2551
    %v2718 = vpack.c.b16 %v2556, %v2554
    %v2719 = vpack.c.b16 %v2557, %v2555
    %v2720 = vpack.c.b16 %v2560, %v2558
    %v2721 = vpack.c.b16 %v2561, %v2559
    %v2722 = vpack.c.b16 %v2564, %v2562
    %v2723 = vpack.c.b16 %v2565, %v2563
    %v2724 = vpack.c.b16 %v2568, %v2566
    %v2725 = vpack.c.b16 %v2569, %v2567
    %v2726 = vpack.c.b16 %v2572, %v2570
    %v2727 = vpack.c.b16 %v2573, %v2571
    %v2728 = vpack.c.b16 %v2576, %v2574
    %v2729 = vpack.c.b16 %v2577, %v2575
    %v2730 = vpack.c.b16 %v2580, %v2578
    %v2731 = vpack.c.b16 %v2581, %v2579
    %v2732 = vpack.c.b16 %v2584, %v2582
    %v2733 = vpack.c.b16 %v2585, %v2583
    %v2734 = vpack.c.b16 %v2588, %v2586
    %v2735 = vpack.c.b16 %v2589, %v2587
    %v2736 = vpack.c.b16 %v2592, %v2590
    %v2737 = vpack.c.b16 %v2593, %v2591
    %v2738 = vpack.c.b16 %v2596, %v2594
    %v2739 = vpack.c.b16 %v2597, %v2595
    %v2740 = vpack.c.b16 %v2600, %v2598
    %v2741 = vpack.c.b16 %v2601, %v2599
    %v2742 = vpack.c.b16 %v2604, %v2602
    %v2743 = vpack.c.b16 %v2605, %v2603
    %v2744 = vpack.c.b16 %v2608, %v2606
    %v2745 = vpack.c.b16 %v2609, %v2607
    %v2746 = vpack.c.b16 %v2612, %v2610
    %v2747 = vpack.c.b16 %v2613, %v2611
    %v2748 = vpack.c.b16 %v2616, %v2614
    %v2749 = vpack.c.b16 %v2617, %v2615
    %v2750 = vpack.c.b16 %v2620, %v2618
    %v2751 = vpack.c.b16 %v2621, %v2619
    %v2752 = vpack.c.b16 %v2624, %v2622
    %v2753 = vpack.c.b16 %v2625, %v2623
    %2882 = vmatpush.bf16.msra.mxu0 %v2640
    %2883 = vmatpush.bf16.msra.mxu0 %v2638
    %2884 = vmatpush.bf16.msra.mxu0 %v2636
    %2885 = vmatpush.bf16.msra.mxu0 %v2634
    %2886 = vmatpush.bf16.msra.mxu0 %v2632
    %2887 = vmatpush.bf16.msra.mxu0 %v2630
    %2888 = vmatpush.bf16.msra.mxu0 %v2628
    %2889 = vmatpush.bf16.msra.mxu0 %v2626
    %2890 = vmatmul.bf16.gmra.mxu0 %v2100
    %v2891 = vpop.f32.mrf.mxu0
    %v2892 = vadd.f32 %v2238, %v2891
    %v2893 = vpop.f32.mrf.mxu0
    %2894 = vdwg.mxu0
    %2895 = vmatpush.bf16.msra.mxu0 %v2656
    %2896 = vmatpush.bf16.msra.mxu0 %v2654
    %2897 = vmatpush.bf16.msra.mxu0 %v2652
    %2898 = vmatpush.bf16.msra.mxu0 %v2650
    %2899 = vmatpush.bf16.msra.mxu0 %v2648
    %2900 = vmatpush.bf16.msra.mxu0 %v2646
    %2901 = vmatpush.bf16.msra.mxu0 %v2644
    %2902 = vmatpush.bf16.msra.mxu0 %v2642
    %2903 = vmatmul.bf16.gmra.mxu0 %v2101
    %v2904 = vpop.f32.mrf.mxu0
    %v2905 = vadd.f32 %v2892, %v2904
    %v2906 = vpop.f32.mrf.mxu0
    %2907 = vdwg.mxu0
    %2908 = vmatpush.bf16.msra.mxu0 %v2672
    %2909 = vmatpush.bf16.msra.mxu0 %v2670
    %2910 = vmatpush.bf16.msra.mxu0 %v2668
    %2911 = vmatpush.bf16.msra.mxu0 %v2666
    %2912 = vmatpush.bf16.msra.mxu0 %v2664
    %2913 = vmatpush.bf16.msra.mxu0 %v2662
    %2914 = vmatpush.bf16.msra.mxu0 %v2660
    %2915 = vmatpush.bf16.msra.mxu0 %v2658
    %2916 = vmatmul.bf16.gmra.mxu0 %v2102
    %v2917 = vpop.f32.mrf.mxu0
    %v2918 = vadd.f32 %v2905, %v2917
    %v2919 = vpop.f32.mrf.mxu0
    %2920 = vdwg.mxu0
    %2921 = vmatpush.bf16.msra.mxu0 %v2688
    %2922 = vmatpush.bf16.msra.mxu0 %v2686
    %2923 = vmatpush.bf16.msra.mxu0 %v2684
    %2924 = vmatpush.bf16.msra.mxu0 %v2682
    %2925 = vmatpush.bf16.msra.mxu0 %v2680
    %2926 = vmatpush.bf16.msra.mxu0 %v2678
    %2927 = vmatpush.bf16.msra.mxu0 %v2676
    %2928 = vmatpush.bf16.msra.mxu0 %v2674
    %2929 = vmatmul.bf16.gmra.mxu0 %v2103
    %v2930 = vpop.f32.mrf.mxu0
    %v2931 = vadd.f32 %v2918, %v2930
    %v2932 = vpop.f32.mrf.mxu0
    %2933 = vdwg.mxu0
    %2934 = vmatpush.bf16.msra.mxu0 %v2704
    %2935 = vmatpush.bf16.msra.mxu0 %v2702
    %2936 = vmatpush.bf16.msra.mxu0 %v2700
    %2937 = vmatpush.bf16.msra.mxu0 %v2698
    %2938 = vmatpush.bf16.msra.mxu0 %v2696
    %2939 = vmatpush.bf16.msra.mxu0 %v2694
    %2940 = vmatpush.bf16.msra.mxu0 %v2692
    %2941 = vmatpush.bf16.msra.mxu0 %v2690
    %2942 = vmatmul.bf16.gmra.mxu0 %v2104
    %v2943 = vpop.f32.mrf.mxu0
    %v2944 = vadd.f32 %v2931, %v2943
    %v2945 = vpop.f32.mrf.mxu0
    %2946 = vdwg.mxu0
    %2947 = vmatpush.bf16.msra.mxu0 %v2720
    %2948 = vmatpush.bf16.msra.mxu0 %v2718
    %2949 = vmatpush.bf16.msra.mxu0 %v2716
    %2950 = vmatpush.bf16.msra.mxu0 %v2714
    %2951 = vmatpush.bf16.msra.mxu0 %v2712
    %2952 = vmatpush.bf16.msra.mxu0 %v2710
    %2953 = vmatpush.bf16.msra.mxu0 %v2708
    %2954 = vmatpush.bf16.msra.mxu0 %v2706
    %2955 = vmatmul.bf16.gmra.mxu0 %v2105
    %v2956 = vpop.f32.mrf.mxu0
    %v2957 = vadd.f32 %v2944, %v2956
    %v2958 = vpop.f32.mrf.mxu0
    %2959 = vdwg.mxu0
    %2960 = vmatpush.bf16.msra.mxu0 %v2736
    %2961 = vmatpush.bf16.msra.mxu0 %v2734
    %2962 = vmatpush.bf16.msra.mxu0 %v2732
    %2963 = vmatpush.bf16.msra.mxu0 %v2730
    %2964 = vmatpush.bf16.msra.mxu0 %v2728
    %2965 = vmatpush.bf16.msra.mxu0 %v2726
    %2966 = vmatpush.bf16.msra.mxu0 %v2724
    %2967 = vmatpush.bf16.msra.mxu0 %v2722
    %2968 = vmatmul.bf16.gmra.mxu0 %v2106
    %v2969 = vpop.f32.mrf.mxu0
    %v2970 = vadd.f32 %v2957, %v2969
    %v2971 = vpop.f32.mrf.mxu0
    %2972 = vdwg.mxu0
    %2973 = vmatpush.bf16.msra.mxu0 %v2752
    %2974 = vmatpush.bf16.msra.mxu0 %v2750
    %2975 = vmatpush.bf16.msra.mxu0 %v2748
    %2976 = vmatpush.bf16.msra.mxu0 %v2746
    %2977 = vmatpush.bf16.msra.mxu0 %v2744
    %2978 = vmatpush.bf16.msra.mxu0 %v2742
    %2979 = vmatpush.bf16.msra.mxu0 %v2740
    %2980 = vmatpush.bf16.msra.mxu0 %v2738
    %2981 = vmatmul.bf16.gmra.mxu0 %v2107
    %v2982 = vpop.f32.mrf.mxu0
    %v2983 = vadd.f32 %v2970, %v2982
    %v2984 = vpop.f32.mrf.mxu0
    %2985 = vdwg.mxu0
    %2986 = vmatpush.bf16.msra.mxu0 %v2641
    %2987 = vmatpush.bf16.msra.mxu0 %v2639
    %2988 = vmatpush.bf16.msra.mxu0 %v2637
    %2989 = vmatpush.bf16.msra.mxu0 %v2635
    %2990 = vmatpush.bf16.msra.mxu0 %v2633
    %2991 = vmatpush.bf16.msra.mxu0 %v2631
    %2992 = vmatpush.bf16.msra.mxu0 %v2629
    %2993 = vmatpush.bf16.msra.mxu0 %v2627
    %2994 = vmatmul.bf16.gmra.mxu0 %v2100
    %v2995 = vpop.f32.mrf.mxu0
    %v2996 = vadd.f32 %v2239, %v2995
    %v2997 = vpop.f32.mrf.mxu0
    %2998 = vdwg.mxu0
    %2999 = vmatpush.bf16.msra.mxu0 %v2657
    %3000 = vmatpush.bf16.msra.mxu0 %v2655
    %3001 = vmatpush.bf16.msra.mxu0 %v2653
    %3002 = vmatpush.bf16.msra.mxu0 %v2651
    %3003 = vmatpush.bf16.msra.mxu0 %v2649
    %3004 = vmatpush.bf16.msra.mxu0 %v2647
    %3005 = vmatpush.bf16.msra.mxu0 %v2645
    %3006 = vmatpush.bf16.msra.mxu0 %v2643
    %3007 = vmatmul.bf16.gmra.mxu0 %v2101
    %v3008 = vpop.f32.mrf.mxu0
    %v3009 = vadd.f32 %v2996, %v3008
    %v3010 = vpop.f32.mrf.mxu0
    %3011 = vdwg.mxu0
    %3012 = vmatpush.bf16.msra.mxu0 %v2673
    %3013 = vmatpush.bf16.msra.mxu0 %v2671
    %3014 = vmatpush.bf16.msra.mxu0 %v2669
    %3015 = vmatpush.bf16.msra.mxu0 %v2667
    %3016 = vmatpush.bf16.msra.mxu0 %v2665
    %3017 = vmatpush.bf16.msra.mxu0 %v2663
    %3018 = vmatpush.bf16.msra.mxu0 %v2661
    %3019 = vmatpush.bf16.msra.mxu0 %v2659
    %3020 = vmatmul.bf16.gmra.mxu0 %v2102
    %v3021 = vpop.f32.mrf.mxu0
    %v3022 = vadd.f32 %v3009, %v3021
    %v3023 = vpop.f32.mrf.mxu0
    %3024 = vdwg.mxu0
    %3025 = vmatpush.bf16.msra.mxu0 %v2689
    %3026 = vmatpush.bf16.msra.mxu0 %v2687
    %3027 = vmatpush.bf16.msra.mxu0 %v2685
    %3028 = vmatpush.bf16.msra.mxu0 %v2683
    %3029 = vmatpush.bf16.msra.mxu0 %v2681
    %3030 = vmatpush.bf16.msra.mxu0 %v2679
    %3031 = vmatpush.bf16.msra.mxu0 %v2677
    %3032 = vmatpush.bf16.msra.mxu0 %v2675
    %3033 = vmatmul.bf16.gmra.mxu0 %v2103
    %v3034 = vpop.f32.mrf.mxu0
    %v3035 = vadd.f32 %v3022, %v3034
    %v3036 = vpop.f32.mrf.mxu0
    %3037 = vdwg.mxu0
    %3038 = vmatpush.bf16.msra.mxu0 %v2705
    %3039 = vmatpush.bf16.msra.mxu0 %v2703
    %3040 = vmatpush.bf16.msra.mxu0 %v2701
    %3041 = vmatpush.bf16.msra.mxu0 %v2699
    %3042 = vmatpush.bf16.msra.mxu0 %v2697
    %3043 = vmatpush.bf16.msra.mxu0 %v2695
    %3044 = vmatpush.bf16.msra.mxu0 %v2693
    %3045 = vmatpush.bf16.msra.mxu0 %v2691
    %3046 = vmatmul.bf16.gmra.mxu0 %v2104
    %v3047 = vpop.f32.mrf.mxu0
    %v3048 = vadd.f32 %v3035, %v3047
    %v3049 = vpop.f32.mrf.mxu0
    %3050 = vdwg.mxu0
    %3051 = vmatpush.bf16.msra.mxu0 %v2721
    %3052 = vmatpush.bf16.msra.mxu0 %v2719
    %3053 = vmatpush.bf16.msra.mxu0 %v2717
    %3054 = vmatpush.bf16.msra.mxu0 %v2715
    %3055 = vmatpush.bf16.msra.mxu0 %v2713
    %3056 = vmatpush.bf16.msra.mxu0 %v2711
    %3057 = vmatpush.bf16.msra.mxu0 %v2709
    %3058 = vmatpush.bf16.msra.mxu0 %v2707
    %3059 = vmatmul.bf16.gmra.mxu0 %v2105
    %v3060 = vpop.f32.mrf.mxu0
    %v3061 = vadd.f32 %v3048, %v3060
    %v3062 = vpop.f32.mrf.mxu0
    %3063 = vdwg.mxu0
    %3064 = vmatpush.bf16.msra.mxu0 %v2737
    %3065 = vmatpush.bf16.msra.mxu0 %v2735
    %3066 = vmatpush.bf16.msra.mxu0 %v2733
    %3067 = vmatpush.bf16.msra.mxu0 %v2731
    %3068 = vmatpush.bf16.msra.mxu0 %v2729
    %3069 = vmatpush.bf16.msra.mxu0 %v2727
    %3070 = vmatpush.bf16.msra.mxu0 %v2725
    %3071 = vmatpush.bf16.msra.mxu0 %v2723
    %3072 = vmatmul.bf16.gmra.mxu0 %v2106
    %v3073 = vpop.f32.mrf.mxu0
    %v3074 = vadd.f32 %v3061, %v3073
    %v3075 = vpop.f32.mrf.mxu0
    %3076 = vdwg.mxu0
    %3077 = vmatpush.bf16.msra.mxu0 %v2753
    %3078 = vmatpush.bf16.msra.mxu0 %v2751
    %3079 = vmatpush.bf16.msra.mxu0 %v2749
    %3080 = vmatpush.bf16.msra.mxu0 %v2747
    %3081 = vmatpush.bf16.msra.mxu0 %v2745
    %3082 = vmatpush.bf16.msra.mxu0 %v2743
    %3083 = vmatpush.bf16.msra.mxu0 %v2741
    %3084 = vmatpush.bf16.msra.mxu0 %v2739
    %3085 = vmatmul.bf16.gmra.mxu0 %v2107
    %v3086 = vpop.f32.mrf.mxu0
    %v3087 = vadd.f32 %v3074, %v3086
    %v3088 = vpop.f32.mrf.mxu0
    %3089 = vdwg.mxu0
    %v3092 = vrot.slane %v3087, 6
    %v3093 = vsel %vm2017, %v2983, %v3092
    %3095 = vst [vmem:[#allocation7] sm:$0xf] %v3093
    // Predicated region
    $region26: #{_lambda_.3} parent=1 // pred_check
      _
    $region27: #{_lambda_.3} parent=1 // pred_check_branch
      %3097 = sbr.rel (0) target = $region29
    $region28: #{_lambda_.3} parent=1 // pred_region
      %3099 = vsyncadd [#allocation4], 0
      %s3101 = sshll.u32 [#allocation7], 4
      %s3102 = int_to_ptr.vmem [resolvable:$true] %s3101
      %s3103 = sshll.u32 %s4, 4
      %s3104 = int_to_ptr.hbm [resolvable:$true] %s3103
      %3106 = dma.vmem_to_hbm [thread:$0]  %s3102, 64, %s3104, [#allocation4]
    $region29: #{_lambda_.3} parent=1 // pred_fallthru
      _
    // Predicated region
    $region30: #{_lambda_.3} parent=1 // pred_check
      _
    $region31: #{_lambda_.3} parent=1 // pred_check_branch
      %3108 = sbr.rel (0) target = $region33
    $region32: #{_lambda_.3} parent=1 // pred_region
      %3110 = dma.done [#allocation4], 64
    $region33: #{_lambda_.3} parent=1 // pred_fallthru
      _
    %3111 = vsyncpa [#allocation3], 1
    %3112 = vsyncpa [#allocation6], 1
    %3113 = vsyncpa [#allocation4], 1

</llo_original>
